<compile_context>
chip_gen: v7x
topology: tpu7x:2x2x1
jax: 0.10.0
libtpu: 0.0.40
codegen_flags: <defaults>
</compile_context>

<pallas_src>
import functools

import jax
import jax.numpy as jnp
from jax import lax
from jax.experimental import pallas as pl
from jax.experimental.pallas import tpu as pltpu


# ---------------------------------------------------------------------------
# Tile selection helpers
# ---------------------------------------------------------------------------

def _pick_tile(dim, target, base):
    """Largest multiple of `base` <= target that divides dim, else the full dim."""
    if dim <= target:
        return dim
    t = (target // base) * base
    while t >= base:
        if dim % t == 0:
            return t
        t -= base
    return dim


# ---------------------------------------------------------------------------
# Pallas kernels
# ---------------------------------------------------------------------------

def _linear_kernel(x_ref, w_ref, b_ref, o_ref, acc_ref, *, relu):
    # grid = (M/tm, N/tn, K/tk); accumulator persists over the K axis.
    @pl.when(pl.program_id(2) == 0)
    def _init():
        acc_ref[...] = jnp.zeros_like(acc_ref)

    acc_ref[...] += jnp.dot(x_ref[...].astype(jnp.bfloat16), w_ref[...],
                            preferred_element_type=jnp.float32)

    @pl.when(pl.program_id(2) == pl.num_programs(2) - 1)
    def _finalize():
        y = acc_ref[...] + b_ref[...]
        if relu:
            y = jnp.maximum(y, 0.0)
        o_ref[...] = y.astype(o_ref.dtype)


def linear(x2d, wt, b, relu=False, out_dtype=jnp.float32):
    """y = x @ wt + b.  wt is pre-transposed (K, Nout) bf16, b is (1, Nout) f32."""
    M, K = x2d.shape
    Nout = wt.shape[1]
    tm = _pick_tile(M, 256, 8)
    tn = _pick_tile(Nout, 256, 128)
    tk = _pick_tile(K, 512, 128)
    grid = (M // tm, Nout // tn, K // tk)
    return pl.pallas_call(
        functools.partial(_linear_kernel, relu=relu),
        out_shape=jax.ShapeDtypeStruct((M, Nout), out_dtype),
        grid=grid,
        in_specs=[
            pl.BlockSpec((tm, tk), lambda i, j, k: (i, k)),
            pl.BlockSpec((tk, tn), lambda i, j, k: (k, j)),
            pl.BlockSpec((1, tn), lambda i, j, k: (0, j)),
        ],
        out_specs=pl.BlockSpec((tm, tn), lambda i, j, k: (i, j)),
        scratch_shapes=[pltpu.VMEM((tm, tn), jnp.float32)],
        compiler_params=pltpu.CompilerParams(
            dimension_semantics=("parallel", "parallel", "arbitrary")),
    )(x2d, wt, b)


def _linear_res_ln_kernel(x_ref, w_ref, b_ref, r_ref, g_ref, bb_ref, o_ref, acc_ref):
    # y = LayerNorm(x @ W + b + residual); grid = (M/tm, K/tk), LN over full feature dim.
    @pl.when(pl.program_id(1) == 0)
    def _init():
        acc_ref[...] = jnp.zeros_like(acc_ref)

    acc_ref[...] += jnp.dot(x_ref[...].astype(jnp.bfloat16), w_ref[...],
                            preferred_element_type=jnp.float32)

    @pl.when(pl.program_id(1) == pl.num_programs(1) - 1)
    def _finalize():
        h = acc_ref[...] + b_ref[...] + r_ref[...]
        mu = jnp.mean(h, axis=-1, keepdims=True)
        var = jnp.mean((h - mu) ** 2, axis=-1, keepdims=True)
        o_ref[...] = ((h - mu) * lax.rsqrt(var + 1e-5)) * g_ref[...] + bb_ref[...]


def linear_res_ln(x2d, wt, b, res2d, gamma, beta):
    """LayerNorm(x @ wt + b + residual) in one kernel (matmul epilogue fusion)."""
    M, K = x2d.shape
    E = wt.shape[1]
    tm = _pick_tile(M, 256, 8)
    tk = _pick_tile(K, 512, 128)
    grid = (M // tm, K // tk)
    return pl.pallas_call(
        _linear_res_ln_kernel,
        out_shape=jax.ShapeDtypeStruct((M, E), jnp.float32),
        grid=grid,
        in_specs=[
            pl.BlockSpec((tm, tk), lambda i, k: (i, k)),
            pl.BlockSpec((tk, E), lambda i, k: (k, 0)),
            pl.BlockSpec((1, E), lambda i, k: (0, 0)),
            pl.BlockSpec((tm, E), lambda i, k: (i, 0)),
            pl.BlockSpec((1, E), lambda i, k: (0, 0)),
            pl.BlockSpec((1, E), lambda i, k: (0, 0)),
        ],
        out_specs=pl.BlockSpec((tm, E), lambda i, k: (i, 0)),
        scratch_shapes=[pltpu.VMEM((tm, E), jnp.float32)],
        compiler_params=pltpu.CompilerParams(
            dimension_semantics=("parallel", "arbitrary")),
    )(x2d, wt, b, res2d, gamma, beta)


def _ffn_res_ln_kernel(x_ref, w1_ref, b1_ref, w2_ref, b2_ref, g_ref, bb_ref, o_ref):
    # y = LayerNorm(relu(x@W1+b1)@W2 + b2 + x); intermediate stays in VMEM/vregs.
    x = x_ref[...]
    h = jnp.dot(x.astype(jnp.bfloat16), w1_ref[...],
                preferred_element_type=jnp.float32) + b1_ref[...]
    h = jnp.maximum(h, 0.0)
    y = jnp.dot(h.astype(jnp.bfloat16), w2_ref[...],
                preferred_element_type=jnp.float32) + b2_ref[...]
    y = y + x
    mu = jnp.mean(y, axis=-1, keepdims=True)
    var = jnp.mean((y - mu) ** 2, axis=-1, keepdims=True)
    o_ref[...] = ((y - mu) * lax.rsqrt(var + 1e-5)) * g_ref[...] + bb_ref[...]


def ffn_res_ln(x2d, w1, b1, w2, b2, gamma, beta):
    # TODO(synk): for very large E*forward_expansion the resident W1/W2 blocks would need
    # K-tiling to fit v7x's 64 MiB VMEM; fine at these model sizes.
    M, E = x2d.shape
    F = w1.shape[1]
    tm = _pick_tile(M, 256, 8)
    grid = (M // tm,)
    return pl.pallas_call(
        _ffn_res_ln_kernel,
        out_shape=jax.ShapeDtypeStruct((M, E), jnp.float32),
        grid=grid,
        in_specs=[
            pl.BlockSpec((tm, E), lambda i: (i, 0)),
            pl.BlockSpec((E, F), lambda i: (0, 0)),
            pl.BlockSpec((1, F), lambda i: (0, 0)),
            pl.BlockSpec((F, E), lambda i: (0, 0)),
            pl.BlockSpec((1, E), lambda i: (0, 0)),
            pl.BlockSpec((1, E), lambda i: (0, 0)),
            pl.BlockSpec((1, E), lambda i: (0, 0)),
        ],
        out_specs=pl.BlockSpec((tm, E), lambda i: (i, 0)),
        compiler_params=pltpu.CompilerParams(dimension_semantics=("parallel",)),
    )(x2d, w1, b1, w2, b2, gamma, beta)


def _attn_kernel(q_ref, k_ref, v_ref, m_ref, o_ref, *, heads, scale):
    # blocks: q (1,T,E), k/v (1,S,E) lane-dense, mask (1,1,Tm,S) -> o (1,T,E)
    q = q_ref[0]          # (T, E) bf16
    k = k_ref[0]          # (S, E) bf16
    v = v_ref[0]          # (S, E) bf16
    m = m_ref[0, 0]       # (Tm, S) int32, Tm in {1, T}; broadcasts over queries
    E = q.shape[1]
    D = E // heads
    neg = jnp.float32(-1e20)
    outs = []
    for h in range(heads):
        qh = q[:, h * D:(h + 1) * D]
        kh = k[:, h * D:(h + 1) * D]
        vh = v[:, h * D:(h + 1) * D]
        # energy = q @ k^T ; masked_fill(mask==0, -1e20) ; softmax(energy * scale)
        e = lax.dot_general(qh, kh, (((1,), (1,)), ((), ())),
                            preferred_element_type=jnp.float32)       # (T, S) f32
        e = jnp.where(m == 0, neg, e)
        e = e * scale
        e = e - jnp.max(e, axis=-1, keepdims=True)
        p = jnp.exp(e)
        p = p * pl.reciprocal(jnp.sum(p, axis=-1, keepdims=True), approx=True)
        oh = jnp.dot(p.astype(jnp.bfloat16), vh,
                     preferred_element_type=jnp.float32)               # (T, D) f32
        outs.append(oh)
    o_ref[0] = jnp.concatenate(outs, axis=-1).astype(o_ref.dtype)


def multihead_attention(q, k, v, mask, embed_size, heads):
    """q: (N,T,E), k/v: (N,S,E) bf16, mask: (N,1,Tm,S) -> context (N,T,E) bf16."""
    N, T, E = q.shape
    S = k.shape[1]
    Tm = mask.shape[2]
    scale = 1.0 / float(embed_size) ** 0.5
    # TODO(synk): for long sequences, tile over query blocks with online softmax.
    return pl.pallas_call(
        functools.partial(_attn_kernel, heads=heads, scale=scale),
        out_shape=jax.ShapeDtypeStruct((N, T, E), jnp.bfloat16),
        grid=(N,),
        in_specs=[
            pl.BlockSpec((1, T, E), lambda n: (n, 0, 0)),
            pl.BlockSpec((1, S, E), lambda n: (n, 0, 0)),
            pl.BlockSpec((1, S, E), lambda n: (n, 0, 0)),
            # mask head axis mapped to 0 — never broadcast/materialized per head
            pl.BlockSpec((1, 1, Tm, S), lambda n: (n, 0, 0, 0)),
        ],
        out_specs=pl.BlockSpec((1, T, E), lambda n: (n, 0, 0)),
        compiler_params=pltpu.CompilerParams(dimension_semantics=("parallel",)),
    )(q, k, v, mask)


# ---------------------------------------------------------------------------
# Model (glue in plain JAX, compute in the kernels above)
# ---------------------------------------------------------------------------

def attention_context(p, values, keys, query, mask, embed_size, heads):
    """SelfAttention without fc_out (fc_out is fused with residual+LN by the caller)."""
    N, ql, E = query.shape
    S = values.shape[1]
    if (values is keys) and (keys is query):
        # fused QKV projection: one read of the activation, one (E,3E) matmul
        qkv = linear(query.reshape(-1, E), p["Wqkv"], p["bqkv"], out_dtype=jnp.bfloat16)
        v = qkv[:, :E].reshape(N, S, E)
        k = qkv[:, E:2 * E].reshape(N, S, E)
        q = qkv[:, 2 * E:].reshape(N, ql, E)
    elif values is keys:
        # cross attention: fused KV on encoder output, separate Q on the query
        kv = linear(values.reshape(-1, E), p["Wkv"], p["bkv"], out_dtype=jnp.bfloat16)
        v = kv[:, :E].reshape(N, S, E)
        k = kv[:, E:].reshape(N, S, E)
        q = linear(query.reshape(-1, E), p["Wq"], p["bq"],
                   out_dtype=jnp.bfloat16).reshape(N, ql, E)
    else:
        v = linear(values.reshape(-1, E), p["Wv"], p["bv"],
                   out_dtype=jnp.bfloat16).reshape(N, S, E)
        k = linear(keys.reshape(-1, E), p["Wk"], p["bk"],
                   out_dtype=jnp.bfloat16).reshape(N, keys.shape[1], E)
        q = linear(query.reshape(-1, E), p["Wq"], p["bq"],
                   out_dtype=jnp.bfloat16).reshape(N, ql, E)
    return multihead_attention(q, k, v, mask, embed_size, heads)


def transformer_block(p, value, key, query, mask, embed_size, heads):
    N, T, E = query.shape
    a = p["attn"]
    ctx = attention_context(a, value, key, query, mask, embed_size, heads)
    # norm1(fc_out(ctx) + query) fused ; dropout = identity
    x = linear_res_ln(ctx.reshape(-1, E), a["Wo"], a["bo"],
                      query.reshape(-1, E), p["ln1_g"], p["ln1_b"]).reshape(N, T, E)
    # norm2(W2(relu(W1 x)) + x) fused ; dropout = identity
    out = ffn_res_ln(x.reshape(-1, E), p["W1"], p["b1"], p["W2"], p["b2"],
                     p["ln2_g"], p["ln2_b"]).reshape(N, T, E)
    return out


def decoder_block(p, x, value, key, src_mask, trg_mask, embed_size, heads):
    N, T, E = x.shape
    a = p["self_attn"]
    ctx = attention_context(a, x, x, x, trg_mask, embed_size, heads)
    # norm(fc_out(ctx) + x) fused ; dropout = identity
    query = linear_res_ln(ctx.reshape(-1, E), a["Wo"], a["bo"],
                          x.reshape(-1, E), p["ln_g"], p["ln_b"]).reshape(N, T, E)
    return transformer_block(p["tb"], value, key, query, src_mask, embed_size, heads)


def decoder_forward(params, x_ids, enc_out, src_mask, trg_mask, embed_size, heads):
    N, T = x_ids.shape
    positions = jnp.arange(T, dtype=jnp.int32)[None, :]
    # Embedding gathers kept in plain JAX (glue); dropout = identity.
    x = params["word_emb"][x_ids] + params["pos_emb"][positions]
    for lp in params["layers"]:
        x = decoder_block(lp, x, enc_out, enc_out, src_mask, trg_mask,
                          embed_size, heads)
    out = linear(x.reshape(-1, embed_size), params["Wout"], params["bout"],
                 out_dtype=jnp.float32)
    return out.reshape(N, T, -1)


# ---------------------------------------------------------------------------
# Deterministic parameter construction (weights pre-transposed (in,out), bf16;
# QKV / KV concatenated once at init so no per-call transpose/concat)
# ---------------------------------------------------------------------------

def _init_linear_t(key, in_dim, out_dim, scale=0.05):
    kw, kb = jax.random.split(key)
    W = scale * jax.random.normal(kw, (in_dim, out_dim), jnp.float32)
    b = scale * jax.random.normal(kb, (1, out_dim), jnp.float32)
    return W, b


def _init_attention(key, E):
    ks = jax.random.split(key, 4)
    Wv, bv = _init_linear_t(ks[0], E, E)
    Wk, bk = _init_linear_t(ks[1], E, E)
    Wq, bq = _init_linear_t(ks[2], E, E)
    Wo, bo = _init_linear_t(ks[3], E, E)
    bf = jnp.bfloat16
    return dict(
        Wqkv=jnp.concatenate([Wv, Wk, Wq], axis=1).astype(bf),
        bqkv=jnp.concatenate([bv, bk, bq], axis=1),
        Wkv=jnp.concatenate([Wv, Wk], axis=1).astype(bf),
        bkv=jnp.concatenate([bv, bk], axis=1),
        Wv=Wv.astype(bf), bv=bv,
        Wk=Wk.astype(bf), bk=bk,
        Wq=Wq.astype(bf), bq=bq,
        Wo=Wo.astype(bf), bo=bo)


def _init_transformer_block(key, E, ff):
    ks = jax.random.split(key, 3)
    W1, b1 = _init_linear_t(ks[0], E, ff * E)
    W2, b2 = _init_linear_t(ks[1], ff * E, E)
    ones = jnp.ones((1, E), jnp.float32)
    zeros = jnp.zeros((1, E), jnp.float32)
    return dict(attn=_init_attention(ks[2], E),
                ln1_g=ones, ln1_b=zeros, ln2_g=ones, ln2_b=zeros,
                W1=W1.astype(jnp.bfloat16), b1=b1,
                W2=W2.astype(jnp.bfloat16), b2=b2)


def _init_decoder_block(key, E, ff):
    k1, k2 = jax.random.split(key)
    return dict(self_attn=_init_attention(k1, E),
                ln_g=jnp.ones((1, E), jnp.float32),
                ln_b=jnp.zeros((1, E), jnp.float32),
                tb=_init_transformer_block(k2, E, ff))


def init_decoder(key, vocab, E, num_layers, ff, max_length):
    ks = jax.random.split(key, num_layers + 3)
    word_emb = 0.05 * jax.random.normal(ks[0], (vocab, E), jnp.float32)
    pos_emb = 0.05 * jax.random.normal(ks[1], (max_length, E), jnp.float32)
    Wout, bout = _init_linear_t(ks[2], E, vocab)
    layers = [_init_decoder_block(ks[3 + i], E, ff) for i in range(num_layers)]
    return dict(word_emb=word_emb, pos_emb=pos_emb,
                Wout=Wout.astype(jnp.bfloat16), bout=bout, layers=layers)


# ---------------------------------------------------------------------------
# Example run
# ---------------------------------------------------------------------------

if __name__ == "__main__":
    TRG_VOCAB = 50
    EMBED = 32
    NUM_LAYERS = 2
    HEADS = 4
    FWD_EXP = 4
    MAX_LEN = 16
    N, T, S = 2, 8, 8           # batch, target seq len, encoder seq len

    root = jax.random.PRNGKey(0)
    k_par, k_ids, k_enc = jax.random.split(root, 3)

    params = init_decoder(k_par, TRG_VOCAB, EMBED, NUM_LAYERS, FWD_EXP, MAX_LEN)

    x_ids = jax.random.randint(k_ids, (N, T), 0, TRG_VOCAB, dtype=jnp.int32)
    enc_out = jax.random.normal(k_enc, (N, S, EMBED), jnp.float32)

    # trg_mask: causal (N, 1, T, T); src_mask: all-ones (N, 1, 1, S)
    trg_mask = jnp.tril(jnp.ones((T, T), jnp.int32))[None, None, :, :]
    trg_mask = jnp.broadcast_to(trg_mask, (N, 1, T, T))
    src_mask = jnp.ones((N, 1, 1, S), jnp.int32)

    fwd = jax.jit(functools.partial(decoder_forward,
                                    embed_size=EMBED, heads=HEADS))
    out = fwd(params, x_ids, enc_out, src_mask, trg_mask)
    out = jax.block_until_ready(out)

    assert out.shape == (N, T, TRG_VOCAB), out.shape
    assert bool(jnp.all(jnp.isfinite(out)))
    print("KERNEL_OK")
</pallas_src>

<mosaic_0001>
module attributes {stable_mosaic.version = 11 : i64} {
  func.func @_linear_kernel(%arg0: i32, %arg1: i32, %arg2: i32, %arg3: memref<16x32xf32, #tpu.memory_space<vmem>>, %arg4: memref<32x96xbf16, #tpu.memory_space<vmem>>, %arg5: memref<1x96xf32, #tpu.memory_space<vmem>>, %arg6: memref<16x96xbf16, #tpu.memory_space<vmem>>, %arg7: memref<16x96xf32, #tpu.memory_space<vmem>>) attributes {dimension_semantics = [#tpu.dimension_semantics<parallel>, #tpu.dimension_semantics<parallel>, #tpu.dimension_semantics<arbitrary>], iteration_bounds = array<i64: 1, 1, 1>, scalar_prefetch = 0 : i64, scratch_operands = 1 : i64, tpu.core_type = #tpu.core_type<tc>, window_params = [{transform_indices = @transform_0, window_bounds = array<i64: 16, 32>}, {transform_indices = @transform_1, window_bounds = array<i64: 32, 96>}, {transform_indices = @transform_2, window_bounds = array<i64: 1, 96>}, {transform_indices = @transform_3, window_bounds = array<i64: 16, 96>}]} {
    %c0_i32 = arith.constant 0 : i32
    %0 = arith.cmpi eq, %arg2, %c0_i32 : i32
    %1 = arith.extui %0 : i1 to i32
    %c0_i32_0 = arith.constant 0 : i32
    %2 = arith.cmpi ne, %1, %c0_i32_0 : i32
    scf.if %2 {
      %cst_10 = arith.constant 0.000000e+00 : f32
      %13 = vector.broadcast %cst_10 : f32 to vector<16x96xf32>
      %c0_11 = arith.constant 0 : index
      %c0_12 = arith.constant 0 : index
      %14 = vector.load %arg7[%c0_11, %c0_12] : memref<16x96xf32, #tpu.memory_space<vmem>>, vector<16x96xf32>
      tpu.vector_store %arg7[%c0_11, %c0_12], %13 {strides = array<i32>} : memref<16x96xf32, #tpu.memory_space<vmem>>, vector<16x96xf32>,
    } else {
    }
    %c0 = arith.constant 0 : index
    %c0_1 = arith.constant 0 : index
    %3 = vector.load %arg7[%c0, %c0_1] : memref<16x96xf32, #tpu.memory_space<vmem>>, vector<16x96xf32>
    %c0_2 = arith.constant 0 : index
    %c0_3 = arith.constant 0 : index
    %4 = vector.load %arg3[%c0_2, %c0_3] : memref<16x32xf32, #tpu.memory_space<vmem>>, vector<16x32xf32>
    %5 = arith.truncf %4 : vector<16x32xf32> to vector<16x32xbf16>
    %c0_4 = arith.constant 0 : index
    %c0_5 = arith.constant 0 : index
    %6 = vector.load %arg4[%c0_4, %c0_5] : memref<32x96xbf16, #tpu.memory_space<vmem>>, vector<32x96xbf16>
    %cst = arith.constant dense<0.000000e+00> : vector<16x96xf32>
    %7 = tpu.matmul %5, %6, %cst {dimension_numbers = #tpu.dot_dimension_numbers<[1], [0], [0], [1], [0, 0, 1, 1], [], []>} : vector<16x32xbf16>, vector<32x96xbf16>, vector<16x96xf32> -> vector<16x96xf32>
    %8 = arith.addf %3, %7 : vector<16x96xf32>
    %c0_6 = arith.constant 0 : index
    %c0_7 = arith.constant 0 : index
    %9 = vector.load %arg7[%c0_6, %c0_7] : memref<16x96xf32, #tpu.memory_space<vmem>>, vector<16x96xf32>
    tpu.vector_store %arg7[%c0_6, %c0_7], %8 {strides = array<i32>} : memref<16x96xf32, #tpu.memory_space<vmem>>, vector<16x96xf32>,
    %c0_i32_8 = arith.constant 0 : i32
    %10 = arith.cmpi eq, %arg2, %c0_i32_8 : i32
    %11 = arith.extui %10 : i1 to i32
    %c0_i32_9 = arith.constant 0 : i32
    %12 = arith.cmpi ne, %11, %c0_i32_9 : i32
    scf.if %12 {
      %c0_10 = arith.constant 0 : index
      %c0_11 = arith.constant 0 : index
      %13 = vector.load %arg7[%c0_10, %c0_11] : memref<16x96xf32, #tpu.memory_space<vmem>>, vector<16x96xf32>
      %c0_12 = arith.constant 0 : index
      %c0_13 = arith.constant 0 : index
      %14 = vector.load %arg5[%c0_12, %c0_13] : memref<1x96xf32, #tpu.memory_space<vmem>>, vector<1x96xf32>
      %15 = vector.broadcast %14 : vector<1x96xf32> to vector<16x96xf32>
      %16 = arith.addf %13, %15 : vector<16x96xf32>
      %17 = arith.truncf %16 : vector<16x96xf32> to vector<16x96xbf16>
      %c0_14 = arith.constant 0 : index
      %c0_15 = arith.constant 0 : index
      %18 = vector.load %arg6[%c0_14, %c0_15] : memref<16x96xbf16, #tpu.memory_space<vmem>>, vector<16x96xbf16>
      tpu.vector_store %arg6[%c0_14, %c0_15], %17 {strides = array<i32>} : memref<16x96xbf16, #tpu.memory_space<vmem>>, vector<16x96xbf16>,
    } else {
    }
    return
  }
  func.func @transform_0(%arg0: i32, %arg1: i32, %arg2: i32) -> (i32, i32) {
    %c0_i32 = arith.constant 0 : i32
    return %arg0, %arg2 : i32, i32
  }
  func.func @transform_1(%arg0: i32, %arg1: i32, %arg2: i32) -> (i32, i32) {
    %c0_i32 = arith.constant 0 : i32
    return %arg2, %arg1 : i32, i32
  }
  func.func @transform_2(%arg0: i32, %arg1: i32, %arg2: i32) -> (i32, i32) {
    %c0_i32 = arith.constant 0 : i32
    %c0_i32_0 = arith.constant 0 : i32
    return %c0_i32, %arg1 : i32, i32
  }
  func.func @transform_3(%arg0: i32, %arg1: i32, %arg2: i32) -> (i32, i32) {
    %c0_i32 = arith.constant 0 : i32
    return %arg0, %arg1 : i32, i32
  }
}

module attributes {stable_mosaic.version = 11 : i64} {
  func.func @_attn_kernel(%arg0: i32, %arg1: memref<1x8x32xbf16, #tpu.memory_space<vmem>>, %arg2: memref<1x8x32xbf16, #tpu.memory_space<vmem>>, %arg3: memref<1x8x32xbf16, #tpu.memory_space<vmem>>, %arg4: memref<1x1x8x8xi32, #tpu.memory_space<vmem>>, %arg5: memref<1x8x32xbf16, #tpu.memory_space<vmem>>) attributes {dimension_semantics = [#tpu.dimension_semantics<parallel>], iteration_bounds = array<i64: 2>, scalar_prefetch = 0 : i64, scratch_operands = 0 : i64, tpu.core_type = #tpu.core_type<tc>, window_params = [{transform_indices = @transform_0, window_bounds = array<i64: 1, 8, 32>}, {transform_indices = @transform_1, window_bounds = array<i64: 1, 8, 32>}, {transform_indices = @transform_2, window_bounds = array<i64: 1, 8, 32>}, {transform_indices = @transform_3, window_bounds = array<i64: 1, 1, 8, 8>}, {transform_indices = @transform_4, window_bounds = array<i64: 1, 8, 32>}]} {
    %c0 = arith.constant 0 : index
    %c0_0 = arith.constant 0 : index
    %c0_1 = arith.constant 0 : index
    %0 = vector.load %arg1[%c0, %c0_0, %c0_1] : memref<1x8x32xbf16, #tpu.memory_space<vmem>>, vector<1x8x32xbf16>
    %1 = vector.shape_cast %0 : vector<1x8x32xbf16> to vector<8x32xbf16>
    %c0_2 = arith.constant 0 : index
    %c0_3 = arith.constant 0 : index
    %c0_4 = arith.constant 0 : index
    %2 = vector.load %arg2[%c0_2, %c0_3, %c0_4] : memref<1x8x32xbf16, #tpu.memory_space<vmem>>, vector<1x8x32xbf16>
    %3 = vector.shape_cast %2 : vector<1x8x32xbf16> to vector<8x32xbf16>
    %c0_5 = arith.constant 0 : index
    %c0_6 = arith.constant 0 : index
    %c0_7 = arith.constant 0 : index
    %4 = vector.load %arg3[%c0_5, %c0_6, %c0_7] : memref<1x8x32xbf16, #tpu.memory_space<vmem>>, vector<1x8x32xbf16>
    %5 = vector.shape_cast %4 : vector<1x8x32xbf16> to vector<8x32xbf16>
    %c0_8 = arith.constant 0 : index
    %c0_9 = arith.constant 0 : index
    %c0_10 = arith.constant 0 : index
    %c0_11 = arith.constant 0 : index
    %6 = vector.load %arg4[%c0_8, %c0_9, %c0_10, %c0_11] : memref<1x1x8x8xi32, #tpu.memory_space<vmem>>, vector<1x1x8x8xi32>
    %7 = vector.shape_cast %6 : vector<1x1x8x8xi32> to vector<8x8xi32>
    %8 = vector.extract_strided_slice %1 {offsets = [0, 0], sizes = [8, 8], strides = [1, 1]} : vector<8x32xbf16> to vector<8x8xbf16>
    %9 = vector.extract_strided_slice %3 {offsets = [0, 0], sizes = [8, 8], strides = [1, 1]} : vector<8x32xbf16> to vector<8x8xbf16>
    %10 = vector.extract_strided_slice %5 {offsets = [0, 0], sizes = [8, 8], strides = [1, 1]} : vector<8x32xbf16> to vector<8x8xbf16>
    %cst = arith.constant dense<0.000000e+00> : vector<8x8xf32>
    %11 = tpu.matmul %8, %9, %cst {dimension_numbers = #tpu.dot_dimension_numbers<[1], [1], [0], [0], [0, 0, 1, 0], [], []>} : vector<8x8xbf16>, vector<8x8xbf16>, vector<8x8xf32> -> vector<8x8xf32>
    %c0_i32 = arith.constant 0 : i32
    %12 = vector.broadcast %c0_i32 : i32 to vector<8x8xi32>
    %13 = arith.cmpi eq, %7, %12 : vector<8x8xi32>
    %cst_12 = arith.constant -1.000000e+20 : f32
    %14 = vector.broadcast %cst_12 : f32 to vector<8x8xf32>
    %15 = arith.select %13, %14, %11 : vector<8x8xi1>, vector<8x8xf32>
    %cst_13 = arith.constant 0.176776692 : f32
    %16 = vector.broadcast %cst_13 : f32 to vector<8x8xf32>
    %17 = arith.mulf %15, %16 : vector<8x8xf32>
    %cst_14 = arith.constant dense<0xFF800000> : vector<8xf32>
    %18 = vector.multi_reduction <maximumf>, %17, %cst_14 [1] : vector<8x8xf32> to vector<8xf32>
    %19 = vector.shape_cast %18 : vector<8xf32> to vector<8x1xf32>
    %20 = vector.broadcast %19 : vector<8x1xf32> to vector<8x8xf32>
    %21 = arith.subf %17, %20 : vector<8x8xf32>
    %22 = math.exp %21 : vector<8x8xf32>
    %cst_15 = arith.constant dense<0.000000e+00> : vector<8xf32>
    %23 = vector.multi_reduction <add>, %22, %cst_15 [1] : vector<8x8xf32> to vector<8xf32>
    %24 = vector.shape_cast %23 : vector<8xf32> to vector<8x1xf32>
    %25 = tpu.reciprocal %24 {approx = true} : vector<8x1xf32> -> vector<8x1xf32>
    %26 = vector.broadcast %25 : vector<8x1xf32> to vector<8x8xf32>
    %27 = arith.mulf %22, %26 : vector<8x8xf32>
    %28 = arith.truncf %27 : vector<8x8xf32> to vector<8x8xbf16>
    %cst_16 = arith.constant dense<0.000000e+00> : vector<8x8xf32>
    %29 = tpu.matmul %28, %10, %cst_16 {dimension_numbers = #tpu.dot_dimension_numbers<[1], [0], [0], [1], [0, 0, 1, 1], [], []>} : vector<8x8xbf16>, vector<8x8xbf16>, vector<8x8xf32> -> vector<8x8xf32>
    %30 = vector.extract_strided_slice %1 {offsets = [0, 8], sizes = [8, 8], strides = [1, 1]} : vector<8x32xbf16> to vector<8x8xbf16>
    %31 = vector.extract_strided_slice %3 {offsets = [0, 8], sizes = [8, 8], strides = [1, 1]} : vector<8x32xbf16> to vector<8x8xbf16>
    %32 = vector.extract_strided_slice %5 {offsets = [0, 8], sizes = [8, 8], strides = [1, 1]} : vector<8x32xbf16> to vector<8x8xbf16>
    %cst_17 = arith.constant dense<0.000000e+00> : vector<8x8xf32>
    %33 = tpu.matmul %30, %31, %cst_17 {dimension_numbers = #tpu.dot_dimension_numbers<[1], [1], [0], [0], [0, 0, 1, 0], [], []>} : vector<8x8xbf16>, vector<8x8xbf16>, vector<8x8xf32> -> vector<8x8xf32>
    %c0_i32_18 = arith.constant 0 : i32
    %34 = vector.broadcast %c0_i32_18 : i32 to vector<8x8xi32>
    %35 = arith.cmpi eq, %7, %34 : vector<8x8xi32>
    %cst_19 = arith.constant -1.000000e+20 : f32
    %36 = vector.broadcast %cst_19 : f32 to vector<8x8xf32>
    %37 = arith.select %35, %36, %33 : vector<8x8xi1>, vector<8x8xf32>
    %cst_20 = arith.constant 0.176776692 : f32
    %38 = vector.broadcast %cst_20 : f32 to vector<8x8xf32>
    %39 = arith.mulf %37, %38 : vector<8x8xf32>
    %cst_21 = arith.constant dense<0xFF800000> : vector<8xf32>
    %40 = vector.multi_reduction <maximumf>, %39, %cst_21 [1] : vector<8x8xf32> to vector<8xf32>
    %41 = vector.shape_cast %40 : vector<8xf32> to vector<8x1xf32>
    %42 = vector.broadcast %41 : vector<8x1xf32> to vector<8x8xf32>
    %43 = arith.subf %39, %42 : vector<8x8xf32>
    %44 = math.exp %43 : vector<8x8xf32>
    %cst_22 = arith.constant dense<0.000000e+00> : vector<8xf32>
    %45 = vector.multi_reduction <add>, %44, %cst_22 [1] : vector<8x8xf32> to vector<8xf32>
    %46 = vector.shape_cast %45 : vector<8xf32> to vector<8x1xf32>
    %47 = tpu.reciprocal %46 {approx = true} : vector<8x1xf32> -> vector<8x1xf32>
    %48 = vector.broadcast %47 : vector<8x1xf32> to vector<8x8xf32>
    %49 = arith.mulf %44, %48 : vector<8x8xf32>
    %50 = arith.truncf %49 : vector<8x8xf32> to vector<8x8xbf16>
    %cst_23 = arith.constant dense<0.000000e+00> : vector<8x8xf32>
    %51 = tpu.matmul %50, %32, %cst_23 {dimension_numbers = #tpu.dot_dimension_numbers<[1], [0], [0], [1], [0, 0, 1, 1], [], []>} : vector<8x8xbf16>, vector<8x8xbf16>, vector<8x8xf32> -> vector<8x8xf32>
    %52 = vector.extract_strided_slice %1 {offsets = [0, 16], sizes = [8, 8], strides = [1, 1]} : vector<8x32xbf16> to vector<8x8xbf16>
    %53 = vector.extract_strided_slice %3 {offsets = [0, 16], sizes = [8, 8], strides = [1, 1]} : vector<8x32xbf16> to vector<8x8xbf16>
    %54 = vector.extract_strided_slice %5 {offsets = [0, 16], sizes = [8, 8], strides = [1, 1]} : vector<8x32xbf16> to vector<8x8xbf16>
    %cst_24 = arith.constant dense<0.000000e+00> : vector<8x8xf32>
    %55 = tpu.matmul %52, %53, %cst_24 {dimension_numbers = #tpu.dot_dimension_numbers<[1], [1], [0], [0], [0, 0, 1, 0], [], []>} : vector<8x8xbf16>, vector<8x8xbf16>, vector<8x8xf32> -> vector<8x8xf32>
    %c0_i32_25 = arith.constant 0 : i32
    %56 = vector.broadcast %c0_i32_25 : i32 to vector<8x8xi32>
    %57 = arith.cmpi eq, %7, %56 : vector<8x8xi32>
    %cst_26 = arith.constant -1.000000e+20 : f32
    %58 = vector.broadcast %cst_26 : f32 to vector<8x8xf32>
    %59 = arith.select %57, %58, %55 : vector<8x8xi1>, vector<8x8xf32>
    %cst_27 = arith.constant 0.176776692 : f32
    %60 = vector.broadcast %cst_27 : f32 to vector<8x8xf32>
    %61 = arith.mulf %59, %60 : vector<8x8xf32>
    %cst_28 = arith.constant dense<0xFF800000> : vector<8xf32>
    %62 = vector.multi_reduction <maximumf>, %61, %cst_28 [1] : vector<8x8xf32> to vector<8xf32>
    %63 = vector.shape_cast %62 : vector<8xf32> to vector<8x1xf32>
    %64 = vector.broadcast %63 : vector<8x1xf32> to vector<8x8xf32>
    %65 = arith.subf %61, %64 : vector<8x8xf32>
    %66 = math.exp %65 : vector<8x8xf32>
    %cst_29 = arith.constant dense<0.000000e+00> : vector<8xf32>
    %67 = vector.multi_reduction <add>, %66, %cst_29 [1] : vector<8x8xf32> to vector<8xf32>
    %68 = vector.shape_cast %67 : vector<8xf32> to vector<8x1xf32>
    %69 = tpu.reciprocal %68 {approx = true} : vector<8x1xf32> -> vector<8x1xf32>
    %70 = vector.broadcast %69 : vector<8x1xf32> to vector<8x8xf32>
    %71 = arith.mulf %66, %70 : vector<8x8xf32>
    %72 = arith.truncf %71 : vector<8x8xf32> to vector<8x8xbf16>
    %cst_30 = arith.constant dense<0.000000e+00> : vector<8x8xf32>
    %73 = tpu.matmul %72, %54, %cst_30 {dimension_numbers = #tpu.dot_dimension_numbers<[1], [0], [0], [1], [0, 0, 1, 1], [], []>} : vector<8x8xbf16>, vector<8x8xbf16>, vector<8x8xf32> -> vector<8x8xf32>
    %74 = vector.extract_strided_slice %1 {offsets = [0, 24], sizes = [8, 8], strides = [1, 1]} : vector<8x32xbf16> to vector<8x8xbf16>
    %75 = vector.extract_strided_slice %3 {offsets = [0, 24], sizes = [8, 8], strides = [1, 1]} : vector<8x32xbf16> to vector<8x8xbf16>
    %76 = vector.extract_strided_slice %5 {offsets = [0, 24], sizes = [8, 8], strides = [1, 1]} : vector<8x32xbf16> to vector<8x8xbf16>
    %cst_31 = arith.constant dense<0.000000e+00> : vector<8x8xf32>
    %77 = tpu.matmul %74, %75, %cst_31 {dimension_numbers = #tpu.dot_dimension_numbers<[1], [1], [0], [0], [0, 0, 1, 0], [], []>} : vector<8x8xbf16>, vector<8x8xbf16>, vector<8x8xf32> -> vector<8x8xf32>
    %c0_i32_32 = arith.constant 0 : i32
    %78 = vector.broadcast %c0_i32_32 : i32 to vector<8x8xi32>
    %79 = arith.cmpi eq, %7, %78 : vector<8x8xi32>
    %cst_33 = arith.constant -1.000000e+20 : f32
    %80 = vector.broadcast %cst_33 : f32 to vector<8x8xf32>
    %81 = arith.select %79, %80, %77 : vector<8x8xi1>, vector<8x8xf32>
    %cst_34 = arith.constant 0.176776692 : f32
    %82 = vector.broadcast %cst_34 : f32 to vector<8x8xf32>
    %83 = arith.mulf %81, %82 : vector<8x8xf32>
    %cst_35 = arith.constant dense<0xFF800000> : vector<8xf32>
    %84 = vector.multi_reduction <maximumf>, %83, %cst_35 [1] : vector<8x8xf32> to vector<8xf32>
    %85 = vector.shape_cast %84 : vector<8xf32> to vector<8x1xf32>
    %86 = vector.broadcast %85 : vector<8x1xf32> to vector<8x8xf32>
    %87 = arith.subf %83, %86 : vector<8x8xf32>
    %88 = math.exp %87 : vector<8x8xf32>
    %cst_36 = arith.constant dense<0.000000e+00> : vector<8xf32>
    %89 = vector.multi_reduction <add>, %88, %cst_36 [1] : vector<8x8xf32> to vector<8xf32>
    %90 = vector.shape_cast %89 : vector<8xf32> to vector<8x1xf32>
    %91 = tpu.reciprocal %90 {approx = true} : vector<8x1xf32> -> vector<8x1xf32>
    %92 = vector.broadcast %91 : vector<8x1xf32> to vector<8x8xf32>
    %93 = arith.mulf %88, %92 : vector<8x8xf32>
    %94 = arith.truncf %93 : vector<8x8xf32> to vector<8x8xbf16>
    %cst_37 = arith.constant dense<0.000000e+00> : vector<8x8xf32>
    %95 = tpu.matmul %94, %76, %cst_37 {dimension_numbers = #tpu.dot_dimension_numbers<[1], [0], [0], [1], [0, 0, 1, 1], [], []>} : vector<8x8xbf16>, vector<8x8xbf16>, vector<8x8xf32> -> vector<8x8xf32>
    %96 = tpu.concatenate %29, %51, %73, %95 in 1 : vector<8x8xf32>, vector<8x8xf32>, vector<8x8xf32>, vector<8x8xf32> -> vector<8x32xf32>
    %97 = arith.truncf %96 : vector<8x32xf32> to vector<8x32xbf16>
    %c0_38 = arith.constant 0 : index
    %c0_39 = arith.constant 0 : index
    %c0_40 = arith.constant 0 : index
    %98 = vector.load %arg5[%c0_38, %c0_39, %c0_40] : memref<1x8x32xbf16, #tpu.memory_space<vmem>>, vector<1x8x32xbf16>
    %99 = vector.shape_cast %98 : vector<1x8x32xbf16> to vector<8x32xbf16>
    %100 = vector.shape_cast %97 : vector<8x32xbf16> to vector<1x8x32xbf16>
    tpu.vector_store %arg5[%c0_38, %c0_39, %c0_40], %100 {strides = array<i32>} : memref<1x8x32xbf16, #tpu.memory_space<vmem>>, vector<1x8x32xbf16>,
    return
  }
  func.func @transform_0(%arg0: i32) -> (i32, i32, i32) {
    %c0_i32 = arith.constant 0 : i32
    %c0_i32_0 = arith.constant 0 : i32
    %c0_i32_1 = arith.constant 0 : i32
    return %arg0, %c0_i32, %c0_i32_0 : i32, i32, i32
  }
  func.func @transform_1(%arg0: i32) -> (i32, i32, i32) {
    %c0_i32 = arith.constant 0 : i32
    %c0_i32_0 = arith.constant 0 : i32
    %c0_i32_1 = arith.constant 0 : i32
    return %arg0, %c0_i32, %c0_i32_0 : i32, i32, i32
  }
  func.func @transform_2(%arg0: i32) -> (i32, i32, i32) {
    %c0_i32 = arith.constant 0 : i32
    %c0_i32_0 = arith.constant 0 : i32
    %c0_i32_1 = arith.constant 0 : i32
    return %arg0, %c0_i32, %c0_i32_0 : i32, i32, i32
  }
  func.func @transform_3(%arg0: i32) -> (i32, i32, i32, i32) {
    %c0_i32 = arith.constant 0 : i32
    %c0_i32_0 = arith.constant 0 : i32
    %c0_i32_1 = arith.constant 0 : i32
    %c0_i32_2 = arith.constant 0 : i32
    return %arg0, %c0_i32, %c0_i32_0, %c0_i32_1 : i32, i32, i32, i32
  }
  func.func @transform_4(%arg0: i32) -> (i32, i32, i32) {
    %c0_i32 = arith.constant 0 : i32
    %c0_i32_0 = arith.constant 0 : i32
    %c0_i32_1 = arith.constant 0 : i32
    return %arg0, %c0_i32, %c0_i32_0 : i32, i32, i32
  }
}

module attributes {stable_mosaic.version = 11 : i64} {
  func.func @_linear_res_ln_kernel(%arg0: i32, %arg1: i32, %arg2: memref<16x32xbf16, #tpu.memory_space<vmem>>, %arg3: memref<32x32xbf16, #tpu.memory_space<vmem>>, %arg4: memref<1x32xf32, #tpu.memory_space<vmem>>, %arg5: memref<16x32xf32, #tpu.memory_space<vmem>>, %arg6: memref<1x32xf32, #tpu.memory_space<vmem>>, %arg7: memref<1x32xf32, #tpu.memory_space<vmem>>, %arg8: memref<16x32xf32, #tpu.memory_space<vmem>>, %arg9: memref<16x32xf32, #tpu.memory_space<vmem>>) attributes {dimension_semantics = [#tpu.dimension_semantics<parallel>, #tpu.dimension_semantics<arbitrary>], iteration_bounds = array<i64: 1, 1>, scalar_prefetch = 0 : i64, scratch_operands = 1 : i64, tpu.core_type = #tpu.core_type<tc>, window_params = [{transform_indices = @transform_0, window_bounds = array<i64: 16, 32>}, {transform_indices = @transform_1, window_bounds = array<i64: 32, 32>}, {pipeline_mode = #tpu.pipeline_mode<synchronous>, transform_indices = @transform_2, window_bounds = array<i64: 1, 32>}, {transform_indices = @transform_3, window_bounds = array<i64: 16, 32>}, {pipeline_mode = #tpu.pipeline_mode<synchronous>, transform_indices = @transform_4, window_bounds = array<i64: 1, 32>}, {pipeline_mode = #tpu.pipeline_mode<synchronous>, transform_indices = @transform_5, window_bounds = array<i64: 1, 32>}, {transform_indices = @transform_6, window_bounds = array<i64: 16, 32>}]} {
    %c0_i32 = arith.constant 0 : i32
    %0 = arith.cmpi eq, %arg1, %c0_i32 : i32
    %1 = arith.extui %0 : i1 to i32
    %c0_i32_0 = arith.constant 0 : i32
    %2 = arith.cmpi ne, %1, %c0_i32_0 : i32
    scf.if %2 {
      %cst_10 = arith.constant 0.000000e+00 : f32
      %12 = vector.broadcast %cst_10 : f32 to vector<16x32xf32>
      %c0_11 = arith.constant 0 : index
      %c0_12 = arith.constant 0 : index
      %13 = vector.load %arg9[%c0_11, %c0_12] : memref<16x32xf32, #tpu.memory_space<vmem>>, vector<16x32xf32>
      tpu.vector_store %arg9[%c0_11, %c0_12], %12 {strides = array<i32>} : memref<16x32xf32, #tpu.memory_space<vmem>>, vector<16x32xf32>,
    } else {
    }
    %c0 = arith.constant 0 : index
    %c0_1 = arith.constant 0 : index
    %3 = vector.load %arg9[%c0, %c0_1] : memref<16x32xf32, #tpu.memory_space<vmem>>, vector<16x32xf32>
    %c0_2 = arith.constant 0 : index
    %c0_3 = arith.constant 0 : index
    %4 = vector.load %arg2[%c0_2, %c0_3] : memref<16x32xbf16, #tpu.memory_space<vmem>>, vector<16x32xbf16>
    %c0_4 = arith.constant 0 : index
    %c0_5 = arith.constant 0 : index
    %5 = vector.load %arg3[%c0_4, %c0_5] : memref<32x32xbf16, #tpu.memory_space<vmem>>, vector<32x32xbf16>
    %cst = arith.constant dense<0.000000e+00> : vector<16x32xf32>
    %6 = tpu.matmul %4, %5, %cst {dimension_numbers = #tpu.dot_dimension_numbers<[1], [0], [0], [1], [0, 0, 1, 1], [], []>} : vector<16x32xbf16>, vector<32x32xbf16>, vector<16x32xf32> -> vector<16x32xf32>
    %7 = arith.addf %3, %6 : vector<16x32xf32>
    %c0_6 = arith.constant 0 : index
    %c0_7 = arith.constant 0 : index
    %8 = vector.load %arg9[%c0_6, %c0_7] : memref<16x32xf32, #tpu.memory_space<vmem>>, vector<16x32xf32>
    tpu.vector_store %arg9[%c0_6, %c0_7], %7 {strides = array<i32>} : memref<16x32xf32, #tpu.memory_space<vmem>>, vector<16x32xf32>,
    %c0_i32_8 = arith.constant 0 : i32
    %9 = arith.cmpi eq, %arg1, %c0_i32_8 : i32
    %10 = arith.extui %9 : i1 to i32
    %c0_i32_9 = arith.constant 0 : i32
    %11 = arith.cmpi ne, %10, %c0_i32_9 : i32
    scf.if %11 {
      %c0_10 = arith.constant 0 : index
      %c0_11 = arith.constant 0 : index
      %12 = vector.load %arg9[%c0_10, %c0_11] : memref<16x32xf32, #tpu.memory_space<vmem>>, vector<16x32xf32>
      %c0_12 = arith.constant 0 : index
      %c0_13 = arith.constant 0 : index
      %13 = vector.load %arg4[%c0_12, %c0_13] : memref<1x32xf32, #tpu.memory_space<vmem>>, vector<1x32xf32>
      %14 = vector.broadcast %13 : vector<1x32xf32> to vector<16x32xf32>
      %15 = arith.addf %12, %14 : vector<16x32xf32>
      %c0_14 = arith.constant 0 : index
      %c0_15 = arith.constant 0 : index
      %16 = vector.load %arg5[%c0_14, %c0_15] : memref<16x32xf32, #tpu.memory_space<vmem>>, vector<16x32xf32>
      %17 = arith.addf %15, %16 : vector<16x32xf32>
      %cst_16 = arith.constant dense<0.000000e+00> : vector<16xf32>
      %18 = vector.multi_reduction <add>, %17, %cst_16 [1] : vector<16x32xf32> to vector<16xf32>
      %19 = vector.shape_cast %18 : vector<16xf32> to vector<16x1xf32>
      %cst_17 = arith.constant 3.200000e+01 : f32
      %20 = vector.broadcast %cst_17 : f32 to vector<16x1xf32>
      %21 = arith.divf %19, %20 : vector<16x1xf32>
      %22 = vector.broadcast %21 : vector<16x1xf32> to vector<16x32xf32>
      %23 = arith.subf %17, %22 : vector<16x32xf32>
      %24 = arith.mulf %23, %23 : vector<16x32xf32>
      %cst_18 = arith.constant dense<0.000000e+00> : vector<16xf32>
      %25 = vector.multi_reduction <add>, %24, %cst_18 [1] : vector<16x32xf32> to vector<16xf32>
      %26 = vector.shape_cast %25 : vector<16xf32> to vector<16x1xf32>
      %cst_19 = arith.constant 3.200000e+01 : f32
      %27 = vector.broadcast %cst_19 : f32 to vector<16x1xf32>
      %28 = arith.divf %26, %27 : vector<16x1xf32>
      %29 = vector.broadcast %21 : vector<16x1xf32> to vector<16x32xf32>
      %30 = arith.subf %17, %29 : vector<16x32xf32>
      %cst_20 = arith.constant 9.99999974E-6 : f32
      %31 = vector.broadcast %cst_20 : f32 to vector<16x1xf32>
      %32 = arith.addf %28, %31 : vector<16x1xf32>
      %33 = math.rsqrt %32 : vector<16x1xf32>
      %34 = vector.broadcast %33 : vector<16x1xf32> to vector<16x32xf32>
      %35 = arith.mulf %30, %34 : vector<16x32xf32>
      %c0_21 = arith.constant 0 : index
      %c0_22 = arith.constant 0 : index
      %36 = vector.load %arg6[%c0_21, %c0_22] : memref<1x32xf32, #tpu.memory_space<vmem>>, vector<1x32xf32>
      %37 = vector.broadcast %36 : vector<1x32xf32> to vector<16x32xf32>
      %38 = arith.mulf %35, %37 : vector<16x32xf32>
      %c0_23 = arith.constant 0 : index
      %c0_24 = arith.constant 0 : index
      %39 = vector.load %arg7[%c0_23, %c0_24] : memref<1x32xf32, #tpu.memory_space<vmem>>, vector<1x32xf32>
      %40 = vector.broadcast %39 : vector<1x32xf32> to vector<16x32xf32>
      %41 = arith.addf %38, %40 : vector<16x32xf32>
      %c0_25 = arith.constant 0 : index
      %c0_26 = arith.constant 0 : index
      %42 = vector.load %arg8[%c0_25, %c0_26] : memref<16x32xf32, #tpu.memory_space<vmem>>, vector<16x32xf32>
      tpu.vector_store %arg8[%c0_25, %c0_26], %41 {strides = array<i32>} : memref<16x32xf32, #tpu.memory_space<vmem>>, vector<16x32xf32>,
    } else {
    }
    return
  }
  func.func @transform_0(%arg0: i32, %arg1: i32) -> (i32, i32) {
    %c0_i32 = arith.constant 0 : i32
    return %arg0, %arg1 : i32, i32
  }
  func.func @transform_1(%arg0: i32, %arg1: i32) -> (i32, i32) {
    %c0_i32 = arith.constant 0 : i32
    %c0_i32_0 = arith.constant 0 : i32
    return %arg1, %c0_i32 : i32, i32
  }
  func.func @transform_2(%arg0: i32, %arg1: i32) -> (i32, i32) {
    %c0_i32 = arith.constant 0 : i32
    %c0_i32_0 = arith.constant 0 : i32
    %c0_i32_1 = arith.constant 0 : i32
    return %c0_i32, %c0_i32_0 : i32, i32
  }
  func.func @transform_3(%arg0: i32, %arg1: i32) -> (i32, i32) {
    %c0_i32 = arith.constant 0 : i32
    %c0_i32_0 = arith.constant 0 : i32
    return %arg0, %c0_i32 : i32, i32
  }
  func.func @transform_4(%arg0: i32, %arg1: i32) -> (i32, i32) {
    %c0_i32 = arith.constant 0 : i32
    %c0_i32_0 = arith.constant 0 : i32
    %c0_i32_1 = arith.constant 0 : i32
    return %c0_i32, %c0_i32_0 : i32, i32
  }
  func.func @transform_5(%arg0: i32, %arg1: i32) -> (i32, i32) {
    %c0_i32 = arith.constant 0 : i32
    %c0_i32_0 = arith.constant 0 : i32
    %c0_i32_1 = arith.constant 0 : i32
    return %c0_i32, %c0_i32_0 : i32, i32
  }
  func.func @transform_6(%arg0: i32, %arg1: i32) -> (i32, i32) {
    %c0_i32 = arith.constant 0 : i32
    %c0_i32_0 = arith.constant 0 : i32
    return %arg0, %c0_i32 : i32, i32
  }
}

module attributes {stable_mosaic.version = 11 : i64} {
  func.func @_linear_kernel(%arg0: i32, %arg1: i32, %arg2: i32, %arg3: memref<16x32xf32, #tpu.memory_space<vmem>>, %arg4: memref<32x32xbf16, #tpu.memory_space<vmem>>, %arg5: memref<1x32xf32, #tpu.memory_space<vmem>>, %arg6: memref<16x32xbf16, #tpu.memory_space<vmem>>, %arg7: memref<16x32xf32, #tpu.memory_space<vmem>>) attributes {dimension_semantics = [#tpu.dimension_semantics<parallel>, #tpu.dimension_semantics<parallel>, #tpu.dimension_semantics<arbitrary>], iteration_bounds = array<i64: 1, 1, 1>, scalar_prefetch = 0 : i64, scratch_operands = 1 : i64, tpu.core_type = #tpu.core_type<tc>, window_params = [{transform_indices = @transform_0, window_bounds = array<i64: 16, 32>}, {transform_indices = @transform_1, window_bounds = array<i64: 32, 32>}, {transform_indices = @transform_2, window_bounds = array<i64: 1, 32>}, {transform_indices = @transform_3, window_bounds = array<i64: 16, 32>}]} {
    %c0_i32 = arith.constant 0 : i32
    %0 = arith.cmpi eq, %arg2, %c0_i32 : i32
    %1 = arith.extui %0 : i1 to i32
    %c0_i32_0 = arith.constant 0 : i32
    %2 = arith.cmpi ne, %1, %c0_i32_0 : i32
    scf.if %2 {
      %cst_10 = arith.constant 0.000000e+00 : f32
      %13 = vector.broadcast %cst_10 : f32 to vector<16x32xf32>
      %c0_11 = arith.constant 0 : index
      %c0_12 = arith.constant 0 : index
      %14 = vector.load %arg7[%c0_11, %c0_12] : memref<16x32xf32, #tpu.memory_space<vmem>>, vector<16x32xf32>
      tpu.vector_store %arg7[%c0_11, %c0_12], %13 {strides = array<i32>} : memref<16x32xf32, #tpu.memory_space<vmem>>, vector<16x32xf32>,
    } else {
    }
    %c0 = arith.constant 0 : index
    %c0_1 = arith.constant 0 : index
    %3 = vector.load %arg7[%c0, %c0_1] : memref<16x32xf32, #tpu.memory_space<vmem>>, vector<16x32xf32>
    %c0_2 = arith.constant 0 : index
    %c0_3 = arith.constant 0 : index
    %4 = vector.load %arg3[%c0_2, %c0_3] : memref<16x32xf32, #tpu.memory_space<vmem>>, vector<16x32xf32>
    %5 = arith.truncf %4 : vector<16x32xf32> to vector<16x32xbf16>
    %c0_4 = arith.constant 0 : index
    %c0_5 = arith.constant 0 : index
    %6 = vector.load %arg4[%c0_4, %c0_5] : memref<32x32xbf16, #tpu.memory_space<vmem>>, vector<32x32xbf16>
    %cst = arith.constant dense<0.000000e+00> : vector<16x32xf32>
    %7 = tpu.matmul %5, %6, %cst {dimension_numbers = #tpu.dot_dimension_numbers<[1], [0], [0], [1], [0, 0, 1, 1], [], []>} : vector<16x32xbf16>, vector<32x32xbf16>, vector<16x32xf32> -> vector<16x32xf32>
    %8 = arith.addf %3, %7 : vector<16x32xf32>
    %c0_6 = arith.constant 0 : index
    %c0_7 = arith.constant 0 : index
    %9 = vector.load %arg7[%c0_6, %c0_7] : memref<16x32xf32, #tpu.memory_space<vmem>>, vector<16x32xf32>
    tpu.vector_store %arg7[%c0_6, %c0_7], %8 {strides = array<i32>} : memref<16x32xf32, #tpu.memory_space<vmem>>, vector<16x32xf32>,
    %c0_i32_8 = arith.constant 0 : i32
    %10 = arith.cmpi eq, %arg2, %c0_i32_8 : i32
    %11 = arith.extui %10 : i1 to i32
    %c0_i32_9 = arith.constant 0 : i32
    %12 = arith.cmpi ne, %11, %c0_i32_9 : i32
    scf.if %12 {
      %c0_10 = arith.constant 0 : index
      %c0_11 = arith.constant 0 : index
      %13 = vector.load %arg7[%c0_10, %c0_11] : memref<16x32xf32, #tpu.memory_space<vmem>>, vector<16x32xf32>
      %c0_12 = arith.constant 0 : index
      %c0_13 = arith.constant 0 : index
      %14 = vector.load %arg5[%c0_12, %c0_13] : memref<1x32xf32, #tpu.memory_space<vmem>>, vector<1x32xf32>
      %15 = vector.broadcast %14 : vector<1x32xf32> to vector<16x32xf32>
      %16 = arith.addf %13, %15 : vector<16x32xf32>
      %17 = arith.truncf %16 : vector<16x32xf32> to vector<16x32xbf16>
      %c0_14 = arith.constant 0 : index
      %c0_15 = arith.constant 0 : index
      %18 = vector.load %arg6[%c0_14, %c0_15] : memref<16x32xbf16, #tpu.memory_space<vmem>>, vector<16x32xbf16>
      tpu.vector_store %arg6[%c0_14, %c0_15], %17 {strides = array<i32>} : memref<16x32xbf16, #tpu.memory_space<vmem>>, vector<16x32xbf16>,
    } else {
    }
    return
  }
  func.func @transform_0(%arg0: i32, %arg1: i32, %arg2: i32) -> (i32, i32) {
    %c0_i32 = arith.constant 0 : i32
    return %arg0, %arg2 : i32, i32
  }
  func.func @transform_1(%arg0: i32, %arg1: i32, %arg2: i32) -> (i32, i32) {
    %c0_i32 = arith.constant 0 : i32
    return %arg2, %arg1 : i32, i32
  }
  func.func @transform_2(%arg0: i32, %arg1: i32, %arg2: i32) -> (i32, i32) {
    %c0_i32 = arith.constant 0 : i32
    %c0_i32_0 = arith.constant 0 : i32
    return %c0_i32, %arg1 : i32, i32
  }
  func.func @transform_3(%arg0: i32, %arg1: i32, %arg2: i32) -> (i32, i32) {
    %c0_i32 = arith.constant 0 : i32
    return %arg0, %arg1 : i32, i32
  }
}

module attributes {stable_mosaic.version = 11 : i64} {
  func.func @_linear_kernel(%arg0: i32, %arg1: i32, %arg2: i32, %arg3: memref<16x32xf32, #tpu.memory_space<vmem>>, %arg4: memref<32x64xbf16, #tpu.memory_space<vmem>>, %arg5: memref<1x64xf32, #tpu.memory_space<vmem>>, %arg6: memref<16x64xbf16, #tpu.memory_space<vmem>>, %arg7: memref<16x64xf32, #tpu.memory_space<vmem>>) attributes {dimension_semantics = [#tpu.dimension_semantics<parallel>, #tpu.dimension_semantics<parallel>, #tpu.dimension_semantics<arbitrary>], iteration_bounds = array<i64: 1, 1, 1>, scalar_prefetch = 0 : i64, scratch_operands = 1 : i64, tpu.core_type = #tpu.core_type<tc>, window_params = [{transform_indices = @transform_0, window_bounds = array<i64: 16, 32>}, {transform_indices = @transform_1, window_bounds = array<i64: 32, 64>}, {transform_indices = @transform_2, window_bounds = array<i64: 1, 64>}, {transform_indices = @transform_3, window_bounds = array<i64: 16, 64>}]} {
    %c0_i32 = arith.constant 0 : i32
    %0 = arith.cmpi eq, %arg2, %c0_i32 : i32
    %1 = arith.extui %0 : i1 to i32
    %c0_i32_0 = arith.constant 0 : i32
    %2 = arith.cmpi ne, %1, %c0_i32_0 : i32
    scf.if %2 {
      %cst_10 = arith.constant 0.000000e+00 : f32
      %13 = vector.broadcast %cst_10 : f32 to vector<16x64xf32>
      %c0_11 = arith.constant 0 : index
      %c0_12 = arith.constant 0 : index
      %14 = vector.load %arg7[%c0_11, %c0_12] : memref<16x64xf32, #tpu.memory_space<vmem>>, vector<16x64xf32>
      tpu.vector_store %arg7[%c0_11, %c0_12], %13 {strides = array<i32>} : memref<16x64xf32, #tpu.memory_space<vmem>>, vector<16x64xf32>,
    } else {
    }
    %c0 = arith.constant 0 : index
    %c0_1 = arith.constant 0 : index
    %3 = vector.load %arg7[%c0, %c0_1] : memref<16x64xf32, #tpu.memory_space<vmem>>, vector<16x64xf32>
    %c0_2 = arith.constant 0 : index
    %c0_3 = arith.constant 0 : index
    %4 = vector.load %arg3[%c0_2, %c0_3] : memref<16x32xf32, #tpu.memory_space<vmem>>, vector<16x32xf32>
    %5 = arith.truncf %4 : vector<16x32xf32> to vector<16x32xbf16>
    %c0_4 = arith.constant 0 : index
    %c0_5 = arith.constant 0 : index
    %6 = vector.load %arg4[%c0_4, %c0_5] : memref<32x64xbf16, #tpu.memory_space<vmem>>, vector<32x64xbf16>
    %cst = arith.constant dense<0.000000e+00> : vector<16x64xf32>
    %7 = tpu.matmul %5, %6, %cst {dimension_numbers = #tpu.dot_dimension_numbers<[1], [0], [0], [1], [0, 0, 1, 1], [], []>} : vector<16x32xbf16>, vector<32x64xbf16>, vector<16x64xf32> -> vector<16x64xf32>
    %8 = arith.addf %3, %7 : vector<16x64xf32>
    %c0_6 = arith.constant 0 : index
    %c0_7 = arith.constant 0 : index
    %9 = vector.load %arg7[%c0_6, %c0_7] : memref<16x64xf32, #tpu.memory_space<vmem>>, vector<16x64xf32>
    tpu.vector_store %arg7[%c0_6, %c0_7], %8 {strides = array<i32>} : memref<16x64xf32, #tpu.memory_space<vmem>>, vector<16x64xf32>,
    %c0_i32_8 = arith.constant 0 : i32
    %10 = arith.cmpi eq, %arg2, %c0_i32_8 : i32
    %11 = arith.extui %10 : i1 to i32
    %c0_i32_9 = arith.constant 0 : i32
    %12 = arith.cmpi ne, %11, %c0_i32_9 : i32
    scf.if %12 {
      %c0_10 = arith.constant 0 : index
      %c0_11 = arith.constant 0 : index
      %13 = vector.load %arg7[%c0_10, %c0_11] : memref<16x64xf32, #tpu.memory_space<vmem>>, vector<16x64xf32>
      %c0_12 = arith.constant 0 : index
      %c0_13 = arith.constant 0 : index
      %14 = vector.load %arg5[%c0_12, %c0_13] : memref<1x64xf32, #tpu.memory_space<vmem>>, vector<1x64xf32>
      %15 = vector.broadcast %14 : vector<1x64xf32> to vector<16x64xf32>
      %16 = arith.addf %13, %15 : vector<16x64xf32>
      %17 = arith.truncf %16 : vector<16x64xf32> to vector<16x64xbf16>
      %c0_14 = arith.constant 0 : index
      %c0_15 = arith.constant 0 : index
      %18 = vector.load %arg6[%c0_14, %c0_15] : memref<16x64xbf16, #tpu.memory_space<vmem>>, vector<16x64xbf16>
      tpu.vector_store %arg6[%c0_14, %c0_15], %17 {strides = array<i32>} : memref<16x64xbf16, #tpu.memory_space<vmem>>, vector<16x64xbf16>,
    } else {
    }
    return
  }
  func.func @transform_0(%arg0: i32, %arg1: i32, %arg2: i32) -> (i32, i32) {
    %c0_i32 = arith.constant 0 : i32
    return %arg0, %arg2 : i32, i32
  }
  func.func @transform_1(%arg0: i32, %arg1: i32, %arg2: i32) -> (i32, i32) {
    %c0_i32 = arith.constant 0 : i32
    return %arg2, %arg1 : i32, i32
  }
  func.func @transform_2(%arg0: i32, %arg1: i32, %arg2: i32) -> (i32, i32) {
    %c0_i32 = arith.constant 0 : i32
    %c0_i32_0 = arith.constant 0 : i32
    return %c0_i32, %arg1 : i32, i32
  }
  func.func @transform_3(%arg0: i32, %arg1: i32, %arg2: i32) -> (i32, i32) {
    %c0_i32 = arith.constant 0 : i32
    return %arg0, %arg1 : i32, i32
  }
}

module attributes {stable_mosaic.version = 11 : i64} {
  func.func @_attn_kernel(%arg0: i32, %arg1: memref<1x8x32xbf16, #tpu.memory_space<vmem>>, %arg2: memref<1x8x32xbf16, #tpu.memory_space<vmem>>, %arg3: memref<1x8x32xbf16, #tpu.memory_space<vmem>>, %arg4: memref<1x1x1x8xi32, #tpu.memory_space<vmem>>, %arg5: memref<1x8x32xbf16, #tpu.memory_space<vmem>>) attributes {dimension_semantics = [#tpu.dimension_semantics<parallel>], iteration_bounds = array<i64: 2>, scalar_prefetch = 0 : i64, scratch_operands = 0 : i64, tpu.core_type = #tpu.core_type<tc>, window_params = [{transform_indices = @transform_0, window_bounds = array<i64: 1, 8, 32>}, {transform_indices = @transform_1, window_bounds = array<i64: 1, 8, 32>}, {transform_indices = @transform_2, window_bounds = array<i64: 1, 8, 32>}, {transform_indices = @transform_3, window_bounds = array<i64: 1, 1, 1, 8>}, {transform_indices = @transform_4, window_bounds = array<i64: 1, 8, 32>}]} {
    %c0 = arith.constant 0 : index
    %c0_0 = arith.constant 0 : index
    %c0_1 = arith.constant 0 : index
    %0 = vector.load %arg1[%c0, %c0_0, %c0_1] : memref<1x8x32xbf16, #tpu.memory_space<vmem>>, vector<1x8x32xbf16>
    %1 = vector.shape_cast %0 : vector<1x8x32xbf16> to vector<8x32xbf16>
    %c0_2 = arith.constant 0 : index
    %c0_3 = arith.constant 0 : index
    %c0_4 = arith.constant 0 : index
    %2 = vector.load %arg2[%c0_2, %c0_3, %c0_4] : memref<1x8x32xbf16, #tpu.memory_space<vmem>>, vector<1x8x32xbf16>
    %3 = vector.shape_cast %2 : vector<1x8x32xbf16> to vector<8x32xbf16>
    %c0_5 = arith.constant 0 : index
    %c0_6 = arith.constant 0 : index
    %c0_7 = arith.constant 0 : index
    %4 = vector.load %arg3[%c0_5, %c0_6, %c0_7] : memref<1x8x32xbf16, #tpu.memory_space<vmem>>, vector<1x8x32xbf16>
    %5 = vector.shape_cast %4 : vector<1x8x32xbf16> to vector<8x32xbf16>
    %c0_8 = arith.constant 0 : index
    %c0_9 = arith.constant 0 : index
    %c0_10 = arith.constant 0 : index
    %c0_11 = arith.constant 0 : index
    %6 = vector.load %arg4[%c0_8, %c0_9, %c0_10, %c0_11] : memref<1x1x1x8xi32, #tpu.memory_space<vmem>>, vector<1x1x1x8xi32>
    %7 = vector.shape_cast %6 : vector<1x1x1x8xi32> to vector<1x8xi32>
    %8 = vector.extract_strided_slice %1 {offsets = [0, 0], sizes = [8, 8], strides = [1, 1]} : vector<8x32xbf16> to vector<8x8xbf16>
    %9 = vector.extract_strided_slice %3 {offsets = [0, 0], sizes = [8, 8], strides = [1, 1]} : vector<8x32xbf16> to vector<8x8xbf16>
    %10 = vector.extract_strided_slice %5 {offsets = [0, 0], sizes = [8, 8], strides = [1, 1]} : vector<8x32xbf16> to vector<8x8xbf16>
    %cst = arith.constant dense<0.000000e+00> : vector<8x8xf32>
    %11 = tpu.matmul %8, %9, %cst {dimension_numbers = #tpu.dot_dimension_numbers<[1], [1], [0], [0], [0, 0, 1, 0], [], []>} : vector<8x8xbf16>, vector<8x8xbf16>, vector<8x8xf32> -> vector<8x8xf32>
    %c0_i32 = arith.constant 0 : i32
    %12 = vector.broadcast %c0_i32 : i32 to vector<1x8xi32>
    %13 = arith.cmpi eq, %7, %12 : vector<1x8xi32>
    %cst_12 = arith.constant -1.000000e+20 : f32
    %14 = vector.shape_cast %13 : vector<1x8xi1> to vector<1x8xi1>
    %15 = vector.broadcast %14 : vector<1x8xi1> to vector<8x8xi1>
    %16 = vector.broadcast %cst_12 : f32 to vector<8x8xf32>
    %17 = arith.select %15, %16, %11 : vector<8x8xi1>, vector<8x8xf32>
    %cst_13 = arith.constant 0.176776692 : f32
    %18 = vector.broadcast %cst_13 : f32 to vector<8x8xf32>
    %19 = arith.mulf %17, %18 : vector<8x8xf32>
    %cst_14 = arith.constant dense<0xFF800000> : vector<8xf32>
    %20 = vector.multi_reduction <maximumf>, %19, %cst_14 [1] : vector<8x8xf32> to vector<8xf32>
    %21 = vector.shape_cast %20 : vector<8xf32> to vector<8x1xf32>
    %22 = vector.broadcast %21 : vector<8x1xf32> to vector<8x8xf32>
    %23 = arith.subf %19, %22 : vector<8x8xf32>
    %24 = math.exp %23 : vector<8x8xf32>
    %cst_15 = arith.constant dense<0.000000e+00> : vector<8xf32>
    %25 = vector.multi_reduction <add>, %24, %cst_15 [1] : vector<8x8xf32> to vector<8xf32>
    %26 = vector.shape_cast %25 : vector<8xf32> to vector<8x1xf32>
    %27 = tpu.reciprocal %26 {approx = true} : vector<8x1xf32> -> vector<8x1xf32>
    %28 = vector.broadcast %27 : vector<8x1xf32> to vector<8x8xf32>
    %29 = arith.mulf %24, %28 : vector<8x8xf32>
    %30 = arith.truncf %29 : vector<8x8xf32> to vector<8x8xbf16>
    %cst_16 = arith.constant dense<0.000000e+00> : vector<8x8xf32>
    %31 = tpu.matmul %30, %10, %cst_16 {dimension_numbers = #tpu.dot_dimension_numbers<[1], [0], [0], [1], [0, 0, 1, 1], [], []>} : vector<8x8xbf16>, vector<8x8xbf16>, vector<8x8xf32> -> vector<8x8xf32>
    %32 = vector.extract_strided_slice %1 {offsets = [0, 8], sizes = [8, 8], strides = [1, 1]} : vector<8x32xbf16> to vector<8x8xbf16>
    %33 = vector.extract_strided_slice %3 {offsets = [0, 8], sizes = [8, 8], strides = [1, 1]} : vector<8x32xbf16> to vector<8x8xbf16>
    %34 = vector.extract_strided_slice %5 {offsets = [0, 8], sizes = [8, 8], strides = [1, 1]} : vector<8x32xbf16> to vector<8x8xbf16>
    %cst_17 = arith.constant dense<0.000000e+00> : vector<8x8xf32>
    %35 = tpu.matmul %32, %33, %cst_17 {dimension_numbers = #tpu.dot_dimension_numbers<[1], [1], [0], [0], [0, 0, 1, 0], [], []>} : vector<8x8xbf16>, vector<8x8xbf16>, vector<8x8xf32> -> vector<8x8xf32>
    %c0_i32_18 = arith.constant 0 : i32
    %36 = vector.broadcast %c0_i32_18 : i32 to vector<1x8xi32>
    %37 = arith.cmpi eq, %7, %36 : vector<1x8xi32>
    %cst_19 = arith.constant -1.000000e+20 : f32
    %38 = vector.shape_cast %37 : vector<1x8xi1> to vector<1x8xi1>
    %39 = vector.broadcast %38 : vector<1x8xi1> to vector<8x8xi1>
    %40 = vector.broadcast %cst_19 : f32 to vector<8x8xf32>
    %41 = arith.select %39, %40, %35 : vector<8x8xi1>, vector<8x8xf32>
    %cst_20 = arith.constant 0.176776692 : f32
    %42 = vector.broadcast %cst_20 : f32 to vector<8x8xf32>
    %43 = arith.mulf %41, %42 : vector<8x8xf32>
    %cst_21 = arith.constant dense<0xFF800000> : vector<8xf32>
    %44 = vector.multi_reduction <maximumf>, %43, %cst_21 [1] : vector<8x8xf32> to vector<8xf32>
    %45 = vector.shape_cast %44 : vector<8xf32> to vector<8x1xf32>
    %46 = vector.broadcast %45 : vector<8x1xf32> to vector<8x8xf32>
    %47 = arith.subf %43, %46 : vector<8x8xf32>
    %48 = math.exp %47 : vector<8x8xf32>
    %cst_22 = arith.constant dense<0.000000e+00> : vector<8xf32>
    %49 = vector.multi_reduction <add>, %48, %cst_22 [1] : vector<8x8xf32> to vector<8xf32>
    %50 = vector.shape_cast %49 : vector<8xf32> to vector<8x1xf32>
    %51 = tpu.reciprocal %50 {approx = true} : vector<8x1xf32> -> vector<8x1xf32>
    %52 = vector.broadcast %51 : vector<8x1xf32> to vector<8x8xf32>
    %53 = arith.mulf %48, %52 : vector<8x8xf32>
    %54 = arith.truncf %53 : vector<8x8xf32> to vector<8x8xbf16>
    %cst_23 = arith.constant dense<0.000000e+00> : vector<8x8xf32>
    %55 = tpu.matmul %54, %34, %cst_23 {dimension_numbers = #tpu.dot_dimension_numbers<[1], [0], [0], [1], [0, 0, 1, 1], [], []>} : vector<8x8xbf16>, vector<8x8xbf16>, vector<8x8xf32> -> vector<8x8xf32>
    %56 = vector.extract_strided_slice %1 {offsets = [0, 16], sizes = [8, 8], strides = [1, 1]} : vector<8x32xbf16> to vector<8x8xbf16>
    %57 = vector.extract_strided_slice %3 {offsets = [0, 16], sizes = [8, 8], strides = [1, 1]} : vector<8x32xbf16> to vector<8x8xbf16>
    %58 = vector.extract_strided_slice %5 {offsets = [0, 16], sizes = [8, 8], strides = [1, 1]} : vector<8x32xbf16> to vector<8x8xbf16>
    %cst_24 = arith.constant dense<0.000000e+00> : vector<8x8xf32>
    %59 = tpu.matmul %56, %57, %cst_24 {dimension_numbers = #tpu.dot_dimension_numbers<[1], [1], [0], [0], [0, 0, 1, 0], [], []>} : vector<8x8xbf16>, vector<8x8xbf16>, vector<8x8xf32> -> vector<8x8xf32>
    %c0_i32_25 = arith.constant 0 : i32
    %60 = vector.broadcast %c0_i32_25 : i32 to vector<1x8xi32>
    %61 = arith.cmpi eq, %7, %60 : vector<1x8xi32>
    %cst_26 = arith.constant -1.000000e+20 : f32
    %62 = vector.shape_cast %61 : vector<1x8xi1> to vector<1x8xi1>
    %63 = vector.broadcast %62 : vector<1x8xi1> to vector<8x8xi1>
    %64 = vector.broadcast %cst_26 : f32 to vector<8x8xf32>
    %65 = arith.select %63, %64, %59 : vector<8x8xi1>, vector<8x8xf32>
    %cst_27 = arith.constant 0.176776692 : f32
    %66 = vector.broadcast %cst_27 : f32 to vector<8x8xf32>
    %67 = arith.mulf %65, %66 : vector<8x8xf32>
    %cst_28 = arith.constant dense<0xFF800000> : vector<8xf32>
    %68 = vector.multi_reduction <maximumf>, %67, %cst_28 [1] : vector<8x8xf32> to vector<8xf32>
    %69 = vector.shape_cast %68 : vector<8xf32> to vector<8x1xf32>
    %70 = vector.broadcast %69 : vector<8x1xf32> to vector<8x8xf32>
    %71 = arith.subf %67, %70 : vector<8x8xf32>
    %72 = math.exp %71 : vector<8x8xf32>
    %cst_29 = arith.constant dense<0.000000e+00> : vector<8xf32>
    %73 = vector.multi_reduction <add>, %72, %cst_29 [1] : vector<8x8xf32> to vector<8xf32>
    %74 = vector.shape_cast %73 : vector<8xf32> to vector<8x1xf32>
    %75 = tpu.reciprocal %74 {approx = true} : vector<8x1xf32> -> vector<8x1xf32>
    %76 = vector.broadcast %75 : vector<8x1xf32> to vector<8x8xf32>
    %77 = arith.mulf %72, %76 : vector<8x8xf32>
    %78 = arith.truncf %77 : vector<8x8xf32> to vector<8x8xbf16>
    %cst_30 = arith.constant dense<0.000000e+00> : vector<8x8xf32>
    %79 = tpu.matmul %78, %58, %cst_30 {dimension_numbers = #tpu.dot_dimension_numbers<[1], [0], [0], [1], [0, 0, 1, 1], [], []>} : vector<8x8xbf16>, vector<8x8xbf16>, vector<8x8xf32> -> vector<8x8xf32>
    %80 = vector.extract_strided_slice %1 {offsets = [0, 24], sizes = [8, 8], strides = [1, 1]} : vector<8x32xbf16> to vector<8x8xbf16>
    %81 = vector.extract_strided_slice %3 {offsets = [0, 24], sizes = [8, 8], strides = [1, 1]} : vector<8x32xbf16> to vector<8x8xbf16>
    %82 = vector.extract_strided_slice %5 {offsets = [0, 24], sizes = [8, 8], strides = [1, 1]} : vector<8x32xbf16> to vector<8x8xbf16>
    %cst_31 = arith.constant dense<0.000000e+00> : vector<8x8xf32>
    %83 = tpu.matmul %80, %81, %cst_31 {dimension_numbers = #tpu.dot_dimension_numbers<[1], [1], [0], [0], [0, 0, 1, 0], [], []>} : vector<8x8xbf16>, vector<8x8xbf16>, vector<8x8xf32> -> vector<8x8xf32>
    %c0_i32_32 = arith.constant 0 : i32
    %84 = vector.broadcast %c0_i32_32 : i32 to vector<1x8xi32>
    %85 = arith.cmpi eq, %7, %84 : vector<1x8xi32>
    %cst_33 = arith.constant -1.000000e+20 : f32
    %86 = vector.shape_cast %85 : vector<1x8xi1> to vector<1x8xi1>
    %87 = vector.broadcast %86 : vector<1x8xi1> to vector<8x8xi1>
    %88 = vector.broadcast %cst_33 : f32 to vector<8x8xf32>
    %89 = arith.select %87, %88, %83 : vector<8x8xi1>, vector<8x8xf32>
    %cst_34 = arith.constant 0.176776692 : f32
    %90 = vector.broadcast %cst_34 : f32 to vector<8x8xf32>
    %91 = arith.mulf %89, %90 : vector<8x8xf32>
    %cst_35 = arith.constant dense<0xFF800000> : vector<8xf32>
    %92 = vector.multi_reduction <maximumf>, %91, %cst_35 [1] : vector<8x8xf32> to vector<8xf32>
    %93 = vector.shape_cast %92 : vector<8xf32> to vector<8x1xf32>
    %94 = vector.broadcast %93 : vector<8x1xf32> to vector<8x8xf32>
    %95 = arith.subf %91, %94 : vector<8x8xf32>
    %96 = math.exp %95 : vector<8x8xf32>
    %cst_36 = arith.constant dense<0.000000e+00> : vector<8xf32>
    %97 = vector.multi_reduction <add>, %96, %cst_36 [1] : vector<8x8xf32> to vector<8xf32>
    %98 = vector.shape_cast %97 : vector<8xf32> to vector<8x1xf32>
    %99 = tpu.reciprocal %98 {approx = true} : vector<8x1xf32> -> vector<8x1xf32>
    %100 = vector.broadcast %99 : vector<8x1xf32> to vector<8x8xf32>
    %101 = arith.mulf %96, %100 : vector<8x8xf32>
    %102 = arith.truncf %101 : vector<8x8xf32> to vector<8x8xbf16>
    %cst_37 = arith.constant dense<0.000000e+00> : vector<8x8xf32>
    %103 = tpu.matmul %102, %82, %cst_37 {dimension_numbers = #tpu.dot_dimension_numbers<[1], [0], [0], [1], [0, 0, 1, 1], [], []>} : vector<8x8xbf16>, vector<8x8xbf16>, vector<8x8xf32> -> vector<8x8xf32>
    %104 = tpu.concatenate %31, %55, %79, %103 in 1 : vector<8x8xf32>, vector<8x8xf32>, vector<8x8xf32>, vector<8x8xf32> -> vector<8x32xf32>
    %105 = arith.truncf %104 : vector<8x32xf32> to vector<8x32xbf16>
    %c0_38 = arith.constant 0 : index
    %c0_39 = arith.constant 0 : index
    %c0_40 = arith.constant 0 : index
    %106 = vector.load %arg5[%c0_38, %c0_39, %c0_40] : memref<1x8x32xbf16, #tpu.memory_space<vmem>>, vector<1x8x32xbf16>
    %107 = vector.shape_cast %106 : vector<1x8x32xbf16> to vector<8x32xbf16>
    %108 = vector.shape_cast %105 : vector<8x32xbf16> to vector<1x8x32xbf16>
    tpu.vector_store %arg5[%c0_38, %c0_39, %c0_40], %108 {strides = array<i32>} : memref<1x8x32xbf16, #tpu.memory_space<vmem>>, vector<1x8x32xbf16>,
    return
  }
  func.func @transform_0(%arg0: i32) -> (i32, i32, i32) {
    %c0_i32 = arith.constant 0 : i32
    %c0_i32_0 = arith.constant 0 : i32
    %c0_i32_1 = arith.constant 0 : i32
    return %arg0, %c0_i32, %c0_i32_0 : i32, i32, i32
  }
  func.func @transform_1(%arg0: i32) -> (i32, i32, i32) {
    %c0_i32 = arith.constant 0 : i32
    %c0_i32_0 = arith.constant 0 : i32
    %c0_i32_1 = arith.constant 0 : i32
    return %arg0, %c0_i32, %c0_i32_0 : i32, i32, i32
  }
  func.func @transform_2(%arg0: i32) -> (i32, i32, i32) {
    %c0_i32 = arith.constant 0 : i32
    %c0_i32_0 = arith.constant 0 : i32
    %c0_i32_1 = arith.constant 0 : i32
    return %arg0, %c0_i32, %c0_i32_0 : i32, i32, i32
  }
  func.func @transform_3(%arg0: i32) -> (i32, i32, i32, i32) {
    %c0_i32 = arith.constant 0 : i32
    %c0_i32_0 = arith.constant 0 : i32
    %c0_i32_1 = arith.constant 0 : i32
    %c0_i32_2 = arith.constant 0 : i32
    return %arg0, %c0_i32, %c0_i32_0, %c0_i32_1 : i32, i32, i32, i32
  }
  func.func @transform_4(%arg0: i32) -> (i32, i32, i32) {
    %c0_i32 = arith.constant 0 : i32
    %c0_i32_0 = arith.constant 0 : i32
    %c0_i32_1 = arith.constant 0 : i32
    return %arg0, %c0_i32, %c0_i32_0 : i32, i32, i32
  }
}

module attributes {stable_mosaic.version = 11 : i64} {
  func.func @_linear_kernel(%arg0: i32, %arg1: i32, %arg2: i32, %arg3: memref<16x32xf32, #tpu.memory_space<vmem>>, %arg4: memref<32x50xbf16, #tpu.memory_space<vmem>>, %arg5: memref<1x50xf32, #tpu.memory_space<vmem>>, %arg6: memref<16x50xf32, #tpu.memory_space<vmem>>, %arg7: memref<16x50xf32, #tpu.memory_space<vmem>>) attributes {dimension_semantics = [#tpu.dimension_semantics<parallel>, #tpu.dimension_semantics<parallel>, #tpu.dimension_semantics<arbitrary>], iteration_bounds = array<i64: 1, 1, 1>, scalar_prefetch = 0 : i64, scratch_operands = 1 : i64, tpu.core_type = #tpu.core_type<tc>, window_params = [{transform_indices = @transform_0, window_bounds = array<i64: 16, 32>}, {transform_indices = @transform_1, window_bounds = array<i64: 32, 50>}, {transform_indices = @transform_2, window_bounds = array<i64: 1, 50>}, {transform_indices = @transform_3, window_bounds = array<i64: 16, 50>}]} {
    %c0_i32 = arith.constant 0 : i32
    %0 = arith.cmpi eq, %arg2, %c0_i32 : i32
    %1 = arith.extui %0 : i1 to i32
    %c0_i32_0 = arith.constant 0 : i32
    %2 = arith.cmpi ne, %1, %c0_i32_0 : i32
    scf.if %2 {
      %cst_10 = arith.constant 0.000000e+00 : f32
      %13 = vector.broadcast %cst_10 : f32 to vector<16x50xf32>
      %c0_11 = arith.constant 0 : index
      %c0_12 = arith.constant 0 : index
      %14 = vector.load %arg7[%c0_11, %c0_12] : memref<16x50xf32, #tpu.memory_space<vmem>>, vector<16x50xf32>
      tpu.vector_store %arg7[%c0_11, %c0_12], %13 {strides = array<i32>} : memref<16x50xf32, #tpu.memory_space<vmem>>, vector<16x50xf32>,
    } else {
    }
    %c0 = arith.constant 0 : index
    %c0_1 = arith.constant 0 : index
    %3 = vector.load %arg7[%c0, %c0_1] : memref<16x50xf32, #tpu.memory_space<vmem>>, vector<16x50xf32>
    %c0_2 = arith.constant 0 : index
    %c0_3 = arith.constant 0 : index
    %4 = vector.load %arg3[%c0_2, %c0_3] : memref<16x32xf32, #tpu.memory_space<vmem>>, vector<16x32xf32>
    %5 = arith.truncf %4 : vector<16x32xf32> to vector<16x32xbf16>
    %c0_4 = arith.constant 0 : index
    %c0_5 = arith.constant 0 : index
    %6 = vector.load %arg4[%c0_4, %c0_5] : memref<32x50xbf16, #tpu.memory_space<vmem>>, vector<32x50xbf16>
    %cst = arith.constant dense<0.000000e+00> : vector<16x50xf32>
    %7 = tpu.matmul %5, %6, %cst {dimension_numbers = #tpu.dot_dimension_numbers<[1], [0], [0], [1], [0, 0, 1, 1], [], []>} : vector<16x32xbf16>, vector<32x50xbf16>, vector<16x50xf32> -> vector<16x50xf32>
    %8 = arith.addf %3, %7 : vector<16x50xf32>
    %c0_6 = arith.constant 0 : index
    %c0_7 = arith.constant 0 : index
    %9 = vector.load %arg7[%c0_6, %c0_7] : memref<16x50xf32, #tpu.memory_space<vmem>>, vector<16x50xf32>
    tpu.vector_store %arg7[%c0_6, %c0_7], %8 {strides = array<i32>} : memref<16x50xf32, #tpu.memory_space<vmem>>, vector<16x50xf32>,
    %c0_i32_8 = arith.constant 0 : i32
    %10 = arith.cmpi eq, %arg2, %c0_i32_8 : i32
    %11 = arith.extui %10 : i1 to i32
    %c0_i32_9 = arith.constant 0 : i32
    %12 = arith.cmpi ne, %11, %c0_i32_9 : i32
    scf.if %12 {
      %c0_10 = arith.constant 0 : index
      %c0_11 = arith.constant 0 : index
      %13 = vector.load %arg7[%c0_10, %c0_11] : memref<16x50xf32, #tpu.memory_space<vmem>>, vector<16x50xf32>
      %c0_12 = arith.constant 0 : index
      %c0_13 = arith.constant 0 : index
      %14 = vector.load %arg5[%c0_12, %c0_13] : memref<1x50xf32, #tpu.memory_space<vmem>>, vector<1x50xf32>
      %15 = vector.broadcast %14 : vector<1x50xf32> to vector<16x50xf32>
      %16 = arith.addf %13, %15 : vector<16x50xf32>
      %c0_14 = arith.constant 0 : index
      %c0_15 = arith.constant 0 : index
      %17 = vector.load %arg6[%c0_14, %c0_15] : memref<16x50xf32, #tpu.memory_space<vmem>>, vector<16x50xf32>
      tpu.vector_store %arg6[%c0_14, %c0_15], %16 {strides = array<i32>} : memref<16x50xf32, #tpu.memory_space<vmem>>, vector<16x50xf32>,
    } else {
    }
    return
  }
  func.func @transform_0(%arg0: i32, %arg1: i32, %arg2: i32) -> (i32, i32) {
    %c0_i32 = arith.constant 0 : i32
    return %arg0, %arg2 : i32, i32
  }
  func.func @transform_1(%arg0: i32, %arg1: i32, %arg2: i32) -> (i32, i32) {
    %c0_i32 = arith.constant 0 : i32
    return %arg2, %arg1 : i32, i32
  }
  func.func @transform_2(%arg0: i32, %arg1: i32, %arg2: i32) -> (i32, i32) {
    %c0_i32 = arith.constant 0 : i32
    %c0_i32_0 = arith.constant 0 : i32
    return %c0_i32, %arg1 : i32, i32
  }
  func.func @transform_3(%arg0: i32, %arg1: i32, %arg2: i32) -> (i32, i32) {
    %c0_i32 = arith.constant 0 : i32
    return %arg0, %arg1 : i32, i32
  }
}

module attributes {stable_mosaic.version = 11 : i64} {
  func.func @_ffn_res_ln_kernel(%arg0: i32, %arg1: memref<16x32xf32, #tpu.memory_space<vmem>>, %arg2: memref<32x128xbf16, #tpu.memory_space<vmem>>, %arg3: memref<1x128xf32, #tpu.memory_space<vmem>>, %arg4: memref<128x32xbf16, #tpu.memory_space<vmem>>, %arg5: memref<1x32xf32, #tpu.memory_space<vmem>>, %arg6: memref<1x32xf32, #tpu.memory_space<vmem>>, %arg7: memref<1x32xf32, #tpu.memory_space<vmem>>, %arg8: memref<16x32xf32, #tpu.memory_space<vmem>>) attributes {dimension_semantics = [#tpu.dimension_semantics<parallel>], iteration_bounds = array<i64: 1>, scalar_prefetch = 0 : i64, scratch_operands = 0 : i64, tpu.core_type = #tpu.core_type<tc>, window_params = [{transform_indices = @transform_0, window_bounds = array<i64: 16, 32>}, {pipeline_mode = #tpu.pipeline_mode<synchronous>, transform_indices = @transform_1, window_bounds = array<i64: 32, 128>}, {pipeline_mode = #tpu.pipeline_mode<synchronous>, transform_indices = @transform_2, window_bounds = array<i64: 1, 128>}, {pipeline_mode = #tpu.pipeline_mode<synchronous>, transform_indices = @transform_3, window_bounds = array<i64: 128, 32>}, {pipeline_mode = #tpu.pipeline_mode<synchronous>, transform_indices = @transform_4, window_bounds = array<i64: 1, 32>}, {pipeline_mode = #tpu.pipeline_mode<synchronous>, transform_indices = @transform_5, window_bounds = array<i64: 1, 32>}, {pipeline_mode = #tpu.pipeline_mode<synchronous>, transform_indices = @transform_6, window_bounds = array<i64: 1, 32>}, {transform_indices = @transform_7, window_bounds = array<i64: 16, 32>}]} {
    %c0 = arith.constant 0 : index
    %c0_0 = arith.constant 0 : index
    %0 = vector.load %arg1[%c0, %c0_0] : memref<16x32xf32, #tpu.memory_space<vmem>>, vector<16x32xf32>
    %1 = arith.truncf %0 : vector<16x32xf32> to vector<16x32xbf16>
    %c0_1 = arith.constant 0 : index
    %c0_2 = arith.constant 0 : index
    %2 = vector.load %arg2[%c0_1, %c0_2] : memref<32x128xbf16, #tpu.memory_space<vmem>>, vector<32x128xbf16>
    %cst = arith.constant dense<0.000000e+00> : vector<16x128xf32>
    %3 = tpu.matmul %1, %2, %cst {dimension_numbers = #tpu.dot_dimension_numbers<[1], [0], [0], [1], [0, 0, 1, 1], [], []>} : vector<16x32xbf16>, vector<32x128xbf16>, vector<16x128xf32> -> vector<16x128xf32>
    %c0_3 = arith.constant 0 : index
    %c0_4 = arith.constant 0 : index
    %4 = vector.load %arg3[%c0_3, %c0_4] : memref<1x128xf32, #tpu.memory_space<vmem>>, vector<1x128xf32>
    %5 = vector.broadcast %4 : vector<1x128xf32> to vector<16x128xf32>
    %6 = arith.addf %3, %5 : vector<16x128xf32>
    %cst_5 = arith.constant 0.000000e+00 : f32
    %7 = vector.broadcast %cst_5 : f32 to vector<16x128xf32>
    %8 = arith.maximumf %6, %7 : vector<16x128xf32>
    %9 = arith.truncf %8 : vector<16x128xf32> to vector<16x128xbf16>
    %c0_6 = arith.constant 0 : index
    %c0_7 = arith.constant 0 : index
    %10 = vector.load %arg4[%c0_6, %c0_7] : memref<128x32xbf16, #tpu.memory_space<vmem>>, vector<128x32xbf16>
    %cst_8 = arith.constant dense<0.000000e+00> : vector<16x32xf32>
    %11 = tpu.matmul %9, %10, %cst_8 {dimension_numbers = #tpu.dot_dimension_numbers<[1], [0], [0], [1], [0, 0, 1, 1], [], []>} : vector<16x128xbf16>, vector<128x32xbf16>, vector<16x32xf32> -> vector<16x32xf32>
    %c0_9 = arith.constant 0 : index
    %c0_10 = arith.constant 0 : index
    %12 = vector.load %arg5[%c0_9, %c0_10] : memref<1x32xf32, #tpu.memory_space<vmem>>, vector<1x32xf32>
    %13 = vector.broadcast %12 : vector<1x32xf32> to vector<16x32xf32>
    %14 = arith.addf %11, %13 : vector<16x32xf32>
    %15 = arith.addf %14, %0 : vector<16x32xf32>
    %cst_11 = arith.constant dense<0.000000e+00> : vector<16xf32>
    %16 = vector.multi_reduction <add>, %15, %cst_11 [1] : vector<16x32xf32> to vector<16xf32>
    %17 = vector.shape_cast %16 : vector<16xf32> to vector<16x1xf32>
    %cst_12 = arith.constant 3.200000e+01 : f32
    %18 = vector.broadcast %cst_12 : f32 to vector<16x1xf32>
    %19 = arith.divf %17, %18 : vector<16x1xf32>
    %20 = vector.broadcast %19 : vector<16x1xf32> to vector<16x32xf32>
    %21 = arith.subf %15, %20 : vector<16x32xf32>
    %22 = arith.mulf %21, %21 : vector<16x32xf32>
    %cst_13 = arith.constant dense<0.000000e+00> : vector<16xf32>
    %23 = vector.multi_reduction <add>, %22, %cst_13 [1] : vector<16x32xf32> to vector<16xf32>
    %24 = vector.shape_cast %23 : vector<16xf32> to vector<16x1xf32>
    %cst_14 = arith.constant 3.200000e+01 : f32
    %25 = vector.broadcast %cst_14 : f32 to vector<16x1xf32>
    %26 = arith.divf %24, %25 : vector<16x1xf32>
    %27 = vector.broadcast %19 : vector<16x1xf32> to vector<16x32xf32>
    %28 = arith.subf %15, %27 : vector<16x32xf32>
    %cst_15 = arith.constant 9.99999974E-6 : f32
    %29 = vector.broadcast %cst_15 : f32 to vector<16x1xf32>
    %30 = arith.addf %26, %29 : vector<16x1xf32>
    %31 = math.rsqrt %30 : vector<16x1xf32>
    %32 = vector.broadcast %31 : vector<16x1xf32> to vector<16x32xf32>
    %33 = arith.mulf %28, %32 : vector<16x32xf32>
    %c0_16 = arith.constant 0 : index
    %c0_17 = arith.constant 0 : index
    %34 = vector.load %arg6[%c0_16, %c0_17] : memref<1x32xf32, #tpu.memory_space<vmem>>, vector<1x32xf32>
    %35 = vector.broadcast %34 : vector<1x32xf32> to vector<16x32xf32>
    %36 = arith.mulf %33, %35 : vector<16x32xf32>
    %c0_18 = arith.constant 0 : index
    %c0_19 = arith.constant 0 : index
    %37 = vector.load %arg7[%c0_18, %c0_19] : memref<1x32xf32, #tpu.memory_space<vmem>>, vector<1x32xf32>
    %38 = vector.broadcast %37 : vector<1x32xf32> to vector<16x32xf32>
    %39 = arith.addf %36, %38 : vector<16x32xf32>
    %c0_20 = arith.constant 0 : index
    %c0_21 = arith.constant 0 : index
    %40 = vector.load %arg8[%c0_20, %c0_21] : memref<16x32xf32, #tpu.memory_space<vmem>>, vector<16x32xf32>
    tpu.vector_store %arg8[%c0_20, %c0_21], %39 {strides = array<i32>} : memref<16x32xf32, #tpu.memory_space<vmem>>, vector<16x32xf32>,
    return
  }
  func.func @transform_0(%arg0: i32) -> (i32, i32) {
    %c0_i32 = arith.constant 0 : i32
    %c0_i32_0 = arith.constant 0 : i32
    return %arg0, %c0_i32 : i32, i32
  }
  func.func @transform_1(%arg0: i32) -> (i32, i32) {
    %c0_i32 = arith.constant 0 : i32
    %c0_i32_0 = arith.constant 0 : i32
    %c0_i32_1 = arith.constant 0 : i32
    return %c0_i32, %c0_i32_0 : i32, i32
  }
  func.func @transform_2(%arg0: i32) -> (i32, i32) {
    %c0_i32 = arith.constant 0 : i32
    %c0_i32_0 = arith.constant 0 : i32
    %c0_i32_1 = arith.constant 0 : i32
    return %c0_i32, %c0_i32_0 : i32, i32
  }
  func.func @transform_3(%arg0: i32) -> (i32, i32) {
    %c0_i32 = arith.constant 0 : i32
    %c0_i32_0 = arith.constant 0 : i32
    %c0_i32_1 = arith.constant 0 : i32
    return %c0_i32, %c0_i32_0 : i32, i32
  }
  func.func @transform_4(%arg0: i32) -> (i32, i32) {
    %c0_i32 = arith.constant 0 : i32
    %c0_i32_0 = arith.constant 0 : i32
    %c0_i32_1 = arith.constant 0 : i32
    return %c0_i32, %c0_i32_0 : i32, i32
  }
  func.func @transform_5(%arg0: i32) -> (i32, i32) {
    %c0_i32 = arith.constant 0 : i32
    %c0_i32_0 = arith.constant 0 : i32
    %c0_i32_1 = arith.constant 0 : i32
    return %c0_i32, %c0_i32_0 : i32, i32
  }
  func.func @transform_6(%arg0: i32) -> (i32, i32) {
    %c0_i32 = arith.constant 0 : i32
    %c0_i32_0 = arith.constant 0 : i32
    %c0_i32_1 = arith.constant 0 : i32
    return %c0_i32, %c0_i32_0 : i32, i32
  }
  func.func @transform_7(%arg0: i32) -> (i32, i32) {
    %c0_i32 = arith.constant 0 : i32
    %c0_i32_0 = arith.constant 0 : i32
    return %arg0, %c0_i32 : i32, i32
  }
}

</mosaic_0001>

<llo_original>
// kernel: decoder_forward.21
$region0: #{decoder_forward.21}
  #allocation0 [shape = 'u32[]', space=smem, size = 0x4, offset = 0x4, fixed_abs, tag = 'smem constant byte address 0x4 - core index']
  #allocation1 [shape = 'u32[144,128]{1,0:T(1,128)}', space=vmem, size = 0x12000, scoped, tag = 'internal scratch']
  #allocation2 [shape = 'f32[16,32]{1,0:T(8,128)}', space=vmem, size = 0x2000, scoped, tag = 'scratch operand']
  %s0 = inlined_call_operand.vmem [shape: f32[16,32], index: 0, kind: input, shape index: {}]
  %s1 = inlined_call_operand.vmem [shape: bf16[32,32], index: 1, kind: input, shape index: {}]
  %s2 = inlined_call_operand.vmem [shape: f32[1,32], index: 2, kind: input, shape index: {}]
  %s3 = inlined_call_operand.vmem [shape: bf16[16,32], index: 3, kind: output, shape index: {}]
  %s4 = sld [smem:[#allocation0]]
  $region30: #{decoder_forward.21} parent=0
    _
  %s6 = ssub.s32 1, %s4
  %s7 = scalar_select 0, %s6, %s4
  // Predicated region
  $region2: #{decoder_forward.21} parent=0 // pred_check
    _
  $region3: #{decoder_forward.21} parent=0 // pred_check_branch
    %9 = sbr.rel (0) target = $region5
  $region4: #{decoder_forward.21} parent=0 // pred_region
    _
  $region5: #{decoder_forward.21} parent=0 // pred_fallthru
    _
  // Predicated region
  $region6: #{decoder_forward.21} parent=0 // pred_check
    _
  $region7: #{decoder_forward.21} parent=0 // pred_check_branch
    %11 = sbr.rel (0) target = $region9
  $region8: #{decoder_forward.21} parent=0 // pred_region
    _
  $region9: #{decoder_forward.21} parent=0 // pred_fallthru
    _
  // Predicated region
  $region10: #{decoder_forward.21} parent=0 // pred_check
    _
  $region11: #{decoder_forward.21} parent=0 // pred_check_branch
    %13 = sbr.rel (0) target = $region13
  $region12: #{decoder_forward.21} parent=0 // pred_region
    _
  $region13: #{decoder_forward.21} parent=0 // pred_fallthru
    _
  %p15 = scmp.eq.s32.totalorder 0, 0
  // Predicated region
  $region14: #{decoder_forward.21} parent=0 // pred_check
    %p16 = pneg %p15
  $region15: #{decoder_forward.21} parent=0 // pred_check_branch
    %18 = sbr.rel (%p16) target = $region17
  $region16: #{decoder_forward.21} parent=0 // pred_region
    %vm19 = vcmask 261120
    %20 = vst.msk [vmem:[#allocation2] sm:$0xff] %vm19, 0.0
    %21 = vst.msk [vmem:[#allocation2 + $0x8] sm:$0xff] %vm19, 0.0
  $region17: #{decoder_forward.21} parent=0 // pred_fallthru
    _
  %v22 = vld [vmem:[#allocation2] sm:$0xff]
  %v23 = vld [vmem:[#allocation2 + $0x8] sm:$0xff]
  %v24 = vld [vmem:[%s0] sm:$0xff]
  %v25 = vld [vmem:[%s0 + $0x8] sm:$0xff]
  %v26 = vpack.c.bf16 %v25, %v24
  %v27 = vld [vmem:[%s1] sm:$0xf]
  %v28 = vld [vmem:[%s1 + $0x4] sm:$0xf]
  %v29 = vld [vmem:[%s1 + $0x8] sm:$0xf]
  %v30 = vld [vmem:[%s1 + $0xc] sm:$0xf]
  %v35 = vunpack.c.l.b16 %v27
  %v36 = vunpack.c.l.b16 %v28
  %v37 = vunpack.c.l.b16 %v29
  %v38 = vunpack.c.l.b16 %v30
  %v39 = vpack.c.b16 %v36, %v35
  %v40 = vpack.c.b16 %v38, %v37
  %vm43 = vcmask 261120
  %v45 = vsel %vm43, %v26, 0
  %47 = vmatprep.subr.bf16.mxu0 0
  %48 = vmatpush1.bf16.msra.mxu0 %v39
  %49 = vmatprep.subr.bf16.mxu0 0
  %50 = vmatpush1.bf16.msra.mxu0 %v40
  %51 = vmatprep.subr.bf16.mxu0 0
  %52 = vmatpush1.bf16.msra.mxu0 0
  %53 = vmatprep.subr.bf16.mxu0 0
  %54 = vmatpush1.bf16.msra.mxu0 0
  %55 = vmatprep.subr.bf16.mxu0 0
  %56 = vmatpush1.bf16.msra.mxu0 0
  %57 = vmatprep.subr.bf16.mxu0 0
  %58 = vmatpush1.bf16.msra.mxu0 0
  %59 = vmatprep.subr.bf16.mxu0 0
  %60 = vmatpush1.bf16.msra.mxu0 0
  %61 = vmatprep.subr.bf16.mxu0 0
  %62 = vmatpush1.bf16.msra.mxu0 0
  %63 = vmatprep.subr.bf16.mxu0 0
  %64 = vmatpush1.bf16.msra.mxu0 0
  %65 = vmatprep.subr.bf16.mxu0 0
  %66 = vmatpush1.bf16.msra.mxu0 0
  %67 = vmatprep.subr.bf16.mxu0 0
  %68 = vmatpush1.bf16.msra.mxu0 0
  %69 = vmatprep.subr.bf16.mxu0 0
  %70 = vmatpush1.bf16.msra.mxu0 0
  %71 = vmatprep.subr.bf16.mxu0 0
  %72 = vmatpush1.bf16.msra.mxu0 0
  %73 = vmatprep.subr.bf16.mxu0 0
  %74 = vmatpush1.bf16.msra.mxu0 0
  %75 = vmatprep.subr.bf16.mxu0 0
  %76 = vmatpush1.bf16.msra.mxu0 0
  %77 = vmatprep.subr.bf16.mxu0 0
  %78 = vmatpush1.bf16.msra.mxu0 0
  %79 = vmatprep.mubr.bf16.mxu0 0
  %80 = vmatmul.mubr.bf16.gmra.mrb[0].mxu0 %v45
  %v81 = vpop.f32.mrb[0].mxu0
  %v82 = vadd.f32 0.0, %v81
  %v83 = vpop.f32.mrb[0].mxu0
  %v84 = vpop.f32.mrb[0].mxu0
  %v85 = vadd.f32 0.0, %v84
  %v86 = vpop.f32.mrb[0].mxu0
  %87 = vdwg.mxu0
  %v88 = vadd.f32 %v22, %v82
  %v89 = vadd.f32 %v23, %v85
  %90 = vst.msk [vmem:[#allocation2] sm:$0xff] %vm43, %v88
  %91 = vst.msk [vmem:[#allocation2 + $0x8] sm:$0xff] %vm43, %v89
  // Predicated region
  $region18: #{decoder_forward.21} parent=0 // pred_check
    %p92 = pneg %p15
  $region19: #{decoder_forward.21} parent=0 // pred_check_branch
    %94 = sbr.rel (%p92) target = $region21
  $region20: #{decoder_forward.21} parent=0 // pred_region
    %v95 = vld [vmem:[#allocation2] sm:$0xff]
    %v96 = vld [vmem:[#allocation2 + $0x8] sm:$0xff]
    %v97 = vld [vmem:[%s2] sm:$0x1]
    %v99 = vlaneseq
    %v100 = vshrl.u32 %v99, 7
    %v101 = vsub.s32 0, %v100
    %v102 = vrot.slane %v97, %v101
    %v104 = vadd.f32 %v95, %v102
    %v105 = vadd.f32 %v96, %v102
    %v106 = vpack.c.bf16 %v105, %v104
    %v108 = vunpack.c.l.b16 %v106
    %v109 = vunpack.c.h.b16 %v106
    %v110 = vpack.c.b16 %v108, %v108
    %v111 = vpack.c.b16 %v109, %v109
    %vm114 = vcmask 257024
    %115 = vst.msk [vmem:[%s3] sm:$0xf] %vm114, %v110
    %116 = vst.msk [vmem:[%s3 + $0x4] sm:$0xf] %vm114, %v111
  $region21: #{decoder_forward.21} parent=0 // pred_fallthru
    _
  // Predicated region
  $region22: #{decoder_forward.21} parent=0 // pred_check
    _
  $region23: #{decoder_forward.21} parent=0 // pred_check_branch
    %118 = sbr.rel (0) target = $region25
  $region24: #{decoder_forward.21} parent=0 // pred_region
    _
  $region25: #{decoder_forward.21} parent=0 // pred_fallthru
    _
  // Predicated region
  $region26: #{decoder_forward.21} parent=0 // pred_check
    _
  $region27: #{decoder_forward.21} parent=0 // pred_check_branch
    %120 = sbr.rel (0) target = $region29
  $region28: #{decoder_forward.21} parent=0 // pred_region
    _
  $region29: #{decoder_forward.21} parent=0 // pred_fallthru
    _

// kernel: decoder_forward.17
$region0: #{decoder_forward.17}
  #allocation0 [shape = 'u32[]', space=smem, size = 0x4, offset = 0x4, fixed_abs, tag = 'smem constant byte address 0x4 - core index']
  #allocation1 [shape = 'u32[144,128]{1,0:T(1,128)}', space=vmem, size = 0x12000, scoped, tag = 'internal scratch']
  #allocation2 [shape = 'f32[16,96]{1,0:T(8,128)}', space=vmem, size = 0x2000, scoped, tag = 'scratch operand']
  %s0 = inlined_call_operand.vmem [shape: f32[16,32], index: 0, kind: input, shape index: {}]
  %s1 = inlined_call_operand.vmem [shape: bf16[32,96], index: 1, kind: input, shape index: {}]
  %s2 = inlined_call_operand.vmem [shape: f32[1,96], index: 2, kind: input, shape index: {}]
  %s3 = inlined_call_operand.vmem [shape: bf16[16,96], index: 3, kind: output, shape index: {}]
  %s4 = sld [smem:[#allocation0]]
  $region30: #{decoder_forward.17} parent=0
    _
  %s6 = ssub.s32 1, %s4
  %s7 = scalar_select 0, %s6, %s4
  // Predicated region
  $region2: #{decoder_forward.17} parent=0 // pred_check
    _
  $region3: #{decoder_forward.17} parent=0 // pred_check_branch
    %9 = sbr.rel (0) target = $region5
  $region4: #{decoder_forward.17} parent=0 // pred_region
    _
  $region5: #{decoder_forward.17} parent=0 // pred_fallthru
    _
  // Predicated region
  $region6: #{decoder_forward.17} parent=0 // pred_check
    _
  $region7: #{decoder_forward.17} parent=0 // pred_check_branch
    %11 = sbr.rel (0) target = $region9
  $region8: #{decoder_forward.17} parent=0 // pred_region
    _
  $region9: #{decoder_forward.17} parent=0 // pred_fallthru
    _
  // Predicated region
  $region10: #{decoder_forward.17} parent=0 // pred_check
    _
  $region11: #{decoder_forward.17} parent=0 // pred_check_branch
    %13 = sbr.rel (0) target = $region13
  $region12: #{decoder_forward.17} parent=0 // pred_region
    _
  $region13: #{decoder_forward.17} parent=0 // pred_fallthru
    _
  %p15 = scmp.eq.s32.totalorder 0, 0
  // Predicated region
  $region14: #{decoder_forward.17} parent=0 // pred_check
    %p16 = pneg %p15
  $region15: #{decoder_forward.17} parent=0 // pred_check_branch
    %18 = sbr.rel (%p16) target = $region17
  $region16: #{decoder_forward.17} parent=0 // pred_region
    %vm19 = vcmask 785408
    %20 = vst.msk [vmem:[#allocation2] sm:$0xff] %vm19, 0.0
    %21 = vst.msk [vmem:[#allocation2 + $0x8] sm:$0xff] %vm19, 0.0
  $region17: #{decoder_forward.17} parent=0 // pred_fallthru
    _
  %v22 = vld [vmem:[#allocation2] sm:$0xff]
  %v23 = vld [vmem:[#allocation2 + $0x8] sm:$0xff]
  %v24 = vld [vmem:[%s0] sm:$0xff]
  %v25 = vld [vmem:[%s0 + $0x8] sm:$0xff]
  %v26 = vpack.c.bf16 %v25, %v24
  %v27 = vld [vmem:[%s1] sm:$0xf]
  %v28 = vld [vmem:[%s1 + $0x4] sm:$0xf]
  %v29 = vld [vmem:[%s1 + $0x8] sm:$0xf]
  %v30 = vld [vmem:[%s1 + $0xc] sm:$0xf]
  %v35 = vunpack.c.l.b16 %v27
  %v36 = vunpack.c.l.b16 %v28
  %v37 = vunpack.c.l.b16 %v29
  %v38 = vunpack.c.l.b16 %v30
  %v39 = vpack.c.b16 %v36, %v35
  %v40 = vpack.c.b16 %v38, %v37
  %vm43 = vcmask 261120
  %v45 = vsel %vm43, %v26, 0
  %47 = vmatprep.subr.bf16.mxu0 0
  %48 = vmatpush1.bf16.msra.mxu0 %v39
  %49 = vmatprep.subr.bf16.mxu0 0
  %50 = vmatpush1.bf16.msra.mxu0 %v40
  %51 = vmatprep.subr.bf16.mxu0 0
  %52 = vmatpush1.bf16.msra.mxu0 0
  %53 = vmatprep.subr.bf16.mxu0 0
  %54 = vmatpush1.bf16.msra.mxu0 0
  %55 = vmatprep.subr.bf16.mxu0 0
  %56 = vmatpush1.bf16.msra.mxu0 0
  %57 = vmatprep.subr.bf16.mxu0 0
  %58 = vmatpush1.bf16.msra.mxu0 0
  %59 = vmatprep.subr.bf16.mxu0 0
  %60 = vmatpush1.bf16.msra.mxu0 0
  %61 = vmatprep.subr.bf16.mxu0 0
  %62 = vmatpush1.bf16.msra.mxu0 0
  %63 = vmatprep.subr.bf16.mxu0 0
  %64 = vmatpush1.bf16.msra.mxu0 0
  %65 = vmatprep.subr.bf16.mxu0 0
  %66 = vmatpush1.bf16.msra.mxu0 0
  %67 = vmatprep.subr.bf16.mxu0 0
  %68 = vmatpush1.bf16.msra.mxu0 0
  %69 = vmatprep.subr.bf16.mxu0 0
  %70 = vmatpush1.bf16.msra.mxu0 0
  %71 = vmatprep.subr.bf16.mxu0 0
  %72 = vmatpush1.bf16.msra.mxu0 0
  %73 = vmatprep.subr.bf16.mxu0 0
  %74 = vmatpush1.bf16.msra.mxu0 0
  %75 = vmatprep.subr.bf16.mxu0 0
  %76 = vmatpush1.bf16.msra.mxu0 0
  %77 = vmatprep.subr.bf16.mxu0 0
  %78 = vmatpush1.bf16.msra.mxu0 0
  %79 = vmatprep.mubr.bf16.mxu0 0
  %80 = vmatmul.mubr.bf16.gmra.mrb[0].mxu0 %v45
  %v81 = vpop.f32.mrb[0].mxu0
  %v82 = vadd.f32 0.0, %v81
  %v83 = vpop.f32.mrb[0].mxu0
  %v84 = vpop.f32.mrb[0].mxu0
  %v85 = vadd.f32 0.0, %v84
  %v86 = vpop.f32.mrb[0].mxu0
  %87 = vdwg.mxu0
  %v88 = vadd.f32 %v22, %v82
  %v89 = vadd.f32 %v23, %v85
  %vm90 = vcmask 785408
  %91 = vst.msk [vmem:[#allocation2] sm:$0xff] %vm90, %v88
  %92 = vst.msk [vmem:[#allocation2 + $0x8] sm:$0xff] %vm90, %v89
  // Predicated region
  $region18: #{decoder_forward.17} parent=0 // pred_check
    %p93 = pneg %p15
  $region19: #{decoder_forward.17} parent=0 // pred_check_branch
    %95 = sbr.rel (%p93) target = $region21
  $region20: #{decoder_forward.17} parent=0 // pred_region
    %v96 = vld [vmem:[#allocation2] sm:$0xff]
    %v97 = vld [vmem:[#allocation2 + $0x8] sm:$0xff]
    %v98 = vld [vmem:[%s2] sm:$0x1]
    %v100 = vlaneseq
    %v101 = vshrl.u32 %v100, 7
    %v102 = vsub.s32 0, %v101
    %v103 = vrot.slane %v98, %v102
    %v105 = vadd.f32 %v96, %v103
    %v106 = vadd.f32 %v97, %v103
    %v107 = vpack.c.bf16 %v106, %v105
    %v109 = vunpack.c.l.b16 %v107
    %v110 = vunpack.c.h.b16 %v107
    %v111 = vpack.c.b16 %v109, %v109
    %v112 = vpack.c.b16 %v110, %v110
    %vm115 = vcmask 781312
    %116 = vst.msk [vmem:[%s3] sm:$0xf] %vm115, %v111
    %117 = vst.msk [vmem:[%s3 + $0x4] sm:$0xf] %vm115, %v112
  $region21: #{decoder_forward.17} parent=0 // pred_fallthru
    _
  // Predicated region
  $region22: #{decoder_forward.17} parent=0 // pred_check
    _
  $region23: #{decoder_forward.17} parent=0 // pred_check_branch
    %119 = sbr.rel (0) target = $region25
  $region24: #{decoder_forward.17} parent=0 // pred_region
    _
  $region25: #{decoder_forward.17} parent=0 // pred_fallthru
    _
  // Predicated region
  $region26: #{decoder_forward.17} parent=0 // pred_check
    _
  $region27: #{decoder_forward.17} parent=0 // pred_check_branch
    %121 = sbr.rel (0) target = $region29
  $region28: #{decoder_forward.17} parent=0 // pred_region
    _
  $region29: #{decoder_forward.17} parent=0 // pred_fallthru
    _

// kernel: decoder_forward.19
$region0: #{decoder_forward.19}
  #allocation0 [shape = 'u32[]', space=smem, size = 0x4, offset = 0x4, fixed_abs, tag = 'smem constant byte address 0x4 - core index']
  #allocation1 [shape = 'u32[144,128]{1,0:T(1,128)}', space=vmem, size = 0x12000, scoped, tag = 'internal scratch']
  #allocation2 [shape = 'f32[16,32]{1,0:T(8,128)}', space=vmem, size = 0x2000, scoped, tag = 'scratch operand']
  %s0 = inlined_call_operand.vmem [shape: bf16[16,32], index: 0, kind: input, shape index: {}]
  %s1 = inlined_call_operand.vmem [shape: bf16[32,32], index: 1, kind: input, shape index: {}]
  %s2 = inlined_call_operand.vmem [shape: f32[1,32], index: 2, kind: input, shape index: {}]
  %s3 = inlined_call_operand.vmem [shape: f32[16,32], index: 3, kind: input, shape index: {}]
  %s4 = inlined_call_operand.vmem [shape: f32[1,32], index: 4, kind: input, shape index: {}]
  %s5 = inlined_call_operand.vmem [shape: f32[1,32], index: 5, kind: input, shape index: {}]
  %s6 = inlined_call_operand.vmem [shape: f32[16,32], index: 6, kind: output, shape index: {}]
  %s7 = sld [smem:[#allocation0]]
  $region42: #{decoder_forward.19} parent=0
    _
  %s9 = ssub.s32 1, %s7
  %s10 = scalar_select 0, %s9, %s7
  // Predicated region
  $region2: #{decoder_forward.19} parent=0 // pred_check
    _
  $region3: #{decoder_forward.19} parent=0 // pred_check_branch
    %12 = sbr.rel (0) target = $region5
  $region4: #{decoder_forward.19} parent=0 // pred_region
    _
  $region5: #{decoder_forward.19} parent=0 // pred_fallthru
    _
  // Predicated region
  $region6: #{decoder_forward.19} parent=0 // pred_check
    _
  $region7: #{decoder_forward.19} parent=0 // pred_check_branch
    %14 = sbr.rel (0) target = $region9
  $region8: #{decoder_forward.19} parent=0 // pred_region
    _
  $region9: #{decoder_forward.19} parent=0 // pred_fallthru
    _
  // Predicated region
  $region10: #{decoder_forward.19} parent=0 // pred_check
    _
  $region11: #{decoder_forward.19} parent=0 // pred_check_branch
    %16 = sbr.rel (0) target = $region13
  $region12: #{decoder_forward.19} parent=0 // pred_region
    _
  $region13: #{decoder_forward.19} parent=0 // pred_fallthru
    _
  // Predicated region
  $region14: #{decoder_forward.19} parent=0 // pred_check
    _
  $region15: #{decoder_forward.19} parent=0 // pred_check_branch
    %18 = sbr.rel (0) target = $region17
  $region16: #{decoder_forward.19} parent=0 // pred_region
    _
  $region17: #{decoder_forward.19} parent=0 // pred_fallthru
    _
  // Predicated region
  $region18: #{decoder_forward.19} parent=0 // pred_check
    _
  $region19: #{decoder_forward.19} parent=0 // pred_check_branch
    %20 = sbr.rel (0) target = $region21
  $region20: #{decoder_forward.19} parent=0 // pred_region
    _
  $region21: #{decoder_forward.19} parent=0 // pred_fallthru
    _
  // Predicated region
  $region22: #{decoder_forward.19} parent=0 // pred_check
    _
  $region23: #{decoder_forward.19} parent=0 // pred_check_branch
    %22 = sbr.rel (0) target = $region25
  $region24: #{decoder_forward.19} parent=0 // pred_region
    _
  $region25: #{decoder_forward.19} parent=0 // pred_fallthru
    _
  %p24 = scmp.eq.s32.totalorder 0, 0
  // Predicated region
  $region26: #{decoder_forward.19} parent=0 // pred_check
    %p25 = pneg %p24
  $region27: #{decoder_forward.19} parent=0 // pred_check_branch
    %27 = sbr.rel (%p25) target = $region29
  $region28: #{decoder_forward.19} parent=0 // pred_region
    %vm28 = vcmask 261120
    %29 = vst.msk [vmem:[#allocation2] sm:$0xff] %vm28, 0.0
    %30 = vst.msk [vmem:[#allocation2 + $0x8] sm:$0xff] %vm28, 0.0
  $region29: #{decoder_forward.19} parent=0 // pred_fallthru
    _
  %v31 = vld [vmem:[#allocation2] sm:$0xff]
  %v32 = vld [vmem:[#allocation2 + $0x8] sm:$0xff]
  %v33 = vld [vmem:[%s0] sm:$0xf]
  %v34 = vld [vmem:[%s0 + $0x4] sm:$0xf]
  %v35 = vld [vmem:[%s1] sm:$0xf]
  %v36 = vld [vmem:[%s1 + $0x4] sm:$0xf]
  %v37 = vld [vmem:[%s1 + $0x8] sm:$0xf]
  %v38 = vld [vmem:[%s1 + $0xc] sm:$0xf]
  %v41 = vunpack.c.l.b16 %v33
  %v42 = vunpack.c.l.b16 %v34
  %v43 = vpack.c.b16 %v42, %v41
  %v48 = vunpack.c.l.b16 %v35
  %v49 = vunpack.c.l.b16 %v36
  %v50 = vunpack.c.l.b16 %v37
  %v51 = vunpack.c.l.b16 %v38
  %v52 = vpack.c.b16 %v49, %v48
  %v53 = vpack.c.b16 %v51, %v50
  %vm56 = vcmask 261120
  %v58 = vsel %vm56, %v43, 0
  %60 = vmatprep.subr.bf16.mxu0 0
  %61 = vmatpush1.bf16.msra.mxu0 %v52
  %62 = vmatprep.subr.bf16.mxu0 0
  %63 = vmatpush1.bf16.msra.mxu0 %v53
  %64 = vmatprep.subr.bf16.mxu0 0
  %65 = vmatpush1.bf16.msra.mxu0 0
  %66 = vmatprep.subr.bf16.mxu0 0
  %67 = vmatpush1.bf16.msra.mxu0 0
  %68 = vmatprep.subr.bf16.mxu0 0
  %69 = vmatpush1.bf16.msra.mxu0 0
  %70 = vmatprep.subr.bf16.mxu0 0
  %71 = vmatpush1.bf16.msra.mxu0 0
  %72 = vmatprep.subr.bf16.mxu0 0
  %73 = vmatpush1.bf16.msra.mxu0 0
  %74 = vmatprep.subr.bf16.mxu0 0
  %75 = vmatpush1.bf16.msra.mxu0 0
  %76 = vmatprep.subr.bf16.mxu0 0
  %77 = vmatpush1.bf16.msra.mxu0 0
  %78 = vmatprep.subr.bf16.mxu0 0
  %79 = vmatpush1.bf16.msra.mxu0 0
  %80 = vmatprep.subr.bf16.mxu0 0
  %81 = vmatpush1.bf16.msra.mxu0 0
  %82 = vmatprep.subr.bf16.mxu0 0
  %83 = vmatpush1.bf16.msra.mxu0 0
  %84 = vmatprep.subr.bf16.mxu0 0
  %85 = vmatpush1.bf16.msra.mxu0 0
  %86 = vmatprep.subr.bf16.mxu0 0
  %87 = vmatpush1.bf16.msra.mxu0 0
  %88 = vmatprep.subr.bf16.mxu0 0
  %89 = vmatpush1.bf16.msra.mxu0 0
  %90 = vmatprep.subr.bf16.mxu0 0
  %91 = vmatpush1.bf16.msra.mxu0 0
  %92 = vmatprep.mubr.bf16.mxu0 0
  %93 = vmatmul.mubr.bf16.gmra.mrb[0].mxu0 %v58
  %v94 = vpop.f32.mrb[0].mxu0
  %v95 = vadd.f32 0.0, %v94
  %v96 = vpop.f32.mrb[0].mxu0
  %v97 = vpop.f32.mrb[0].mxu0
  %v98 = vadd.f32 0.0, %v97
  %v99 = vpop.f32.mrb[0].mxu0
  %100 = vdwg.mxu0
  %v101 = vadd.f32 %v31, %v95
  %v102 = vadd.f32 %v32, %v98
  %103 = vst.msk [vmem:[#allocation2] sm:$0xff] %vm56, %v101
  %104 = vst.msk [vmem:[#allocation2 + $0x8] sm:$0xff] %vm56, %v102
  // Predicated region
  $region30: #{decoder_forward.19} parent=0 // pred_check
    %p105 = pneg %p24
  $region31: #{decoder_forward.19} parent=0 // pred_check_branch
    %107 = sbr.rel (%p105) target = $region33
  $region32: #{decoder_forward.19} parent=0 // pred_region
    %v108 = vld [vmem:[#allocation2] sm:$0xff]
    %v109 = vld [vmem:[#allocation2 + $0x8] sm:$0xff]
    %v110 = vld [vmem:[%s2] sm:$0x1]
    %v112 = vlaneseq
    %v113 = vshrl.u32 %v112, 7
    %v114 = vsub.s32 0, %v113
    %v115 = vrot.slane %v110, %v114
    %v117 = vadd.f32 %v108, %v115
    %v118 = vadd.f32 %v109, %v115
    %v119 = vld [vmem:[%s3] sm:$0xff]
    %v120 = vld [vmem:[%s3 + $0x8] sm:$0xff]
    %v121 = vadd.f32 %v117, %v119
    %v122 = vadd.f32 %v118, %v120
    %v123 = vsel %vm56, %v121, 0.0
    %124 = vadd.xlane.f32.xlu0 %v123
    %v125 = vpop.xlane.xlu0 %124
    %v126 = vsel %vm56, %v122, 0.0
    %127 = vadd.xlane.f32.xlu0 %v126
    %v128 = vpop.xlane.xlu0 %127
    %v129 = vrcp.pop 32.0
    %v130 = vmul.f32 %v125, %v129
    %v131 = vmul.f32 %v128, %v129
    %v132 = vsub.f32 %v121, %v130
    %v133 = vsub.f32 %v122, %v131
    %v134 = vmul.f32 %v132, %v132
    %v135 = vmul.f32 %v133, %v133
    %v136 = vsel %vm56, %v134, 0.0
    %137 = vadd.xlane.f32.xlu0 %v136
    %v138 = vpop.xlane.xlu0 %137
    %v139 = vsel %vm56, %v135, 0.0
    %140 = vadd.xlane.f32.xlu0 %v139
    %v141 = vpop.xlane.xlu0 %140
    %v142 = vmul.f32 %v138, %v129
    %v143 = vmul.f32 %v141, %v129
    %v144 = vadd.f32 %v142, 1e-05
    %v145 = vadd.f32 %v143, 1e-05
    %v146 = vrsqrt.pop %v144
    %v147 = vrsqrt.pop %v145
    %v148 = vmul.f32 %v132, %v146
    %v149 = vmul.f32 %v133, %v147
    %v150 = vld [vmem:[%s4] sm:$0x1]
    %v152 = vlaneseq
    %v153 = vshrl.u32 %v152, 7
    %v154 = vsub.s32 0, %v153
    %v155 = vrot.slane %v150, %v154
    %v157 = vmul.f32 %v148, %v155
    %v158 = vmul.f32 %v149, %v155
    %v159 = vld [vmem:[%s5] sm:$0x1]
    %v161 = vlaneseq
    %v162 = vshrl.u32 %v161, 7
    %v163 = vsub.s32 0, %v162
    %v164 = vrot.slane %v159, %v163
    %v166 = vadd.f32 %v157, %v164
    %v167 = vadd.f32 %v158, %v164
    %168 = vst.msk [vmem:[%s6] sm:$0xff] %vm56, %v166
    %169 = vst.msk [vmem:[%s6 + $0x8] sm:$0xff] %vm56, %v167
  $region33: #{decoder_forward.19} parent=0 // pred_fallthru
    _
  // Predicated region
  $region34: #{decoder_forward.19} parent=0 // pred_check
    _
  $region35: #{decoder_forward.19} parent=0 // pred_check_branch
    %171 = sbr.rel (0) target = $region37
  $region36: #{decoder_forward.19} parent=0 // pred_region
    _
  $region37: #{decoder_forward.19} parent=0 // pred_fallthru
    _
  // Predicated region
  $region38: #{decoder_forward.19} parent=0 // pred_check
    _
  $region39: #{decoder_forward.19} parent=0 // pred_check_branch
    %173 = sbr.rel (0) target = $region41
  $region40: #{decoder_forward.19} parent=0 // pred_region
    _
  $region41: #{decoder_forward.19} parent=0 // pred_fallthru
    _

// kernel: decoder_forward.18
$region0: #{decoder_forward.18}
  #allocation0 [shape = 'u32[]', space=smem, size = 0x4, offset = 0x4, fixed_abs, tag = 'smem constant byte address 0x4 - core index']
  #allocation1 [shape = 'u32[144,128]{1,0:T(1,128)}', space=vmem, size = 0x12000, scoped, tag = 'internal scratch']
  %s0 = inlined_call_operand.vmem [shape: bf16[2,8,32], index: 0, kind: input, shape index: {}]
  %s1 = inlined_call_operand.vmem [shape: bf16[2,8,32], index: 1, kind: input, shape index: {}]
  %s2 = inlined_call_operand.vmem [shape: bf16[2,8,32], index: 2, kind: input, shape index: {}]
  %s3 = inlined_call_operand.vmem [shape: s32[2,1,8,8], index: 3, kind: input, shape index: {}]
  %s4 = inlined_call_operand.vmem [shape: bf16[2,8,32], index: 4, kind: output, shape index: {}]
  %s5 = sld [smem:[#allocation0]]
  $region49: #{decoder_forward.18} parent=0
    _
  %s7 = ssub.s32 1, %s5
  %s8 = scalar_select 0, %s7, %s5
  loop: start=0, step=1, limit=4
  $region2: #{decoder_forward.18} parent=0 // loop_pre_header
    _
  $region3: #{decoder_forward.18} parent=0 // loop_header
    %s10 = sphi 0, %s14
    %p11 = scmp.ge.s32.totalorder %s10, 4
    %s20 = sphi 0, %s22
    %s23 = sphi 0, %s20
    %s24 = sphi 0, %s23
    %s40 = sphi 0, %s24
    %s46 = sphi 0, %s48
    %s49 = sphi 0, %s46
    %s50 = sphi 0, %s49
    %s66 = sphi 0, %s50
    %s72 = sphi 0, %s74
    %s75 = sphi 0, %s72
    %s76 = sphi 0, %s75
    %s92 = sphi 0, %s76
    %s98 = sphi 0, %s100
    %s101 = sphi 0, %s98
    %s102 = sphi 0, %s101
    %s118 = sphi 0, %s102
    %s124 = sphi 0, %s126
    %s127 = sphi 0, %s124
    %s128 = sphi 0, %s127
    %s144 = sphi 0, %s128
  $region4: #{decoder_forward.18} parent=0 // loop_header_branch
    %13 = sbr.rel (%p11) target = $region8
  $region5: #{decoder_forward.18} parent=0 // loop_body
    %s15 = ssub.s32 %s10, 1
    %s16 = ssub.s32 %s10, 2
    %s17 = sadd.s32 %s10, 1
    %s18 = ssub.s32 %s10, %s17
    %p19 = scmp.eq.s32.totalorder %s18, 0
    %s21 = sadd.s32 %s20, 1
    %s22 = scalar_select %p19, %s20, %s21
    %p25 = pneg %p19
    %p26 = scmp.eq.s32.totalorder %s10, 1
    %p27 = por %p25, %p26
    %p28 = scmp.ne.s32.totalorder %s20, %s23
    %p29 = scmp.eq.s32.totalorder %s10, 0
    %p30 = por %p28, %p29
    %p31 = scmp.ne.s32.totalorder %s20, %s23
    %p32 = scmp.eq.s32.totalorder %s15, 1
    %p33 = por %p31, %p32
    %p34 = scmp.ne.s32.totalorder %s23, %s24
    %p35 = scmp.eq.s32.totalorder %s15, 0
    %p36 = por %p34, %p35
    %p37 = scmp.ne.s32.totalorder %s23, %s24
    %p38 = scmp.eq.s32.totalorder %s16, 1
    %p39 = por %p37, %p38
    %p41 = scmp.ne.s32.totalorder %s24, %s40
    %p42 = scmp.eq.s32.totalorder %s16, 0
    %p43 = por %p41, %p42
    %s44 = ssub.s32 %s10, %s17
    %p45 = scmp.eq.s32.totalorder %s44, 0
    %s47 = sadd.s32 %s46, 1
    %s48 = scalar_select %p45, %s46, %s47
    %p51 = pneg %p45
    %p52 = scmp.eq.s32.totalorder %s10, 1
    %p53 = por %p51, %p52
    %p54 = scmp.ne.s32.totalorder %s46, %s49
    %p55 = scmp.eq.s32.totalorder %s10, 0
    %p56 = por %p54, %p55
    %p57 = scmp.ne.s32.totalorder %s46, %s49
    %p58 = scmp.eq.s32.totalorder %s15, 1
    %p59 = por %p57, %p58
    %p60 = scmp.ne.s32.totalorder %s49, %s50
    %p61 = scmp.eq.s32.totalorder %s15, 0
    %p62 = por %p60, %p61
    %p63 = scmp.ne.s32.totalorder %s49, %s50
    %p64 = scmp.eq.s32.totalorder %s16, 1
    %p65 = por %p63, %p64
    %p67 = scmp.ne.s32.totalorder %s50, %s66
    %p68 = scmp.eq.s32.totalorder %s16, 0
    %p69 = por %p67, %p68
    %s70 = ssub.s32 %s10, %s17
    %p71 = scmp.eq.s32.totalorder %s70, 0
    %s73 = sadd.s32 %s72, 1
    %s74 = scalar_select %p71, %s72, %s73
    %p77 = pneg %p71
    %p78 = scmp.eq.s32.totalorder %s10, 1
    %p79 = por %p77, %p78
    %p80 = scmp.ne.s32.totalorder %s72, %s75
    %p81 = scmp.eq.s32.totalorder %s10, 0
    %p82 = por %p80, %p81
    %p83 = scmp.ne.s32.totalorder %s72, %s75
    %p84 = scmp.eq.s32.totalorder %s15, 1
    %p85 = por %p83, %p84
    %p86 = scmp.ne.s32.totalorder %s75, %s76
    %p87 = scmp.eq.s32.totalorder %s15, 0
    %p88 = por %p86, %p87
    %p89 = scmp.ne.s32.totalorder %s75, %s76
    %p90 = scmp.eq.s32.totalorder %s16, 1
    %p91 = por %p89, %p90
    %p93 = scmp.ne.s32.totalorder %s76, %s92
    %p94 = scmp.eq.s32.totalorder %s16, 0
    %p95 = por %p93, %p94
    %s96 = ssub.s32 %s10, %s17
    %p97 = scmp.eq.s32.totalorder %s96, 0
    %s99 = sadd.s32 %s98, 1
    %s100 = scalar_select %p97, %s98, %s99
    %p103 = pneg %p97
    %p104 = scmp.eq.s32.totalorder %s10, 1
    %p105 = por %p103, %p104
    %p106 = scmp.ne.s32.totalorder %s98, %s101
    %p107 = scmp.eq.s32.totalorder %s10, 0
    %p108 = por %p106, %p107
    %p109 = scmp.ne.s32.totalorder %s98, %s101
    %p110 = scmp.eq.s32.totalorder %s15, 1
    %p111 = por %p109, %p110
    %p112 = scmp.ne.s32.totalorder %s101, %s102
    %p113 = scmp.eq.s32.totalorder %s15, 0
    %p114 = por %p112, %p113
    %p115 = scmp.ne.s32.totalorder %s101, %s102
    %p116 = scmp.eq.s32.totalorder %s16, 1
    %p117 = por %p115, %p116
    %p119 = scmp.ne.s32.totalorder %s102, %s118
    %p120 = scmp.eq.s32.totalorder %s16, 0
    %p121 = por %p119, %p120
    %s122 = ssub.s32 %s10, %s17
    %p123 = scmp.eq.s32.totalorder %s122, 0
    %s125 = sadd.s32 %s124, 1
    %s126 = scalar_select %p123, %s124, %s125
    %p129 = pneg %p123
    %p130 = scmp.eq.s32.totalorder %s10, 1
    %p131 = por %p129, %p130
    %p132 = scmp.ne.s32.totalorder %s124, %s127
    %p133 = scmp.eq.s32.totalorder %s10, 0
    %p134 = por %p132, %p133
    %p135 = scmp.ne.s32.totalorder %s124, %s127
    %p136 = scmp.eq.s32.totalorder %s15, 1
    %p137 = por %p135, %p136
    %p138 = scmp.ne.s32.totalorder %s127, %s128
    %p139 = scmp.eq.s32.totalorder %s15, 0
    %p140 = por %p138, %p139
    %p141 = scmp.ne.s32.totalorder %s127, %s128
    %p142 = scmp.eq.s32.totalorder %s16, 1
    %p143 = por %p141, %p142
    %p145 = scmp.ne.s32.totalorder %s128, %s144
    %p146 = scmp.eq.s32.totalorder %s16, 0
    %p147 = por %p145, %p146
    %p148 = scmp.le.s32.totalorder 1, %s10
    %p149 = scmp.lt.s32.totalorder %s10, 3
    %p150 = pnand %p148, %p149
    %p151 = pneg %p150
    // Predicated region
    $region9: #{decoder_forward.18} parent=5 // pred_check
      _
    $region10: #{decoder_forward.18} parent=5 // pred_check_branch
      %153 = sbr.rel (%p150) target = $region12
    $region11: #{decoder_forward.18} parent=5 // pred_region
      %s154 = ssub.s32 %s10, 1
    $region12: #{decoder_forward.18} parent=5 // pred_fallthru
      _
    %p155 = scmp.lt.s32.totalorder %s10, 2
    // Predicated region
    $region13: #{decoder_forward.18} parent=5 // pred_check
      %p156 = pneg %p155
    $region14: #{decoder_forward.18} parent=5 // pred_check_branch
      %158 = sbr.rel (%p156) target = $region16
    $region15: #{decoder_forward.18} parent=5 // pred_region
      // Predicated region
      $region17: #{decoder_forward.18} parent=15 // pred_check
        %p159 = pneg %p30
      $region18: #{decoder_forward.18} parent=15 // pred_check_branch
        %161 = sbr.rel (%p159) target = $region20
      $region19: #{decoder_forward.18} parent=15 // pred_region
        %p162 = scmp.lt.s32.totalorder %s10, 1
        %s163 = scalar_select %p162, %s10, 1
        %s164 = smul.addr %s163, 4
        %s165 = scalar_lea.vmem %s0, %s164
      $region20: #{decoder_forward.18} parent=15 // pred_fallthru
        _
      // Predicated region
      $region21: #{decoder_forward.18} parent=15 // pred_check
        %p166 = pneg %p56
      $region22: #{decoder_forward.18} parent=15 // pred_check_branch
        %168 = sbr.rel (%p166) target = $region24
      $region23: #{decoder_forward.18} parent=15 // pred_region
        %p169 = scmp.lt.s32.totalorder %s10, 1
        %s170 = scalar_select %p169, %s10, 1
        %s171 = smul.addr %s170, 4
        %s172 = scalar_lea.vmem %s1, %s171
      $region24: #{decoder_forward.18} parent=15 // pred_fallthru
        _
      // Predicated region
      $region25: #{decoder_forward.18} parent=15 // pred_check
        %p173 = pneg %p82
      $region26: #{decoder_forward.18} parent=15 // pred_check_branch
        %175 = sbr.rel (%p173) target = $region28
      $region27: #{decoder_forward.18} parent=15 // pred_region
        %p176 = scmp.lt.s32.totalorder %s10, 1
        %s177 = scalar_select %p176, %s10, 1
        %s178 = smul.addr %s177, 4
        %s179 = scalar_lea.vmem %s2, %s178
      $region28: #{decoder_forward.18} parent=15 // pred_fallthru
        _
      // Predicated region
      $region29: #{decoder_forward.18} parent=15 // pred_check
        %p180 = pneg %p108
      $region30: #{decoder_forward.18} parent=15 // pred_check_branch
        %182 = sbr.rel (%p180) target = $region32
      $region31: #{decoder_forward.18} parent=15 // pred_region
        %p183 = scmp.lt.s32.totalorder %s10, 1
        %s184 = scalar_select %p183, %s10, 1
        %s185 = smul.addr %s184, 8
        %s186 = scalar_lea.vmem %s3, %s185
      $region32: #{decoder_forward.18} parent=15 // pred_fallthru
        _
    $region16: #{decoder_forward.18} parent=5 // pred_fallthru
      _
    %p187 = scmp.le.s32.totalorder 1, %s10
    %p188 = scmp.lt.s32.totalorder %s10, 3
    %p189 = pnand %p187, %p188
    %p190 = pneg %p189
    // Predicated region
    $region33: #{decoder_forward.18} parent=5 // pred_check
      _
    $region34: #{decoder_forward.18} parent=5 // pred_check_branch
      %192 = sbr.rel (%p189) target = $region36
    $region35: #{decoder_forward.18} parent=5 // pred_region
      %s193 = ssub.s32 %s10, 1
      %p194 = scmp.lt.s32.totalorder %s15, 1
      %s195 = scalar_select %p194, %s15, 1
      %s196 = smul.addr %s195, 4
      %s197 = scalar_lea.vmem %s0, %s196
      %p198 = pneg %p36
      %p199 = pneg %p33
      %p200 = scmp.lt.s32.totalorder %s15, 1
      %s201 = scalar_select %p200, %s15, 1
      %s202 = smul.addr %s201, 4
      %s203 = scalar_lea.vmem %s1, %s202
      %p204 = pneg %p62
      %p205 = pneg %p59
      %p206 = scmp.lt.s32.totalorder %s15, 1
      %s207 = scalar_select %p206, %s15, 1
      %s208 = smul.addr %s207, 4
      %s209 = scalar_lea.vmem %s2, %s208
      %p210 = pneg %p88
      %p211 = pneg %p85
      %p212 = scmp.lt.s32.totalorder %s15, 1
      %s213 = scalar_select %p212, %s15, 1
      %s214 = smul.addr %s213, 8
      %s215 = scalar_lea.vmem %s3, %s214
      %p216 = pneg %p114
      %p217 = pneg %p111
      %p218 = pneg %p140
      %p219 = pneg %p137
      %p220 = scmp.lt.s32.totalorder %s15, 1
      %s221 = scalar_select %p220, %s15, 1
      %s222 = smul.addr %s221, 4
      %s223 = scalar_lea.vmem %s4, %s222
      %p224 = scmp.lt.s32.totalorder %s15, 1
      %s225 = scalar_select %p224, %s15, 1
      %s226 = smul.addr %s225, 4
      %s227 = scalar_lea.vmem %s0, %s226
      %p228 = scmp.lt.s32.totalorder %s15, 1
      %s229 = scalar_select %p228, %s15, 1
      %s230 = smul.addr %s229, 4
      %s231 = scalar_lea.vmem %s1, %s230
      %p232 = scmp.lt.s32.totalorder %s15, 1
      %s233 = scalar_select %p232, %s15, 1
      %s234 = smul.addr %s233, 4
      %s235 = scalar_lea.vmem %s2, %s234
      %p236 = scmp.lt.s32.totalorder %s15, 1
      %s237 = scalar_select %p236, %s15, 1
      %s238 = smul.addr %s237, 8
      %s239 = scalar_lea.vmem %s3, %s238
      %p240 = scmp.lt.s32.totalorder %s15, 1
      %s241 = scalar_select %p240, %s15, 1
      %s242 = smul.addr %s241, 4
      %s243 = scalar_lea.vmem %s4, %s242
      %v245 = vld [vmem:[%s227] sm:$0xf]
      %v246 = vld [vmem:[%s231] sm:$0xf]
      %v247 = vld [vmem:[%s235] sm:$0xf]
      %v248 = vld [vmem:[%s239] sm:$0xff]
      %vm249 = vcmask 64512
      %v251 = vsel %vm249, %v245, 0
      %v254 = vsel %vm249, %v246, 0
      %256 = vmatprep.subr.bf16.mxu0 0
      %257 = vmatpush1.bf16.xpose.msra.mxu0 %v254
      %258 = vmatprep.subr.bf16.mxu0 0
      %259 = vmatpush1.bf16.xpose.msra.mxu0 0
      %260 = vmatprep.subr.bf16.mxu0 0
      %261 = vmatpush1.bf16.xpose.msra.mxu0 0
      %262 = vmatprep.subr.bf16.mxu0 0
      %263 = vmatpush1.bf16.xpose.msra.mxu0 0
      %264 = vmatprep.subr.bf16.mxu0 0
      %265 = vmatpush1.bf16.xpose.msra.mxu0 0
      %266 = vmatprep.subr.bf16.mxu0 0
      %267 = vmatpush1.bf16.xpose.msra.mxu0 0
      %268 = vmatprep.subr.bf16.mxu0 0
      %269 = vmatpush1.bf16.xpose.msra.mxu0 0
      %270 = vmatprep.subr.bf16.mxu0 0
      %271 = vmatpush1.bf16.xpose.msra.mxu0 0
      %272 = vmatprep.subr.bf16.mxu0 0
      %273 = vmatpush1.bf16.xpose.msra.mxu0 0
      %274 = vmatprep.subr.bf16.mxu0 0
      %275 = vmatpush1.bf16.xpose.msra.mxu0 0
      %276 = vmatprep.subr.bf16.mxu0 0
      %277 = vmatpush1.bf16.xpose.msra.mxu0 0
      %278 = vmatprep.subr.bf16.mxu0 0
      %279 = vmatpush1.bf16.xpose.msra.mxu0 0
      %280 = vmatprep.subr.bf16.mxu0 0
      %281 = vmatpush1.bf16.xpose.msra.mxu0 0
      %282 = vmatprep.subr.bf16.mxu0 0
      %283 = vmatpush1.bf16.xpose.msra.mxu0 0
      %284 = vmatprep.subr.bf16.mxu0 0
      %285 = vmatpush1.bf16.xpose.msra.mxu0 0
      %286 = vmatprep.subr.bf16.mxu0 0
      %287 = vmatpush1.bf16.xpose.msra.mxu0 0
      %288 = vmatprep.mubr.bf16.mxu0 0
      %289 = vmatmul.mubr.bf16.gmra.mrb[0].mxu0 %v251
      %v290 = vpop.f32.mrb[0].mxu0
      %v291 = vadd.f32 0.0, %v290
      %v292 = vpop.f32.mrb[0].mxu0
      %v293 = vpop.f32.mrb[0].mxu0
      %v294 = vpop.f32.mrb[0].mxu0
      %295 = vdwg.mxu0
      %vm296 = vcmp.eq.s32.totalorder %v248, 0
      %v297 = vsel %vm296, -1e+20, %v291
      %v298 = vmul.f32 %v297, 0.17677669
      %v299 = vsel %vm249, %v298, -inf
      %300 = vmax.xlane.f32.xlu0 %v299
      %v301 = vpop.xlane.xlu0 %300
      %v302 = vsub.f32 %v298, %v301
      %v303 = vmul.f32 %v302, 1.442695
      %v304 = vpow.pop %v303
      %v305 = vsel %vm249, %v304, 0.0
      %306 = vadd.xlane.f32.xlu0 %v305
      %v307 = vpop.xlane.xlu0 %306
      %v308 = vrcp.pop %v307
      %v309 = vmul.f32 %v304, %v308
      %v310 = vpack.c.bf16 %v309, %v309
      %v312 = vsel %vm249, %v310, 0
      %vm314 = vcmask 1043456
      %v316 = vsel %vm314, %v247, 0
      %318 = vmatprep.subr.bf16.mxu0 0
      %319 = vmatpush1.bf16.msra.mxu0 %v316
      %320 = vmatprep.subr.bf16.mxu0 0
      %321 = vmatpush1.bf16.msra.mxu0 0
      %322 = vmatprep.subr.bf16.mxu0 0
      %323 = vmatpush1.bf16.msra.mxu0 0
      %324 = vmatprep.subr.bf16.mxu0 0
      %325 = vmatpush1.bf16.msra.mxu0 0
      %326 = vmatprep.subr.bf16.mxu0 0
      %327 = vmatpush1.bf16.msra.mxu0 0
      %328 = vmatprep.subr.bf16.mxu0 0
      %329 = vmatpush1.bf16.msra.mxu0 0
      %330 = vmatprep.subr.bf16.mxu0 0
      %331 = vmatpush1.bf16.msra.mxu0 0
      %332 = vmatprep.subr.bf16.mxu0 0
      %333 = vmatpush1.bf16.msra.mxu0 0
      %334 = vmatprep.subr.bf16.mxu0 0
      %335 = vmatpush1.bf16.msra.mxu0 0
      %336 = vmatprep.subr.bf16.mxu0 0
      %337 = vmatpush1.bf16.msra.mxu0 0
      %338 = vmatprep.subr.bf16.mxu0 0
      %339 = vmatpush1.bf16.msra.mxu0 0
      %340 = vmatprep.subr.bf16.mxu0 0
      %341 = vmatpush1.bf16.msra.mxu0 0
      %342 = vmatprep.subr.bf16.mxu0 0
      %343 = vmatpush1.bf16.msra.mxu0 0
      %344 = vmatprep.subr.bf16.mxu0 0
      %345 = vmatpush1.bf16.msra.mxu0 0
      %346 = vmatprep.subr.bf16.mxu0 0
      %347 = vmatpush1.bf16.msra.mxu0 0
      %348 = vmatprep.subr.bf16.mxu0 0
      %349 = vmatpush1.bf16.msra.mxu0 0
      %350 = vmatprep.mubr.bf16.mxu0 0
      %351 = vmatmul.mubr.bf16.gmra.mrb[0].mxu0 %v312
      %v352 = vpop.f32.mrb[0].mxu0
      %v353 = vadd.f32 0.0, %v352
      %v354 = vpop.f32.mrb[0].mxu0
      %v355 = vpop.f32.mrb[0].mxu0
      %v356 = vpop.f32.mrb[0].mxu0
      %357 = vdwg.mxu0
      %v359 = vunpack.c.l.b16 %v245
      %v360 = vpack.c.b16 %v359, %v359
      %361 = vrot.lane.b32.xlu0 %v360, 120
      %v362 = vpop.permute.xlu0 %361
      %v364 = vunpack.c.l.b16 %v246
      %v365 = vpack.c.b16 %v364, %v364
      %366 = vrot.lane.b32.xlu0 %v365, 120
      %v367 = vpop.permute.xlu0 %366
      %v369 = vsel %vm249, %v362, 0
      %v372 = vsel %vm249, %v367, 0
      %374 = vmatprep.subr.bf16.mxu0 0
      %375 = vmatpush1.bf16.xpose.msra.mxu0 %v372
      %376 = vmatprep.subr.bf16.mxu0 0
      %377 = vmatpush1.bf16.xpose.msra.mxu0 0
      %378 = vmatprep.subr.bf16.mxu0 0
      %379 = vmatpush1.bf16.xpose.msra.mxu0 0
      %380 = vmatprep.subr.bf16.mxu0 0
      %381 = vmatpush1.bf16.xpose.msra.mxu0 0
      %382 = vmatprep.subr.bf16.mxu0 0
      %383 = vmatpush1.bf16.xpose.msra.mxu0 0
      %384 = vmatprep.subr.bf16.mxu0 0
      %385 = vmatpush1.bf16.xpose.msra.mxu0 0
      %386 = vmatprep.subr.bf16.mxu0 0
      %387 = vmatpush1.bf16.xpose.msra.mxu0 0
      %388 = vmatprep.subr.bf16.mxu0 0
      %389 = vmatpush1.bf16.xpose.msra.mxu0 0
      %390 = vmatprep.subr.bf16.mxu0 0
      %391 = vmatpush1.bf16.xpose.msra.mxu0 0
      %392 = vmatprep.subr.bf16.mxu0 0
      %393 = vmatpush1.bf16.xpose.msra.mxu0 0
      %394 = vmatprep.subr.bf16.mxu0 0
      %395 = vmatpush1.bf16.xpose.msra.mxu0 0
      %396 = vmatprep.subr.bf16.mxu0 0
      %397 = vmatpush1.bf16.xpose.msra.mxu0 0
      %398 = vmatprep.subr.bf16.mxu0 0
      %399 = vmatpush1.bf16.xpose.msra.mxu0 0
      %400 = vmatprep.subr.bf16.mxu0 0
      %401 = vmatpush1.bf16.xpose.msra.mxu0 0
      %402 = vmatprep.subr.bf16.mxu0 0
      %403 = vmatpush1.bf16.xpose.msra.mxu0 0
      %404 = vmatprep.subr.bf16.mxu0 0
      %405 = vmatpush1.bf16.xpose.msra.mxu0 0
      %406 = vmatprep.mubr.bf16.mxu0 0
      %407 = vmatmul.mubr.bf16.gmra.mrb[0].mxu0 %v369
      %v408 = vpop.f32.mrb[0].mxu0
      %v409 = vadd.f32 0.0, %v408
      %v410 = vpop.f32.mrb[0].mxu0
      %v411 = vpop.f32.mrb[0].mxu0
      %v412 = vpop.f32.mrb[0].mxu0
      %413 = vdwg.mxu0
      %v414 = vsel %vm296, -1e+20, %v409
      %v415 = vmul.f32 %v414, 0.17677669
      %v416 = vsel %vm249, %v415, -inf
      %417 = vmax.xlane.f32.xlu0 %v416
      %v418 = vpop.xlane.xlu0 %417
      %v419 = vsub.f32 %v415, %v418
      %v420 = vmul.f32 %v419, 1.442695
      %v421 = vpow.pop %v420
      %v422 = vsel %vm249, %v421, 0.0
      %423 = vadd.xlane.f32.xlu0 %v422
      %v424 = vpop.xlane.xlu0 %423
      %v425 = vrcp.pop %v424
      %v426 = vmul.f32 %v421, %v425
      %v427 = vpack.c.bf16 %v426, %v426
      %v429 = vunpack.c.l.b16 %v247
      %v430 = vpack.c.b16 %v429, %v429
      %431 = vrot.lane.b32.xlu0 %v430, 120
      %v432 = vpop.permute.xlu0 %431
      %v434 = vsel %vm249, %v427, 0
      %v437 = vsel %vm314, %v432, 0
      %439 = vmatprep.subr.bf16.mxu0 0
      %440 = vmatpush1.bf16.msra.mxu0 %v437
      %441 = vmatprep.subr.bf16.mxu0 0
      %442 = vmatpush1.bf16.msra.mxu0 0
      %443 = vmatprep.subr.bf16.mxu0 0
      %444 = vmatpush1.bf16.msra.mxu0 0
      %445 = vmatprep.subr.bf16.mxu0 0
      %446 = vmatpush1.bf16.msra.mxu0 0
      %447 = vmatprep.subr.bf16.mxu0 0
      %448 = vmatpush1.bf16.msra.mxu0 0
      %449 = vmatprep.subr.bf16.mxu0 0
      %450 = vmatpush1.bf16.msra.mxu0 0
      %451 = vmatprep.subr.bf16.mxu0 0
      %452 = vmatpush1.bf16.msra.mxu0 0
      %453 = vmatprep.subr.bf16.mxu0 0
      %454 = vmatpush1.bf16.msra.mxu0 0
      %455 = vmatprep.subr.bf16.mxu0 0
      %456 = vmatpush1.bf16.msra.mxu0 0
      %457 = vmatprep.subr.bf16.mxu0 0
      %458 = vmatpush1.bf16.msra.mxu0 0
      %459 = vmatprep.subr.bf16.mxu0 0
      %460 = vmatpush1.bf16.msra.mxu0 0
      %461 = vmatprep.subr.bf16.mxu0 0
      %462 = vmatpush1.bf16.msra.mxu0 0
      %463 = vmatprep.subr.bf16.mxu0 0
      %464 = vmatpush1.bf16.msra.mxu0 0
      %465 = vmatprep.subr.bf16.mxu0 0
      %466 = vmatpush1.bf16.msra.mxu0 0
      %467 = vmatprep.subr.bf16.mxu0 0
      %468 = vmatpush1.bf16.msra.mxu0 0
      %469 = vmatprep.subr.bf16.mxu0 0
      %470 = vmatpush1.bf16.msra.mxu0 0
      %471 = vmatprep.mubr.bf16.mxu0 0
      %472 = vmatmul.mubr.bf16.gmra.mrb[0].mxu0 %v434
      %v473 = vpop.f32.mrb[0].mxu0
      %v474 = vadd.f32 0.0, %v473
      %v475 = vpop.f32.mrb[0].mxu0
      %v476 = vpop.f32.mrb[0].mxu0
      %v477 = vpop.f32.mrb[0].mxu0
      %478 = vdwg.mxu0
      %479 = vrot.lane.b32.xlu0 %v360, 112
      %v480 = vpop.permute.xlu0 %479
      %481 = vrot.lane.b32.xlu0 %v365, 112
      %v482 = vpop.permute.xlu0 %481
      %v484 = vsel %vm249, %v480, 0
      %v487 = vsel %vm249, %v482, 0
      %489 = vmatprep.subr.bf16.mxu0 0
      %490 = vmatpush1.bf16.xpose.msra.mxu0 %v487
      %491 = vmatprep.subr.bf16.mxu0 0
      %492 = vmatpush1.bf16.xpose.msra.mxu0 0
      %493 = vmatprep.subr.bf16.mxu0 0
      %494 = vmatpush1.bf16.xpose.msra.mxu0 0
      %495 = vmatprep.subr.bf16.mxu0 0
      %496 = vmatpush1.bf16.xpose.msra.mxu0 0
      %497 = vmatprep.subr.bf16.mxu0 0
      %498 = vmatpush1.bf16.xpose.msra.mxu0 0
      %499 = vmatprep.subr.bf16.mxu0 0
      %500 = vmatpush1.bf16.xpose.msra.mxu0 0
      %501 = vmatprep.subr.bf16.mxu0 0
      %502 = vmatpush1.bf16.xpose.msra.mxu0 0
      %503 = vmatprep.subr.bf16.mxu0 0
      %504 = vmatpush1.bf16.xpose.msra.mxu0 0
      %505 = vmatprep.subr.bf16.mxu0 0
      %506 = vmatpush1.bf16.xpose.msra.mxu0 0
      %507 = vmatprep.subr.bf16.mxu0 0
      %508 = vmatpush1.bf16.xpose.msra.mxu0 0
      %509 = vmatprep.subr.bf16.mxu0 0
      %510 = vmatpush1.bf16.xpose.msra.mxu0 0
      %511 = vmatprep.subr.bf16.mxu0 0
      %512 = vmatpush1.bf16.xpose.msra.mxu0 0
      %513 = vmatprep.subr.bf16.mxu0 0
      %514 = vmatpush1.bf16.xpose.msra.mxu0 0
      %515 = vmatprep.subr.bf16.mxu0 0
      %516 = vmatpush1.bf16.xpose.msra.mxu0 0
      %517 = vmatprep.subr.bf16.mxu0 0
      %518 = vmatpush1.bf16.xpose.msra.mxu0 0
      %519 = vmatprep.subr.bf16.mxu0 0
      %520 = vmatpush1.bf16.xpose.msra.mxu0 0
      %521 = vmatprep.mubr.bf16.mxu0 0
      %522 = vmatmul.mubr.bf16.gmra.mrb[0].mxu0 %v484
      %v523 = vpop.f32.mrb[0].mxu0
      %v524 = vadd.f32 0.0, %v523
      %v525 = vpop.f32.mrb[0].mxu0
      %v526 = vpop.f32.mrb[0].mxu0
      %v527 = vpop.f32.mrb[0].mxu0
      %528 = vdwg.mxu0
      %v529 = vsel %vm296, -1e+20, %v524
      %v530 = vmul.f32 %v529, 0.17677669
      %v531 = vsel %vm249, %v530, -inf
      %532 = vmax.xlane.f32.xlu0 %v531
      %v533 = vpop.xlane.xlu0 %532
      %v534 = vsub.f32 %v530, %v533
      %v535 = vmul.f32 %v534, 1.442695
      %v536 = vpow.pop %v535
      %v537 = vsel %vm249, %v536, 0.0
      %538 = vadd.xlane.f32.xlu0 %v537
      %v539 = vpop.xlane.xlu0 %538
      %v540 = vrcp.pop %v539
      %v541 = vmul.f32 %v536, %v540
      %v542 = vpack.c.bf16 %v541, %v541
      %543 = vrot.lane.b32.xlu0 %v430, 112
      %v544 = vpop.permute.xlu0 %543
      %v546 = vsel %vm249, %v542, 0
      %v549 = vsel %vm314, %v544, 0
      %551 = vmatprep.subr.bf16.mxu0 0
      %552 = vmatpush1.bf16.msra.mxu0 %v549
      %553 = vmatprep.subr.bf16.mxu0 0
      %554 = vmatpush1.bf16.msra.mxu0 0
      %555 = vmatprep.subr.bf16.mxu0 0
      %556 = vmatpush1.bf16.msra.mxu0 0
      %557 = vmatprep.subr.bf16.mxu0 0
      %558 = vmatpush1.bf16.msra.mxu0 0
      %559 = vmatprep.subr.bf16.mxu0 0
      %560 = vmatpush1.bf16.msra.mxu0 0
      %561 = vmatprep.subr.bf16.mxu0 0
      %562 = vmatpush1.bf16.msra.mxu0 0
      %563 = vmatprep.subr.bf16.mxu0 0
      %564 = vmatpush1.bf16.msra.mxu0 0
      %565 = vmatprep.subr.bf16.mxu0 0
      %566 = vmatpush1.bf16.msra.mxu0 0
      %567 = vmatprep.subr.bf16.mxu0 0
      %568 = vmatpush1.bf16.msra.mxu0 0
      %569 = vmatprep.subr.bf16.mxu0 0
      %570 = vmatpush1.bf16.msra.mxu0 0
      %571 = vmatprep.subr.bf16.mxu0 0
      %572 = vmatpush1.bf16.msra.mxu0 0
      %573 = vmatprep.subr.bf16.mxu0 0
      %574 = vmatpush1.bf16.msra.mxu0 0
      %575 = vmatprep.subr.bf16.mxu0 0
      %576 = vmatpush1.bf16.msra.mxu0 0
      %577 = vmatprep.subr.bf16.mxu0 0
      %578 = vmatpush1.bf16.msra.mxu0 0
      %579 = vmatprep.subr.bf16.mxu0 0
      %580 = vmatpush1.bf16.msra.mxu0 0
      %581 = vmatprep.subr.bf16.mxu0 0
      %582 = vmatpush1.bf16.msra.mxu0 0
      %583 = vmatprep.mubr.bf16.mxu0 0
      %584 = vmatmul.mubr.bf16.gmra.mrb[0].mxu0 %v546
      %v585 = vpop.f32.mrb[0].mxu0
      %v586 = vadd.f32 0.0, %v585
      %v587 = vpop.f32.mrb[0].mxu0
      %v588 = vpop.f32.mrb[0].mxu0
      %v589 = vpop.f32.mrb[0].mxu0
      %590 = vdwg.mxu0
      %591 = vrot.lane.b32.xlu0 %v360, 104
      %v592 = vpop.permute.xlu0 %591
      %593 = vrot.lane.b32.xlu0 %v365, 104
      %v594 = vpop.permute.xlu0 %593
      %v596 = vsel %vm249, %v592, 0
      %v599 = vsel %vm249, %v594, 0
      %601 = vmatprep.subr.bf16.mxu0 0
      %602 = vmatpush1.bf16.xpose.msra.mxu0 %v599
      %603 = vmatprep.subr.bf16.mxu0 0
      %604 = vmatpush1.bf16.xpose.msra.mxu0 0
      %605 = vmatprep.subr.bf16.mxu0 0
      %606 = vmatpush1.bf16.xpose.msra.mxu0 0
      %607 = vmatprep.subr.bf16.mxu0 0
      %608 = vmatpush1.bf16.xpose.msra.mxu0 0
      %609 = vmatprep.subr.bf16.mxu0 0
      %610 = vmatpush1.bf16.xpose.msra.mxu0 0
      %611 = vmatprep.subr.bf16.mxu0 0
      %612 = vmatpush1.bf16.xpose.msra.mxu0 0
      %613 = vmatprep.subr.bf16.mxu0 0
      %614 = vmatpush1.bf16.xpose.msra.mxu0 0
      %615 = vmatprep.subr.bf16.mxu0 0
      %616 = vmatpush1.bf16.xpose.msra.mxu0 0
      %617 = vmatprep.subr.bf16.mxu0 0
      %618 = vmatpush1.bf16.xpose.msra.mxu0 0
      %619 = vmatprep.subr.bf16.mxu0 0
      %620 = vmatpush1.bf16.xpose.msra.mxu0 0
      %621 = vmatprep.subr.bf16.mxu0 0
      %622 = vmatpush1.bf16.xpose.msra.mxu0 0
      %623 = vmatprep.subr.bf16.mxu0 0
      %624 = vmatpush1.bf16.xpose.msra.mxu0 0
      %625 = vmatprep.subr.bf16.mxu0 0
      %626 = vmatpush1.bf16.xpose.msra.mxu0 0
      %627 = vmatprep.subr.bf16.mxu0 0
      %628 = vmatpush1.bf16.xpose.msra.mxu0 0
      %629 = vmatprep.subr.bf16.mxu0 0
      %630 = vmatpush1.bf16.xpose.msra.mxu0 0
      %631 = vmatprep.subr.bf16.mxu0 0
      %632 = vmatpush1.bf16.xpose.msra.mxu0 0
      %633 = vmatprep.mubr.bf16.mxu0 0
      %634 = vmatmul.mubr.bf16.gmra.mrb[0].mxu0 %v596
      %v635 = vpop.f32.mrb[0].mxu0
      %v636 = vadd.f32 0.0, %v635
      %v637 = vpop.f32.mrb[0].mxu0
      %v638 = vpop.f32.mrb[0].mxu0
      %v639 = vpop.f32.mrb[0].mxu0
      %640 = vdwg.mxu0
      %v641 = vsel %vm296, -1e+20, %v636
      %v642 = vmul.f32 %v641, 0.17677669
      %v643 = vsel %vm249, %v642, -inf
      %644 = vmax.xlane.f32.xlu0 %v643
      %v645 = vpop.xlane.xlu0 %644
      %v646 = vsub.f32 %v642, %v645
      %v647 = vmul.f32 %v646, 1.442695
      %v648 = vpow.pop %v647
      %v649 = vsel %vm249, %v648, 0.0
      %650 = vadd.xlane.f32.xlu0 %v649
      %v651 = vpop.xlane.xlu0 %650
      %v652 = vrcp.pop %v651
      %v653 = vmul.f32 %v648, %v652
      %v654 = vpack.c.bf16 %v653, %v653
      %655 = vrot.lane.b32.xlu0 %v430, 104
      %v656 = vpop.permute.xlu0 %655
      %v658 = vsel %vm249, %v654, 0
      %v661 = vsel %vm314, %v656, 0
      %663 = vmatprep.subr.bf16.mxu0 0
      %664 = vmatpush1.bf16.msra.mxu0 %v661
      %665 = vmatprep.subr.bf16.mxu0 0
      %666 = vmatpush1.bf16.msra.mxu0 0
      %667 = vmatprep.subr.bf16.mxu0 0
      %668 = vmatpush1.bf16.msra.mxu0 0
      %669 = vmatprep.subr.bf16.mxu0 0
      %670 = vmatpush1.bf16.msra.mxu0 0
      %671 = vmatprep.subr.bf16.mxu0 0
      %672 = vmatpush1.bf16.msra.mxu0 0
      %673 = vmatprep.subr.bf16.mxu0 0
      %674 = vmatpush1.bf16.msra.mxu0 0
      %675 = vmatprep.subr.bf16.mxu0 0
      %676 = vmatpush1.bf16.msra.mxu0 0
      %677 = vmatprep.subr.bf16.mxu0 0
      %678 = vmatpush1.bf16.msra.mxu0 0
      %679 = vmatprep.subr.bf16.mxu0 0
      %680 = vmatpush1.bf16.msra.mxu0 0
      %681 = vmatprep.subr.bf16.mxu0 0
      %682 = vmatpush1.bf16.msra.mxu0 0
      %683 = vmatprep.subr.bf16.mxu0 0
      %684 = vmatpush1.bf16.msra.mxu0 0
      %685 = vmatprep.subr.bf16.mxu0 0
      %686 = vmatpush1.bf16.msra.mxu0 0
      %687 = vmatprep.subr.bf16.mxu0 0
      %688 = vmatpush1.bf16.msra.mxu0 0
      %689 = vmatprep.subr.bf16.mxu0 0
      %690 = vmatpush1.bf16.msra.mxu0 0
      %691 = vmatprep.subr.bf16.mxu0 0
      %692 = vmatpush1.bf16.msra.mxu0 0
      %693 = vmatprep.subr.bf16.mxu0 0
      %694 = vmatpush1.bf16.msra.mxu0 0
      %695 = vmatprep.mubr.bf16.mxu0 0
      %696 = vmatmul.mubr.bf16.gmra.mrb[0].mxu0 %v658
      %v697 = vpop.f32.mrb[0].mxu0
      %v698 = vadd.f32 0.0, %v697
      %v699 = vpop.f32.mrb[0].mxu0
      %v700 = vpop.f32.mrb[0].mxu0
      %v701 = vpop.f32.mrb[0].mxu0
      %702 = vdwg.mxu0
      %704 = vrot.lane.b32.xlu0 %v474, 8
      %v705 = vpop.permute.xlu0 %704
      %708 = vrot.lane.b32.xlu0 %v586, 16
      %v709 = vpop.permute.xlu0 %708
      %712 = vrot.lane.b32.xlu0 %v698, 24
      %v713 = vpop.permute.xlu0 %712
      %v715 = vsel %vm249, %v353, %v705
      %vm716 = vcmask 130048
      %v717 = vsel %vm716, %v715, %v709
      %vm718 = vcmask 195584
      %v719 = vsel %vm718, %v717, %v713
      %v720 = vpack.c.bf16 %v719, %v719
      %vm721 = vcmask 257024
      %722 = vst.msk [vmem:[%s243] sm:$0xf] %vm721, %v720
      %p723 = scmp.lt.s32.totalorder %s15, 1
      %s724 = scalar_select %p723, %s15, 1
      %s725 = smul.addr %s724, 4
      %s726 = scalar_lea.vmem %s4, %s725
      // Predicated region
      $region37: #{decoder_forward.18} parent=35 // pred_check
        %p727 = pneg %p137
      $region38: #{decoder_forward.18} parent=35 // pred_check_branch
        %729 = sbr.rel (%p727) target = $region40
      $region39: #{decoder_forward.18} parent=35 // pred_region
        _
      $region40: #{decoder_forward.18} parent=35 // pred_fallthru
        _
    $region36: #{decoder_forward.18} parent=5 // pred_fallthru
      _
    %p730 = scmp.le.s32.totalorder 2, %s10
    // Predicated region
    $region41: #{decoder_forward.18} parent=5 // pred_check
      %p731 = pneg %p730
    $region42: #{decoder_forward.18} parent=5 // pred_check_branch
      %733 = sbr.rel (%p731) target = $region44
    $region43: #{decoder_forward.18} parent=5 // pred_region
      %s734 = ssub.s32 %s10, 2
      // Predicated region
      $region45: #{decoder_forward.18} parent=43 // pred_check
        %p735 = pneg %p143
      $region46: #{decoder_forward.18} parent=43 // pred_check_branch
        %737 = sbr.rel (%p735) target = $region48
      $region47: #{decoder_forward.18} parent=43 // pred_region
        %p738 = scmp.lt.s32.totalorder %s16, 1
        %s739 = scalar_select %p738, %s16, 1
        %s740 = smul.addr %s739, 4
        %s741 = scalar_lea.vmem %s4, %s740
      $region48: #{decoder_forward.18} parent=43 // pred_fallthru
        _
    $region44: #{decoder_forward.18} parent=5 // pred_fallthru
      _
  $region6: #{decoder_forward.18} parent=0 // loop_footer
    %s14 = sadd.s32 1, %s10
  $region7: #{decoder_forward.18} parent=0 // loop_footer_branch
    %9 = sbr.rel target = $region3
  $region8: #{decoder_forward.18} parent=0 // loop_exit
    _

// kernel: decoder_forward.20
$region0: #{decoder_forward.20}
  #allocation0 [shape = 'u32[]', space=smem, size = 0x4, offset = 0x4, fixed_abs, tag = 'smem constant byte address 0x4 - core index']
  #allocation1 [shape = 'u32[144,128]{1,0:T(1,128)}', space=vmem, size = 0x12000, scoped, tag = 'internal scratch']
  #allocation2 [shape = 'f32[16,64]{1,0:T(8,128)}', space=vmem, size = 0x2000, scoped, tag = 'scratch operand']
  %s0 = inlined_call_operand.vmem [shape: f32[16,32], index: 0, kind: input, shape index: {}]
  %s1 = inlined_call_operand.vmem [shape: bf16[32,64], index: 1, kind: input, shape index: {}]
  %s2 = inlined_call_operand.vmem [shape: f32[1,64], index: 2, kind: input, shape index: {}]
  %s3 = inlined_call_operand.vmem [shape: bf16[16,64], index: 3, kind: output, shape index: {}]
  %s4 = sld [smem:[#allocation0]]
  $region30: #{decoder_forward.20} parent=0
    _
  %s6 = ssub.s32 1, %s4
  %s7 = scalar_select 0, %s6, %s4
  // Predicated region
  $region2: #{decoder_forward.20} parent=0 // pred_check
    _
  $region3: #{decoder_forward.20} parent=0 // pred_check_branch
    %9 = sbr.rel (0) target = $region5
  $region4: #{decoder_forward.20} parent=0 // pred_region
    _
  $region5: #{decoder_forward.20} parent=0 // pred_fallthru
    _
  // Predicated region
  $region6: #{decoder_forward.20} parent=0 // pred_check
    _
  $region7: #{decoder_forward.20} parent=0 // pred_check_branch
    %11 = sbr.rel (0) target = $region9
  $region8: #{decoder_forward.20} parent=0 // pred_region
    _
  $region9: #{decoder_forward.20} parent=0 // pred_fallthru
    _
  // Predicated region
  $region10: #{decoder_forward.20} parent=0 // pred_check
    _
  $region11: #{decoder_forward.20} parent=0 // pred_check_branch
    %13 = sbr.rel (0) target = $region13
  $region12: #{decoder_forward.20} parent=0 // pred_region
    _
  $region13: #{decoder_forward.20} parent=0 // pred_fallthru
    _
  %p15 = scmp.eq.s32.totalorder 0, 0
  // Predicated region
  $region14: #{decoder_forward.20} parent=0 // pred_check
    %p16 = pneg %p15
  $region15: #{decoder_forward.20} parent=0 // pred_check_branch
    %18 = sbr.rel (%p16) target = $region17
  $region16: #{decoder_forward.20} parent=0 // pred_region
    %vm19 = vcmask 523264
    %20 = vst.msk [vmem:[#allocation2] sm:$0xff] %vm19, 0.0
    %21 = vst.msk [vmem:[#allocation2 + $0x8] sm:$0xff] %vm19, 0.0
  $region17: #{decoder_forward.20} parent=0 // pred_fallthru
    _
  %v22 = vld [vmem:[#allocation2] sm:$0xff]
  %v23 = vld [vmem:[#allocation2 + $0x8] sm:$0xff]
  %v24 = vld [vmem:[%s0] sm:$0xff]
  %v25 = vld [vmem:[%s0 + $0x8] sm:$0xff]
  %v26 = vpack.c.bf16 %v25, %v24
  %v27 = vld [vmem:[%s1] sm:$0xf]
  %v28 = vld [vmem:[%s1 + $0x4] sm:$0xf]
  %v29 = vld [vmem:[%s1 + $0x8] sm:$0xf]
  %v30 = vld [vmem:[%s1 + $0xc] sm:$0xf]
  %v35 = vunpack.c.l.b16 %v27
  %v36 = vunpack.c.l.b16 %v28
  %v37 = vunpack.c.l.b16 %v29
  %v38 = vunpack.c.l.b16 %v30
  %v39 = vpack.c.b16 %v36, %v35
  %v40 = vpack.c.b16 %v38, %v37
  %vm43 = vcmask 261120
  %v45 = vsel %vm43, %v26, 0
  %47 = vmatprep.subr.bf16.mxu0 0
  %48 = vmatpush1.bf16.msra.mxu0 %v39
  %49 = vmatprep.subr.bf16.mxu0 0
  %50 = vmatpush1.bf16.msra.mxu0 %v40
  %51 = vmatprep.subr.bf16.mxu0 0
  %52 = vmatpush1.bf16.msra.mxu0 0
  %53 = vmatprep.subr.bf16.mxu0 0
  %54 = vmatpush1.bf16.msra.mxu0 0
  %55 = vmatprep.subr.bf16.mxu0 0
  %56 = vmatpush1.bf16.msra.mxu0 0
  %57 = vmatprep.subr.bf16.mxu0 0
  %58 = vmatpush1.bf16.msra.mxu0 0
  %59 = vmatprep.subr.bf16.mxu0 0
  %60 = vmatpush1.bf16.msra.mxu0 0
  %61 = vmatprep.subr.bf16.mxu0 0
  %62 = vmatpush1.bf16.msra.mxu0 0
  %63 = vmatprep.subr.bf16.mxu0 0
  %64 = vmatpush1.bf16.msra.mxu0 0
  %65 = vmatprep.subr.bf16.mxu0 0
  %66 = vmatpush1.bf16.msra.mxu0 0
  %67 = vmatprep.subr.bf16.mxu0 0
  %68 = vmatpush1.bf16.msra.mxu0 0
  %69 = vmatprep.subr.bf16.mxu0 0
  %70 = vmatpush1.bf16.msra.mxu0 0
  %71 = vmatprep.subr.bf16.mxu0 0
  %72 = vmatpush1.bf16.msra.mxu0 0
  %73 = vmatprep.subr.bf16.mxu0 0
  %74 = vmatpush1.bf16.msra.mxu0 0
  %75 = vmatprep.subr.bf16.mxu0 0
  %76 = vmatpush1.bf16.msra.mxu0 0
  %77 = vmatprep.subr.bf16.mxu0 0
  %78 = vmatpush1.bf16.msra.mxu0 0
  %79 = vmatprep.mubr.bf16.mxu0 0
  %80 = vmatmul.mubr.bf16.gmra.mrb[0].mxu0 %v45
  %v81 = vpop.f32.mrb[0].mxu0
  %v82 = vadd.f32 0.0, %v81
  %v83 = vpop.f32.mrb[0].mxu0
  %v84 = vpop.f32.mrb[0].mxu0
  %v85 = vadd.f32 0.0, %v84
  %v86 = vpop.f32.mrb[0].mxu0
  %87 = vdwg.mxu0
  %v88 = vadd.f32 %v22, %v82
  %v89 = vadd.f32 %v23, %v85
  %vm90 = vcmask 523264
  %91 = vst.msk [vmem:[#allocation2] sm:$0xff] %vm90, %v88
  %92 = vst.msk [vmem:[#allocation2 + $0x8] sm:$0xff] %vm90, %v89
  // Predicated region
  $region18: #{decoder_forward.20} parent=0 // pred_check
    %p93 = pneg %p15
  $region19: #{decoder_forward.20} parent=0 // pred_check_branch
    %95 = sbr.rel (%p93) target = $region21
  $region20: #{decoder_forward.20} parent=0 // pred_region
    %v96 = vld [vmem:[#allocation2] sm:$0xff]
    %v97 = vld [vmem:[#allocation2 + $0x8] sm:$0xff]
    %v98 = vld [vmem:[%s2] sm:$0x1]
    %v100 = vlaneseq
    %v101 = vshrl.u32 %v100, 7
    %v102 = vsub.s32 0, %v101
    %v103 = vrot.slane %v98, %v102
    %v105 = vadd.f32 %v96, %v103
    %v106 = vadd.f32 %v97, %v103
    %v107 = vpack.c.bf16 %v106, %v105
    %v109 = vunpack.c.l.b16 %v107
    %v110 = vunpack.c.h.b16 %v107
    %v111 = vpack.c.b16 %v109, %v109
    %v112 = vpack.c.b16 %v110, %v110
    %vm115 = vcmask 519168
    %116 = vst.msk [vmem:[%s3] sm:$0xf] %vm115, %v111
    %117 = vst.msk [vmem:[%s3 + $0x4] sm:$0xf] %vm115, %v112
  $region21: #{decoder_forward.20} parent=0 // pred_fallthru
    _
  // Predicated region
  $region22: #{decoder_forward.20} parent=0 // pred_check
    _
  $region23: #{decoder_forward.20} parent=0 // pred_check_branch
    %119 = sbr.rel (0) target = $region25
  $region24: #{decoder_forward.20} parent=0 // pred_region
    _
  $region25: #{decoder_forward.20} parent=0 // pred_fallthru
    _
  // Predicated region
  $region26: #{decoder_forward.20} parent=0 // pred_check
    _
  $region27: #{decoder_forward.20} parent=0 // pred_check_branch
    %121 = sbr.rel (0) target = $region29
  $region28: #{decoder_forward.20} parent=0 // pred_region
    _
  $region29: #{decoder_forward.20} parent=0 // pred_fallthru
    _

// kernel: decoder_forward.33
$region0: #{decoder_forward.33}
  #allocation0 [shape = 'u32[]', space=smem, size = 0x4, offset = 0x4, fixed_abs, tag = 'smem constant byte address 0x4 - core index']
  #allocation1 [shape = 'u32[144,128]{1,0:T(1,128)}', space=vmem, size = 0x12000, scoped, tag = 'internal scratch']
  #allocation2 [shape = 'f32[16,50]{1,0:T(8,128)}', space=vmem, size = 0x2000, scoped, tag = 'scratch operand']
  %s0 = inlined_call_operand.vmem [shape: f32[16,32], index: 0, kind: input, shape index: {}]
  %s1 = inlined_call_operand.vmem [shape: bf16[32,50], index: 1, kind: input, shape index: {}]
  %s2 = inlined_call_operand.vmem [shape: f32[1,50], index: 2, kind: input, shape index: {}]
  %s3 = inlined_call_operand.hbm [shape: f32[16,50], index: 3, kind: output, shape index: {}]
  %s4 = sld [smem:[#allocation0]]
  $region30: #{decoder_forward.33} parent=0
    _
  %s6 = ssub.s32 1, %s4
  %s7 = scalar_select 0, %s6, %s4
  $region1: #{decoder_forward.33} parent=0
    #allocation3 [shape = 'u8[8192]{0}', space=vmem, size = 0x2000, scoped, tag = 'output window, operand 0, single buffered']
    #allocation4 [shape = 's32[1]{0}', space=sflag, size = 0x4, scoped, tag = 'scoped memory for decoder_forward.33']
    %8 = vsyncpa [#allocation4], 0
    // Predicated region
    $region2: #{decoder_forward.33} parent=1 // pred_check
      _
    $region3: #{decoder_forward.33} parent=1 // pred_check_branch
      %10 = sbr.rel (0) target = $region5
    $region4: #{decoder_forward.33} parent=1 // pred_region
      _
    $region5: #{decoder_forward.33} parent=1 // pred_fallthru
      _
    // Predicated region
    $region6: #{decoder_forward.33} parent=1 // pred_check
      _
    $region7: #{decoder_forward.33} parent=1 // pred_check_branch
      %12 = sbr.rel (0) target = $region9
    $region8: #{decoder_forward.33} parent=1 // pred_region
      _
    $region9: #{decoder_forward.33} parent=1 // pred_fallthru
      _
    // Predicated region
    $region10: #{decoder_forward.33} parent=1 // pred_check
      _
    $region11: #{decoder_forward.33} parent=1 // pred_check_branch
      %14 = sbr.rel (0) target = $region13
    $region12: #{decoder_forward.33} parent=1 // pred_region
      _
    $region13: #{decoder_forward.33} parent=1 // pred_fallthru
      _
    %p16 = scmp.eq.s32.totalorder 0, 0
    // Predicated region
    $region14: #{decoder_forward.33} parent=1 // pred_check
      %p17 = pneg %p16
    $region15: #{decoder_forward.33} parent=1 // pred_check_branch
      %19 = sbr.rel (%p17) target = $region17
    $region16: #{decoder_forward.33} parent=1 // pred_region
      %vm20 = vcmask 408576
      %21 = vst.msk [vmem:[#allocation2] sm:$0xff] %vm20, 0.0
      %22 = vst.msk [vmem:[#allocation2 + $0x8] sm:$0xff] %vm20, 0.0
    $region17: #{decoder_forward.33} parent=1 // pred_fallthru
      _
    %v23 = vld [vmem:[#allocation2] sm:$0xff]
    %v24 = vld [vmem:[#allocation2 + $0x8] sm:$0xff]
    %v25 = vld [vmem:[%s0] sm:$0xff]
    %v26 = vld [vmem:[%s0 + $0x8] sm:$0xff]
    %v27 = vpack.c.bf16 %v26, %v25
    %v28 = vld [vmem:[%s1] sm:$0xf]
    %v29 = vld [vmem:[%s1 + $0x4] sm:$0xf]
    %v30 = vld [vmem:[%s1 + $0x8] sm:$0xf]
    %v31 = vld [vmem:[%s1 + $0xc] sm:$0xf]
    %v36 = vunpack.c.l.b16 %v28
    %v37 = vunpack.c.l.b16 %v29
    %v38 = vunpack.c.l.b16 %v30
    %v39 = vunpack.c.l.b16 %v31
    %v40 = vpack.c.b16 %v37, %v36
    %v41 = vpack.c.b16 %v39, %v38
    %vm44 = vcmask 261120
    %v46 = vsel %vm44, %v27, 0
    %48 = vmatprep.subr.bf16.mxu0 0
    %49 = vmatpush1.bf16.msra.mxu0 %v40
    %50 = vmatprep.subr.bf16.mxu0 0
    %51 = vmatpush1.bf16.msra.mxu0 %v41
    %52 = vmatprep.subr.bf16.mxu0 0
    %53 = vmatpush1.bf16.msra.mxu0 0
    %54 = vmatprep.subr.bf16.mxu0 0
    %55 = vmatpush1.bf16.msra.mxu0 0
    %56 = vmatprep.subr.bf16.mxu0 0
    %57 = vmatpush1.bf16.msra.mxu0 0
    %58 = vmatprep.subr.bf16.mxu0 0
    %59 = vmatpush1.bf16.msra.mxu0 0
    %60 = vmatprep.subr.bf16.mxu0 0
    %61 = vmatpush1.bf16.msra.mxu0 0
    %62 = vmatprep.subr.bf16.mxu0 0
    %63 = vmatpush1.bf16.msra.mxu0 0
    %64 = vmatprep.subr.bf16.mxu0 0
    %65 = vmatpush1.bf16.msra.mxu0 0
    %66 = vmatprep.subr.bf16.mxu0 0
    %67 = vmatpush1.bf16.msra.mxu0 0
    %68 = vmatprep.subr.bf16.mxu0 0
    %69 = vmatpush1.bf16.msra.mxu0 0
    %70 = vmatprep.subr.bf16.mxu0 0
    %71 = vmatpush1.bf16.msra.mxu0 0
    %72 = vmatprep.subr.bf16.mxu0 0
    %73 = vmatpush1.bf16.msra.mxu0 0
    %74 = vmatprep.subr.bf16.mxu0 0
    %75 = vmatpush1.bf16.msra.mxu0 0
    %76 = vmatprep.subr.bf16.mxu0 0
    %77 = vmatpush1.bf16.msra.mxu0 0
    %78 = vmatprep.subr.bf16.mxu0 0
    %79 = vmatpush1.bf16.msra.mxu0 0
    %80 = vmatprep.mubr.bf16.mxu0 0
    %81 = vmatmul.mubr.bf16.gmra.mrb[0].mxu0 %v46
    %v82 = vpop.f32.mrb[0].mxu0
    %v83 = vadd.f32 0.0, %v82
    %v84 = vpop.f32.mrb[0].mxu0
    %v85 = vpop.f32.mrb[0].mxu0
    %v86 = vadd.f32 0.0, %v85
    %v87 = vpop.f32.mrb[0].mxu0
    %88 = vdwg.mxu0
    %v89 = vadd.f32 %v23, %v83
    %v90 = vadd.f32 %v24, %v86
    %vm91 = vcmask 408576
    %92 = vst.msk [vmem:[#allocation2] sm:$0xff] %vm91, %v89
    %93 = vst.msk [vmem:[#allocation2 + $0x8] sm:$0xff] %vm91, %v90
    // Predicated region
    $region18: #{decoder_forward.33} parent=1 // pred_check
      %p94 = pneg %p16
    $region19: #{decoder_forward.33} parent=1 // pred_check_branch
      %96 = sbr.rel (%p94) target = $region21
    $region20: #{decoder_forward.33} parent=1 // pred_region
      %v97 = vld [vmem:[#allocation2] sm:$0xff]
      %v98 = vld [vmem:[#allocation2 + $0x8] sm:$0xff]
      %v99 = vld [vmem:[%s2] sm:$0x1]
      %v101 = vlaneseq
      %v102 = vshrl.u32 %v101, 7
      %v103 = vsub.s32 0, %v102
      %v104 = vrot.slane %v99, %v103
      %v106 = vadd.f32 %v97, %v104
      %v107 = vadd.f32 %v98, %v104
      %108 = vst.msk [vmem:[#allocation3] sm:$0xff] %vm91, %v106
      %109 = vst.msk [vmem:[#allocation3 + $0x8] sm:$0xff] %vm91, %v107
    $region21: #{decoder_forward.33} parent=1 // pred_fallthru
      _
    // Predicated region
    $region22: #{decoder_forward.33} parent=1 // pred_check
      _
    $region23: #{decoder_forward.33} parent=1 // pred_check_branch
      %111 = sbr.rel (0) target = $region25
    $region24: #{decoder_forward.33} parent=1 // pred_region
      %s113 = ssub.s32 256, 256
      %114 = vsyncadd [#allocation4], %s113
      %s115 = sshll.u32 [#allocation3], 4
      %s116 = int_to_ptr.vmem [resolvable:$true] %s115
      %121 = dma.vmem_to_hbm [thread:$0]  %s116, 256, %s3, [#allocation4], 128, 128, 8
    $region25: #{decoder_forward.33} parent=1 // pred_fallthru
      _
    // Predicated region
    $region26: #{decoder_forward.33} parent=1 // pred_check
      _
    $region27: #{decoder_forward.33} parent=1 // pred_check_branch
      %123 = sbr.rel (0) target = $region29
    $region28: #{decoder_forward.33} parent=1 // pred_region
      %124 = dma.done [#allocation4], 256
    $region29: #{decoder_forward.33} parent=1 // pred_fallthru
      _
    %125 = vsyncpa [#allocation4], 1

// kernel: decoder_forward.24
$region0: #{decoder_forward.24}
  #allocation0 [shape = 'u32[]', space=smem, size = 0x4, offset = 0x4, fixed_abs, tag = 'smem constant byte address 0x4 - core index']
  #allocation1 [shape = 'u32[144,128]{1,0:T(1,128)}', space=vmem, size = 0x12000, scoped, tag = 'internal scratch']
  %s0 = inlined_call_operand.vmem [shape: f32[16,32], index: 0, kind: input, shape index: {}]
  %s1 = inlined_call_operand.vmem [shape: bf16[32,128], index: 1, kind: input, shape index: {}]
  %s2 = inlined_call_operand.vmem [shape: f32[1,128], index: 2, kind: input, shape index: {}]
  %s3 = inlined_call_operand.vmem [shape: bf16[128,32], index: 3, kind: input, shape index: {}]
  %s4 = inlined_call_operand.vmem [shape: f32[1,32], index: 4, kind: input, shape index: {}]
  %s5 = inlined_call_operand.vmem [shape: f32[1,32], index: 5, kind: input, shape index: {}]
  %s6 = inlined_call_operand.vmem [shape: f32[1,32], index: 6, kind: input, shape index: {}]
  %s7 = inlined_call_operand.vmem [shape: f32[16,32], index: 7, kind: output, shape index: {}]
  %s8 = sld [smem:[#allocation0]]
  $region38: #{decoder_forward.24} parent=0
    _
  %s10 = ssub.s32 1, %s8
  %s11 = scalar_select 0, %s10, %s8
  // Predicated region
  $region2: #{decoder_forward.24} parent=0 // pred_check
    _
  $region3: #{decoder_forward.24} parent=0 // pred_check_branch
    %13 = sbr.rel (0) target = $region5
  $region4: #{decoder_forward.24} parent=0 // pred_region
    _
  $region5: #{decoder_forward.24} parent=0 // pred_fallthru
    _
  // Predicated region
  $region6: #{decoder_forward.24} parent=0 // pred_check
    _
  $region7: #{decoder_forward.24} parent=0 // pred_check_branch
    %15 = sbr.rel (0) target = $region9
  $region8: #{decoder_forward.24} parent=0 // pred_region
    _
  $region9: #{decoder_forward.24} parent=0 // pred_fallthru
    _
  // Predicated region
  $region10: #{decoder_forward.24} parent=0 // pred_check
    _
  $region11: #{decoder_forward.24} parent=0 // pred_check_branch
    %17 = sbr.rel (0) target = $region13
  $region12: #{decoder_forward.24} parent=0 // pred_region
    _
  $region13: #{decoder_forward.24} parent=0 // pred_fallthru
    _
  // Predicated region
  $region14: #{decoder_forward.24} parent=0 // pred_check
    _
  $region15: #{decoder_forward.24} parent=0 // pred_check_branch
    %19 = sbr.rel (0) target = $region17
  $region16: #{decoder_forward.24} parent=0 // pred_region
    _
  $region17: #{decoder_forward.24} parent=0 // pred_fallthru
    _
  // Predicated region
  $region18: #{decoder_forward.24} parent=0 // pred_check
    _
  $region19: #{decoder_forward.24} parent=0 // pred_check_branch
    %21 = sbr.rel (0) target = $region21
  $region20: #{decoder_forward.24} parent=0 // pred_region
    _
  $region21: #{decoder_forward.24} parent=0 // pred_fallthru
    _
  // Predicated region
  $region22: #{decoder_forward.24} parent=0 // pred_check
    _
  $region23: #{decoder_forward.24} parent=0 // pred_check_branch
    %23 = sbr.rel (0) target = $region25
  $region24: #{decoder_forward.24} parent=0 // pred_region
    _
  $region25: #{decoder_forward.24} parent=0 // pred_fallthru
    _
  // Predicated region
  $region26: #{decoder_forward.24} parent=0 // pred_check
    _
  $region27: #{decoder_forward.24} parent=0 // pred_check_branch
    %25 = sbr.rel (0) target = $region29
  $region28: #{decoder_forward.24} parent=0 // pred_region
    _
  $region29: #{decoder_forward.24} parent=0 // pred_fallthru
    _
  %v27 = vld [vmem:[%s0] sm:$0xff]
  %v28 = vld [vmem:[%s0 + $0x8] sm:$0xff]
  %v29 = vpack.c.bf16 %v28, %v27
  %v30 = vld [vmem:[%s1] sm:$0xf]
  %v31 = vld [vmem:[%s1 + $0x4] sm:$0xf]
  %v32 = vld [vmem:[%s1 + $0x8] sm:$0xf]
  %v33 = vld [vmem:[%s1 + $0xc] sm:$0xf]
  %v34 = vld [vmem:[%s2] sm:$0x1]
  %v36 = vlaneseq
  %v37 = vshrl.u32 %v36, 7
  %v38 = vsub.s32 0, %v37
  %v39 = vrot.slane %v34, %v38
  %v45 = vunpack.c.l.b16 %v30
  %v46 = vunpack.c.l.b16 %v31
  %v47 = vunpack.c.l.b16 %v32
  %v48 = vunpack.c.l.b16 %v33
  %v49 = vpack.c.b16 %v46, %v45
  %v50 = vpack.c.b16 %v48, %v47
  %vm53 = vcmask 261120
  %v55 = vsel %vm53, %v29, 0
  %57 = vmatprep.subr.bf16.mxu0 0
  %58 = vmatpush1.bf16.msra.mxu0 %v49
  %59 = vmatprep.subr.bf16.mxu0 0
  %60 = vmatpush1.bf16.msra.mxu0 %v50
  %61 = vmatprep.subr.bf16.mxu0 0
  %62 = vmatpush1.bf16.msra.mxu0 0
  %63 = vmatprep.subr.bf16.mxu0 0
  %64 = vmatpush1.bf16.msra.mxu0 0
  %65 = vmatprep.subr.bf16.mxu0 0
  %66 = vmatpush1.bf16.msra.mxu0 0
  %67 = vmatprep.subr.bf16.mxu0 0
  %68 = vmatpush1.bf16.msra.mxu0 0
  %69 = vmatprep.subr.bf16.mxu0 0
  %70 = vmatpush1.bf16.msra.mxu0 0
  %71 = vmatprep.subr.bf16.mxu0 0
  %72 = vmatpush1.bf16.msra.mxu0 0
  %73 = vmatprep.subr.bf16.mxu0 0
  %74 = vmatpush1.bf16.msra.mxu0 0
  %75 = vmatprep.subr.bf16.mxu0 0
  %76 = vmatpush1.bf16.msra.mxu0 0
  %77 = vmatprep.subr.bf16.mxu0 0
  %78 = vmatpush1.bf16.msra.mxu0 0
  %79 = vmatprep.subr.bf16.mxu0 0
  %80 = vmatpush1.bf16.msra.mxu0 0
  %81 = vmatprep.subr.bf16.mxu0 0
  %82 = vmatpush1.bf16.msra.mxu0 0
  %83 = vmatprep.subr.bf16.mxu0 0
  %84 = vmatpush1.bf16.msra.mxu0 0
  %85 = vmatprep.subr.bf16.mxu0 0
  %86 = vmatpush1.bf16.msra.mxu0 0
  %87 = vmatprep.subr.bf16.mxu0 0
  %88 = vmatpush1.bf16.msra.mxu0 0
  %89 = vmatprep.mubr.bf16.mxu0 0
  %90 = vmatmul.mubr.bf16.gmra.mrb[0].mxu0 %v55
  %v91 = vpop.f32.mrb[0].mxu0
  %v92 = vadd.f32 %v39, %v91
  %v93 = vpop.f32.mrb[0].mxu0
  %v94 = vpop.f32.mrb[0].mxu0
  %v95 = vadd.f32 %v39, %v94
  %v96 = vpop.f32.mrb[0].mxu0
  %97 = vdwg.mxu0
  %v98 = vmax.f32 %v92, 0.0
  %v99 = vmax.f32 %v95, 0.0
  %v100 = vpack.c.bf16 %v99, %v98
  %v101 = vld [vmem:[%s3] sm:$0xf]
  %v102 = vld [vmem:[%s3 + $0x4] sm:$0xf]
  %v103 = vld [vmem:[%s3 + $0x8] sm:$0xf]
  %v104 = vld [vmem:[%s3 + $0xc] sm:$0xf]
  %v105 = vld [vmem:[%s3 + $0x10] sm:$0xf]
  %v106 = vld [vmem:[%s3 + $0x14] sm:$0xf]
  %v107 = vld [vmem:[%s3 + $0x18] sm:$0xf]
  %v108 = vld [vmem:[%s3 + $0x1c] sm:$0xf]
  %v109 = vld [vmem:[%s3 + $0x20] sm:$0xf]
  %v110 = vld [vmem:[%s3 + $0x24] sm:$0xf]
  %v111 = vld [vmem:[%s3 + $0x28] sm:$0xf]
  %v112 = vld [vmem:[%s3 + $0x2c] sm:$0xf]
  %v113 = vld [vmem:[%s3 + $0x30] sm:$0xf]
  %v114 = vld [vmem:[%s3 + $0x34] sm:$0xf]
  %v115 = vld [vmem:[%s3 + $0x38] sm:$0xf]
  %v116 = vld [vmem:[%s3 + $0x3c] sm:$0xf]
  %v117 = vld [vmem:[%s4] sm:$0x1]
  %v119 = vlaneseq
  %v120 = vshrl.u32 %v119, 7
  %v121 = vsub.s32 0, %v120
  %v122 = vrot.slane %v117, %v121
  %v140 = vunpack.c.l.b16 %v101
  %v141 = vunpack.c.l.b16 %v102
  %v142 = vunpack.c.l.b16 %v103
  %v143 = vunpack.c.l.b16 %v104
  %v144 = vunpack.c.l.b16 %v105
  %v145 = vunpack.c.l.b16 %v106
  %v146 = vunpack.c.l.b16 %v107
  %v147 = vunpack.c.l.b16 %v108
  %v148 = vunpack.c.l.b16 %v109
  %v149 = vunpack.c.l.b16 %v110
  %v150 = vunpack.c.l.b16 %v111
  %v151 = vunpack.c.l.b16 %v112
  %v152 = vunpack.c.l.b16 %v113
  %v153 = vunpack.c.l.b16 %v114
  %v154 = vunpack.c.l.b16 %v115
  %v155 = vunpack.c.l.b16 %v116
  %v156 = vpack.c.b16 %v141, %v140
  %v157 = vpack.c.b16 %v143, %v142
  %v158 = vpack.c.b16 %v145, %v144
  %v159 = vpack.c.b16 %v147, %v146
  %v160 = vpack.c.b16 %v149, %v148
  %v161 = vpack.c.b16 %v151, %v150
  %v162 = vpack.c.b16 %v153, %v152
  %v163 = vpack.c.b16 %v155, %v154
  %172 = vmatprep.subr.bf16.mxu0 0
  %173 = vmatpush1.bf16.msra.mxu0 %v156
  %174 = vmatprep.subr.bf16.mxu0 0
  %175 = vmatpush1.bf16.msra.mxu0 %v157
  %176 = vmatprep.subr.bf16.mxu0 0
  %177 = vmatpush1.bf16.msra.mxu0 %v158
  %178 = vmatprep.subr.bf16.mxu0 0
  %179 = vmatpush1.bf16.msra.mxu0 %v159
  %180 = vmatprep.subr.bf16.mxu0 0
  %181 = vmatpush1.bf16.msra.mxu0 %v160
  %182 = vmatprep.subr.bf16.mxu0 0
  %183 = vmatpush1.bf16.msra.mxu0 %v161
  %184 = vmatprep.subr.bf16.mxu0 0
  %185 = vmatpush1.bf16.msra.mxu0 %v162
  %186 = vmatprep.subr.bf16.mxu0 0
  %187 = vmatpush1.bf16.msra.mxu0 %v163
  %188 = vmatprep.subr.bf16.mxu0 0
  %189 = vmatpush1.bf16.msra.mxu0 0
  %190 = vmatprep.subr.bf16.mxu0 0
  %191 = vmatpush1.bf16.msra.mxu0 0
  %192 = vmatprep.subr.bf16.mxu0 0
  %193 = vmatpush1.bf16.msra.mxu0 0
  %194 = vmatprep.subr.bf16.mxu0 0
  %195 = vmatpush1.bf16.msra.mxu0 0
  %196 = vmatprep.subr.bf16.mxu0 0
  %197 = vmatpush1.bf16.msra.mxu0 0
  %198 = vmatprep.subr.bf16.mxu0 0
  %199 = vmatpush1.bf16.msra.mxu0 0
  %200 = vmatprep.subr.bf16.mxu0 0
  %201 = vmatpush1.bf16.msra.mxu0 0
  %202 = vmatprep.subr.bf16.mxu0 0
  %203 = vmatpush1.bf16.msra.mxu0 0
  %204 = vmatprep.mubr.bf16.mxu0 0
  %205 = vmatmul.mubr.bf16.gmra.mrb[0].mxu0 %v100
  %v206 = vpop.f32.mrb[0].mxu0
  %v207 = vadd.f32 %v122, %v206
  %v208 = vpop.f32.mrb[0].mxu0
  %v209 = vpop.f32.mrb[0].mxu0
  %v210 = vadd.f32 %v122, %v209
  %v211 = vpop.f32.mrb[0].mxu0
  %212 = vdwg.mxu0
  %v213 = vadd.f32 %v207, %v27
  %v214 = vadd.f32 %v210, %v28
  %v215 = vsel %vm53, %v213, 0.0
  %216 = vadd.xlane.f32.xlu0 %v215
  %v217 = vpop.xlane.xlu0 %216
  %v218 = vsel %vm53, %v214, 0.0
  %219 = vadd.xlane.f32.xlu0 %v218
  %v220 = vpop.xlane.xlu0 %219
  %v221 = vrcp.pop 32.0
  %v222 = vmul.f32 %v217, %v221
  %v223 = vmul.f32 %v220, %v221
  %v224 = vsub.f32 %v213, %v222
  %v225 = vsub.f32 %v214, %v223
  %v226 = vmul.f32 %v224, %v224
  %v227 = vmul.f32 %v225, %v225
  %v228 = vsel %vm53, %v226, 0.0
  %229 = vadd.xlane.f32.xlu0 %v228
  %v230 = vpop.xlane.xlu0 %229
  %v231 = vsel %vm53, %v227, 0.0
  %232 = vadd.xlane.f32.xlu0 %v231
  %v233 = vpop.xlane.xlu0 %232
  %v234 = vmul.f32 %v230, %v221
  %v235 = vmul.f32 %v233, %v221
  %v236 = vadd.f32 %v234, 1e-05
  %v237 = vadd.f32 %v235, 1e-05
  %v238 = vrsqrt.pop %v236
  %v239 = vrsqrt.pop %v237
  %v240 = vmul.f32 %v224, %v238
  %v241 = vmul.f32 %v225, %v239
  %v242 = vld [vmem:[%s5] sm:$0x1]
  %v244 = vlaneseq
  %v245 = vshrl.u32 %v244, 7
  %v246 = vsub.s32 0, %v245
  %v247 = vrot.slane %v242, %v246
  %v249 = vmul.f32 %v240, %v247
  %v250 = vmul.f32 %v241, %v247
  %v251 = vld [vmem:[%s6] sm:$0x1]
  %v253 = vlaneseq
  %v254 = vshrl.u32 %v253, 7
  %v255 = vsub.s32 0, %v254
  %v256 = vrot.slane %v251, %v255
  %v258 = vadd.f32 %v249, %v256
  %v259 = vadd.f32 %v250, %v256
  %260 = vst.msk [vmem:[%s7] sm:$0xff] %vm53, %v258
  %261 = vst.msk [vmem:[%s7 + $0x8] sm:$0xff] %vm53, %v259
  // Predicated region
  $region30: #{decoder_forward.24} parent=0 // pred_check
    _
  $region31: #{decoder_forward.24} parent=0 // pred_check_branch
    %263 = sbr.rel (0) target = $region33
  $region32: #{decoder_forward.24} parent=0 // pred_region
    _
  $region33: #{decoder_forward.24} parent=0 // pred_fallthru
    _
  // Predicated region
  $region34: #{decoder_forward.24} parent=0 // pred_check
    _
  $region35: #{decoder_forward.24} parent=0 // pred_check_branch
    %265 = sbr.rel (0) target = $region37
  $region36: #{decoder_forward.24} parent=0 // pred_region
    _
  $region37: #{decoder_forward.24} parent=0 // pred_fallthru
    _

// kernel: decoder_forward.22
$region0: #{decoder_forward.22}
  #allocation0 [shape = 'u32[]', space=smem, size = 0x4, offset = 0x4, fixed_abs, tag = 'smem constant byte address 0x4 - core index']
  #allocation1 [shape = 'u32[144,128]{1,0:T(1,128)}', space=vmem, size = 0x12000, scoped, tag = 'internal scratch']
  %s0 = inlined_call_operand.vmem [shape: bf16[2,8,32], index: 0, kind: input, shape index: {}]
  %s1 = inlined_call_operand.vmem [shape: bf16[2,8,32], index: 1, kind: input, shape index: {}]
  %s2 = inlined_call_operand.vmem [shape: bf16[2,8,32], index: 2, kind: input, shape index: {}]
  %s3 = inlined_call_operand.vmem [shape: s32[2,1,1,8], index: 3, kind: input, shape index: {}]
  %s4 = inlined_call_operand.vmem [shape: bf16[2,8,32], index: 4, kind: output, shape index: {}]
  %s5 = sld [smem:[#allocation0]]
  $region49: #{decoder_forward.22} parent=0
    _
  %s7 = ssub.s32 1, %s5
  %s8 = scalar_select 0, %s7, %s5
  loop: start=0, step=1, limit=4
  $region2: #{decoder_forward.22} parent=0 // loop_pre_header
    _
  $region3: #{decoder_forward.22} parent=0 // loop_header
    %s10 = sphi 0, %s14
    %p11 = scmp.ge.s32.totalorder %s10, 4
    %s20 = sphi 0, %s22
    %s23 = sphi 0, %s20
    %s24 = sphi 0, %s23
    %s40 = sphi 0, %s24
    %s46 = sphi 0, %s48
    %s49 = sphi 0, %s46
    %s50 = sphi 0, %s49
    %s66 = sphi 0, %s50
    %s72 = sphi 0, %s74
    %s75 = sphi 0, %s72
    %s76 = sphi 0, %s75
    %s92 = sphi 0, %s76
    %s98 = sphi 0, %s100
    %s101 = sphi 0, %s98
    %s102 = sphi 0, %s101
    %s118 = sphi 0, %s102
    %s124 = sphi 0, %s126
    %s127 = sphi 0, %s124
    %s128 = sphi 0, %s127
    %s144 = sphi 0, %s128
  $region4: #{decoder_forward.22} parent=0 // loop_header_branch
    %13 = sbr.rel (%p11) target = $region8
  $region5: #{decoder_forward.22} parent=0 // loop_body
    %s15 = ssub.s32 %s10, 1
    %s16 = ssub.s32 %s10, 2
    %s17 = sadd.s32 %s10, 1
    %s18 = ssub.s32 %s10, %s17
    %p19 = scmp.eq.s32.totalorder %s18, 0
    %s21 = sadd.s32 %s20, 1
    %s22 = scalar_select %p19, %s20, %s21
    %p25 = pneg %p19
    %p26 = scmp.eq.s32.totalorder %s10, 1
    %p27 = por %p25, %p26
    %p28 = scmp.ne.s32.totalorder %s20, %s23
    %p29 = scmp.eq.s32.totalorder %s10, 0
    %p30 = por %p28, %p29
    %p31 = scmp.ne.s32.totalorder %s20, %s23
    %p32 = scmp.eq.s32.totalorder %s15, 1
    %p33 = por %p31, %p32
    %p34 = scmp.ne.s32.totalorder %s23, %s24
    %p35 = scmp.eq.s32.totalorder %s15, 0
    %p36 = por %p34, %p35
    %p37 = scmp.ne.s32.totalorder %s23, %s24
    %p38 = scmp.eq.s32.totalorder %s16, 1
    %p39 = por %p37, %p38
    %p41 = scmp.ne.s32.totalorder %s24, %s40
    %p42 = scmp.eq.s32.totalorder %s16, 0
    %p43 = por %p41, %p42
    %s44 = ssub.s32 %s10, %s17
    %p45 = scmp.eq.s32.totalorder %s44, 0
    %s47 = sadd.s32 %s46, 1
    %s48 = scalar_select %p45, %s46, %s47
    %p51 = pneg %p45
    %p52 = scmp.eq.s32.totalorder %s10, 1
    %p53 = por %p51, %p52
    %p54 = scmp.ne.s32.totalorder %s46, %s49
    %p55 = scmp.eq.s32.totalorder %s10, 0
    %p56 = por %p54, %p55
    %p57 = scmp.ne.s32.totalorder %s46, %s49
    %p58 = scmp.eq.s32.totalorder %s15, 1
    %p59 = por %p57, %p58
    %p60 = scmp.ne.s32.totalorder %s49, %s50
    %p61 = scmp.eq.s32.totalorder %s15, 0
    %p62 = por %p60, %p61
    %p63 = scmp.ne.s32.totalorder %s49, %s50
    %p64 = scmp.eq.s32.totalorder %s16, 1
    %p65 = por %p63, %p64
    %p67 = scmp.ne.s32.totalorder %s50, %s66
    %p68 = scmp.eq.s32.totalorder %s16, 0
    %p69 = por %p67, %p68
    %s70 = ssub.s32 %s10, %s17
    %p71 = scmp.eq.s32.totalorder %s70, 0
    %s73 = sadd.s32 %s72, 1
    %s74 = scalar_select %p71, %s72, %s73
    %p77 = pneg %p71
    %p78 = scmp.eq.s32.totalorder %s10, 1
    %p79 = por %p77, %p78
    %p80 = scmp.ne.s32.totalorder %s72, %s75
    %p81 = scmp.eq.s32.totalorder %s10, 0
    %p82 = por %p80, %p81
    %p83 = scmp.ne.s32.totalorder %s72, %s75
    %p84 = scmp.eq.s32.totalorder %s15, 1
    %p85 = por %p83, %p84
    %p86 = scmp.ne.s32.totalorder %s75, %s76
    %p87 = scmp.eq.s32.totalorder %s15, 0
    %p88 = por %p86, %p87
    %p89 = scmp.ne.s32.totalorder %s75, %s76
    %p90 = scmp.eq.s32.totalorder %s16, 1
    %p91 = por %p89, %p90
    %p93 = scmp.ne.s32.totalorder %s76, %s92
    %p94 = scmp.eq.s32.totalorder %s16, 0
    %p95 = por %p93, %p94
    %s96 = ssub.s32 %s10, %s17
    %p97 = scmp.eq.s32.totalorder %s96, 0
    %s99 = sadd.s32 %s98, 1
    %s100 = scalar_select %p97, %s98, %s99
    %p103 = pneg %p97
    %p104 = scmp.eq.s32.totalorder %s10, 1
    %p105 = por %p103, %p104
    %p106 = scmp.ne.s32.totalorder %s98, %s101
    %p107 = scmp.eq.s32.totalorder %s10, 0
    %p108 = por %p106, %p107
    %p109 = scmp.ne.s32.totalorder %s98, %s101
    %p110 = scmp.eq.s32.totalorder %s15, 1
    %p111 = por %p109, %p110
    %p112 = scmp.ne.s32.totalorder %s101, %s102
    %p113 = scmp.eq.s32.totalorder %s15, 0
    %p114 = por %p112, %p113
    %p115 = scmp.ne.s32.totalorder %s101, %s102
    %p116 = scmp.eq.s32.totalorder %s16, 1
    %p117 = por %p115, %p116
    %p119 = scmp.ne.s32.totalorder %s102, %s118
    %p120 = scmp.eq.s32.totalorder %s16, 0
    %p121 = por %p119, %p120
    %s122 = ssub.s32 %s10, %s17
    %p123 = scmp.eq.s32.totalorder %s122, 0
    %s125 = sadd.s32 %s124, 1
    %s126 = scalar_select %p123, %s124, %s125
    %p129 = pneg %p123
    %p130 = scmp.eq.s32.totalorder %s10, 1
    %p131 = por %p129, %p130
    %p132 = scmp.ne.s32.totalorder %s124, %s127
    %p133 = scmp.eq.s32.totalorder %s10, 0
    %p134 = por %p132, %p133
    %p135 = scmp.ne.s32.totalorder %s124, %s127
    %p136 = scmp.eq.s32.totalorder %s15, 1
    %p137 = por %p135, %p136
    %p138 = scmp.ne.s32.totalorder %s127, %s128
    %p139 = scmp.eq.s32.totalorder %s15, 0
    %p140 = por %p138, %p139
    %p141 = scmp.ne.s32.totalorder %s127, %s128
    %p142 = scmp.eq.s32.totalorder %s16, 1
    %p143 = por %p141, %p142
    %p145 = scmp.ne.s32.totalorder %s128, %s144
    %p146 = scmp.eq.s32.totalorder %s16, 0
    %p147 = por %p145, %p146
    %p148 = scmp.le.s32.totalorder 1, %s10
    %p149 = scmp.lt.s32.totalorder %s10, 3
    %p150 = pnand %p148, %p149
    %p151 = pneg %p150
    // Predicated region
    $region9: #{decoder_forward.22} parent=5 // pred_check
      _
    $region10: #{decoder_forward.22} parent=5 // pred_check_branch
      %153 = sbr.rel (%p150) target = $region12
    $region11: #{decoder_forward.22} parent=5 // pred_region
      %s154 = ssub.s32 %s10, 1
    $region12: #{decoder_forward.22} parent=5 // pred_fallthru
      _
    %p155 = scmp.lt.s32.totalorder %s10, 2
    // Predicated region
    $region13: #{decoder_forward.22} parent=5 // pred_check
      %p156 = pneg %p155
    $region14: #{decoder_forward.22} parent=5 // pred_check_branch
      %158 = sbr.rel (%p156) target = $region16
    $region15: #{decoder_forward.22} parent=5 // pred_region
      // Predicated region
      $region17: #{decoder_forward.22} parent=15 // pred_check
        %p159 = pneg %p30
      $region18: #{decoder_forward.22} parent=15 // pred_check_branch
        %161 = sbr.rel (%p159) target = $region20
      $region19: #{decoder_forward.22} parent=15 // pred_region
        %p162 = scmp.lt.s32.totalorder %s10, 1
        %s163 = scalar_select %p162, %s10, 1
        %s164 = smul.addr %s163, 4
        %s165 = scalar_lea.vmem %s0, %s164
      $region20: #{decoder_forward.22} parent=15 // pred_fallthru
        _
      // Predicated region
      $region21: #{decoder_forward.22} parent=15 // pred_check
        %p166 = pneg %p56
      $region22: #{decoder_forward.22} parent=15 // pred_check_branch
        %168 = sbr.rel (%p166) target = $region24
      $region23: #{decoder_forward.22} parent=15 // pred_region
        %p169 = scmp.lt.s32.totalorder %s10, 1
        %s170 = scalar_select %p169, %s10, 1
        %s171 = smul.addr %s170, 4
        %s172 = scalar_lea.vmem %s1, %s171
      $region24: #{decoder_forward.22} parent=15 // pred_fallthru
        _
      // Predicated region
      $region25: #{decoder_forward.22} parent=15 // pred_check
        %p173 = pneg %p82
      $region26: #{decoder_forward.22} parent=15 // pred_check_branch
        %175 = sbr.rel (%p173) target = $region28
      $region27: #{decoder_forward.22} parent=15 // pred_region
        %p176 = scmp.lt.s32.totalorder %s10, 1
        %s177 = scalar_select %p176, %s10, 1
        %s178 = smul.addr %s177, 4
        %s179 = scalar_lea.vmem %s2, %s178
      $region28: #{decoder_forward.22} parent=15 // pred_fallthru
        _
      // Predicated region
      $region29: #{decoder_forward.22} parent=15 // pred_check
        %p180 = pneg %p108
      $region30: #{decoder_forward.22} parent=15 // pred_check_branch
        %182 = sbr.rel (%p180) target = $region32
      $region31: #{decoder_forward.22} parent=15 // pred_region
        %p183 = scmp.lt.s32.totalorder %s10, 1
        %s184 = scalar_select %p183, %s10, 1
        %s185 = scalar_lea.vmem %s3, %s184
      $region32: #{decoder_forward.22} parent=15 // pred_fallthru
        _
    $region16: #{decoder_forward.22} parent=5 // pred_fallthru
      _
    %p186 = scmp.le.s32.totalorder 1, %s10
    %p187 = scmp.lt.s32.totalorder %s10, 3
    %p188 = pnand %p186, %p187
    %p189 = pneg %p188
    // Predicated region
    $region33: #{decoder_forward.22} parent=5 // pred_check
      _
    $region34: #{decoder_forward.22} parent=5 // pred_check_branch
      %191 = sbr.rel (%p188) target = $region36
    $region35: #{decoder_forward.22} parent=5 // pred_region
      %s192 = ssub.s32 %s10, 1
      %p193 = scmp.lt.s32.totalorder %s15, 1
      %s194 = scalar_select %p193, %s15, 1
      %s195 = smul.addr %s194, 4
      %s196 = scalar_lea.vmem %s0, %s195
      %p197 = pneg %p36
      %p198 = pneg %p33
      %p199 = scmp.lt.s32.totalorder %s15, 1
      %s200 = scalar_select %p199, %s15, 1
      %s201 = smul.addr %s200, 4
      %s202 = scalar_lea.vmem %s1, %s201
      %p203 = pneg %p62
      %p204 = pneg %p59
      %p205 = scmp.lt.s32.totalorder %s15, 1
      %s206 = scalar_select %p205, %s15, 1
      %s207 = smul.addr %s206, 4
      %s208 = scalar_lea.vmem %s2, %s207
      %p209 = pneg %p88
      %p210 = pneg %p85
      %p211 = scmp.lt.s32.totalorder %s15, 1
      %s212 = scalar_select %p211, %s15, 1
      %s213 = scalar_lea.vmem %s3, %s212
      %p214 = pneg %p114
      %p215 = pneg %p111
      %p216 = pneg %p140
      %p217 = pneg %p137
      %p218 = scmp.lt.s32.totalorder %s15, 1
      %s219 = scalar_select %p218, %s15, 1
      %s220 = smul.addr %s219, 4
      %s221 = scalar_lea.vmem %s4, %s220
      %p222 = scmp.lt.s32.totalorder %s15, 1
      %s223 = scalar_select %p222, %s15, 1
      %s224 = smul.addr %s223, 4
      %s225 = scalar_lea.vmem %s0, %s224
      %p226 = scmp.lt.s32.totalorder %s15, 1
      %s227 = scalar_select %p226, %s15, 1
      %s228 = smul.addr %s227, 4
      %s229 = scalar_lea.vmem %s1, %s228
      %p230 = scmp.lt.s32.totalorder %s15, 1
      %s231 = scalar_select %p230, %s15, 1
      %s232 = smul.addr %s231, 4
      %s233 = scalar_lea.vmem %s2, %s232
      %p234 = scmp.lt.s32.totalorder %s15, 1
      %s235 = scalar_select %p234, %s15, 1
      %s236 = scalar_lea.vmem %s3, %s235
      %p237 = scmp.lt.s32.totalorder %s15, 1
      %s238 = scalar_select %p237, %s15, 1
      %s239 = smul.addr %s238, 4
      %s240 = scalar_lea.vmem %s4, %s239
      %v242 = vld [vmem:[%s225] sm:$0xf]
      %v243 = vld [vmem:[%s229] sm:$0xf]
      %v244 = vld [vmem:[%s233] sm:$0xf]
      %v245 = vld [vmem:[%s236] sm:$0x1]
      %vm246 = vcmask 64512
      %v248 = vsel %vm246, %v242, 0
      %v251 = vsel %vm246, %v243, 0
      %253 = vmatprep.subr.bf16.mxu0 0
      %254 = vmatpush1.bf16.xpose.msra.mxu0 %v251
      %255 = vmatprep.subr.bf16.mxu0 0
      %256 = vmatpush1.bf16.xpose.msra.mxu0 0
      %257 = vmatprep.subr.bf16.mxu0 0
      %258 = vmatpush1.bf16.xpose.msra.mxu0 0
      %259 = vmatprep.subr.bf16.mxu0 0
      %260 = vmatpush1.bf16.xpose.msra.mxu0 0
      %261 = vmatprep.subr.bf16.mxu0 0
      %262 = vmatpush1.bf16.xpose.msra.mxu0 0
      %263 = vmatprep.subr.bf16.mxu0 0
      %264 = vmatpush1.bf16.xpose.msra.mxu0 0
      %265 = vmatprep.subr.bf16.mxu0 0
      %266 = vmatpush1.bf16.xpose.msra.mxu0 0
      %267 = vmatprep.subr.bf16.mxu0 0
      %268 = vmatpush1.bf16.xpose.msra.mxu0 0
      %269 = vmatprep.subr.bf16.mxu0 0
      %270 = vmatpush1.bf16.xpose.msra.mxu0 0
      %271 = vmatprep.subr.bf16.mxu0 0
      %272 = vmatpush1.bf16.xpose.msra.mxu0 0
      %273 = vmatprep.subr.bf16.mxu0 0
      %274 = vmatpush1.bf16.xpose.msra.mxu0 0
      %275 = vmatprep.subr.bf16.mxu0 0
      %276 = vmatpush1.bf16.xpose.msra.mxu0 0
      %277 = vmatprep.subr.bf16.mxu0 0
      %278 = vmatpush1.bf16.xpose.msra.mxu0 0
      %279 = vmatprep.subr.bf16.mxu0 0
      %280 = vmatpush1.bf16.xpose.msra.mxu0 0
      %281 = vmatprep.subr.bf16.mxu0 0
      %282 = vmatpush1.bf16.xpose.msra.mxu0 0
      %283 = vmatprep.subr.bf16.mxu0 0
      %284 = vmatpush1.bf16.xpose.msra.mxu0 0
      %285 = vmatprep.mubr.bf16.mxu0 0
      %286 = vmatmul.mubr.bf16.gmra.mrb[0].mxu0 %v248
      %v287 = vpop.f32.mrb[0].mxu0
      %v288 = vadd.f32 0.0, %v287
      %v289 = vpop.f32.mrb[0].mxu0
      %v290 = vpop.f32.mrb[0].mxu0
      %v291 = vpop.f32.mrb[0].mxu0
      %292 = vdwg.mxu0
      %vm293 = vcmp.eq.s32.totalorder %v245, 0
      %v294 = vsel %vm293, 1, 0
      %v295 = vlaneseq
      %v296 = vshrl.u32 %v295, 7
      %v297 = vsub.s32 0, %v296
      %v298 = vrot.slane %v294, %v297
      %vm299 = vcmp.eq.s32.totalorder %v298, 1
      %v300 = vsel %vm299, -1e+20, %v288
      %v301 = vmul.f32 %v300, 0.17677669
      %v302 = vsel %vm246, %v301, -inf
      %303 = vmax.xlane.f32.xlu0 %v302
      %v304 = vpop.xlane.xlu0 %303
      %v305 = vsub.f32 %v301, %v304
      %v306 = vmul.f32 %v305, 1.442695
      %v307 = vpow.pop %v306
      %v308 = vsel %vm246, %v307, 0.0
      %309 = vadd.xlane.f32.xlu0 %v308
      %v310 = vpop.xlane.xlu0 %309
      %v311 = vrcp.pop %v310
      %v312 = vmul.f32 %v307, %v311
      %v313 = vpack.c.bf16 %v312, %v312
      %v315 = vsel %vm246, %v313, 0
      %vm317 = vcmask 1043456
      %v319 = vsel %vm317, %v244, 0
      %321 = vmatprep.subr.bf16.mxu0 0
      %322 = vmatpush1.bf16.msra.mxu0 %v319
      %323 = vmatprep.subr.bf16.mxu0 0
      %324 = vmatpush1.bf16.msra.mxu0 0
      %325 = vmatprep.subr.bf16.mxu0 0
      %326 = vmatpush1.bf16.msra.mxu0 0
      %327 = vmatprep.subr.bf16.mxu0 0
      %328 = vmatpush1.bf16.msra.mxu0 0
      %329 = vmatprep.subr.bf16.mxu0 0
      %330 = vmatpush1.bf16.msra.mxu0 0
      %331 = vmatprep.subr.bf16.mxu0 0
      %332 = vmatpush1.bf16.msra.mxu0 0
      %333 = vmatprep.subr.bf16.mxu0 0
      %334 = vmatpush1.bf16.msra.mxu0 0
      %335 = vmatprep.subr.bf16.mxu0 0
      %336 = vmatpush1.bf16.msra.mxu0 0
      %337 = vmatprep.subr.bf16.mxu0 0
      %338 = vmatpush1.bf16.msra.mxu0 0
      %339 = vmatprep.subr.bf16.mxu0 0
      %340 = vmatpush1.bf16.msra.mxu0 0
      %341 = vmatprep.subr.bf16.mxu0 0
      %342 = vmatpush1.bf16.msra.mxu0 0
      %343 = vmatprep.subr.bf16.mxu0 0
      %344 = vmatpush1.bf16.msra.mxu0 0
      %345 = vmatprep.subr.bf16.mxu0 0
      %346 = vmatpush1.bf16.msra.mxu0 0
      %347 = vmatprep.subr.bf16.mxu0 0
      %348 = vmatpush1.bf16.msra.mxu0 0
      %349 = vmatprep.subr.bf16.mxu0 0
      %350 = vmatpush1.bf16.msra.mxu0 0
      %351 = vmatprep.subr.bf16.mxu0 0
      %352 = vmatpush1.bf16.msra.mxu0 0
      %353 = vmatprep.mubr.bf16.mxu0 0
      %354 = vmatmul.mubr.bf16.gmra.mrb[0].mxu0 %v315
      %v355 = vpop.f32.mrb[0].mxu0
      %v356 = vadd.f32 0.0, %v355
      %v357 = vpop.f32.mrb[0].mxu0
      %v358 = vpop.f32.mrb[0].mxu0
      %v359 = vpop.f32.mrb[0].mxu0
      %360 = vdwg.mxu0
      %v362 = vunpack.c.l.b16 %v242
      %v363 = vpack.c.b16 %v362, %v362
      %364 = vrot.lane.b32.xlu0 %v363, 120
      %v365 = vpop.permute.xlu0 %364
      %v367 = vunpack.c.l.b16 %v243
      %v368 = vpack.c.b16 %v367, %v367
      %369 = vrot.lane.b32.xlu0 %v368, 120
      %v370 = vpop.permute.xlu0 %369
      %v372 = vsel %vm246, %v365, 0
      %v375 = vsel %vm246, %v370, 0
      %377 = vmatprep.subr.bf16.mxu0 0
      %378 = vmatpush1.bf16.xpose.msra.mxu0 %v375
      %379 = vmatprep.subr.bf16.mxu0 0
      %380 = vmatpush1.bf16.xpose.msra.mxu0 0
      %381 = vmatprep.subr.bf16.mxu0 0
      %382 = vmatpush1.bf16.xpose.msra.mxu0 0
      %383 = vmatprep.subr.bf16.mxu0 0
      %384 = vmatpush1.bf16.xpose.msra.mxu0 0
      %385 = vmatprep.subr.bf16.mxu0 0
      %386 = vmatpush1.bf16.xpose.msra.mxu0 0
      %387 = vmatprep.subr.bf16.mxu0 0
      %388 = vmatpush1.bf16.xpose.msra.mxu0 0
      %389 = vmatprep.subr.bf16.mxu0 0
      %390 = vmatpush1.bf16.xpose.msra.mxu0 0
      %391 = vmatprep.subr.bf16.mxu0 0
      %392 = vmatpush1.bf16.xpose.msra.mxu0 0
      %393 = vmatprep.subr.bf16.mxu0 0
      %394 = vmatpush1.bf16.xpose.msra.mxu0 0
      %395 = vmatprep.subr.bf16.mxu0 0
      %396 = vmatpush1.bf16.xpose.msra.mxu0 0
      %397 = vmatprep.subr.bf16.mxu0 0
      %398 = vmatpush1.bf16.xpose.msra.mxu0 0
      %399 = vmatprep.subr.bf16.mxu0 0
      %400 = vmatpush1.bf16.xpose.msra.mxu0 0
      %401 = vmatprep.subr.bf16.mxu0 0
      %402 = vmatpush1.bf16.xpose.msra.mxu0 0
      %403 = vmatprep.subr.bf16.mxu0 0
      %404 = vmatpush1.bf16.xpose.msra.mxu0 0
      %405 = vmatprep.subr.bf16.mxu0 0
      %406 = vmatpush1.bf16.xpose.msra.mxu0 0
      %407 = vmatprep.subr.bf16.mxu0 0
      %408 = vmatpush1.bf16.xpose.msra.mxu0 0
      %409 = vmatprep.mubr.bf16.mxu0 0
      %410 = vmatmul.mubr.bf16.gmra.mrb[0].mxu0 %v372
      %v411 = vpop.f32.mrb[0].mxu0
      %v412 = vadd.f32 0.0, %v411
      %v413 = vpop.f32.mrb[0].mxu0
      %v414 = vpop.f32.mrb[0].mxu0
      %v415 = vpop.f32.mrb[0].mxu0
      %416 = vdwg.mxu0
      %v417 = vsel %vm299, -1e+20, %v412
      %v418 = vmul.f32 %v417, 0.17677669
      %v419 = vsel %vm246, %v418, -inf
      %420 = vmax.xlane.f32.xlu0 %v419
      %v421 = vpop.xlane.xlu0 %420
      %v422 = vsub.f32 %v418, %v421
      %v423 = vmul.f32 %v422, 1.442695
      %v424 = vpow.pop %v423
      %v425 = vsel %vm246, %v424, 0.0
      %426 = vadd.xlane.f32.xlu0 %v425
      %v427 = vpop.xlane.xlu0 %426
      %v428 = vrcp.pop %v427
      %v429 = vmul.f32 %v424, %v428
      %v430 = vpack.c.bf16 %v429, %v429
      %v432 = vunpack.c.l.b16 %v244
      %v433 = vpack.c.b16 %v432, %v432
      %434 = vrot.lane.b32.xlu0 %v433, 120
      %v435 = vpop.permute.xlu0 %434
      %v437 = vsel %vm246, %v430, 0
      %v440 = vsel %vm317, %v435, 0
      %442 = vmatprep.subr.bf16.mxu0 0
      %443 = vmatpush1.bf16.msra.mxu0 %v440
      %444 = vmatprep.subr.bf16.mxu0 0
      %445 = vmatpush1.bf16.msra.mxu0 0
      %446 = vmatprep.subr.bf16.mxu0 0
      %447 = vmatpush1.bf16.msra.mxu0 0
      %448 = vmatprep.subr.bf16.mxu0 0
      %449 = vmatpush1.bf16.msra.mxu0 0
      %450 = vmatprep.subr.bf16.mxu0 0
      %451 = vmatpush1.bf16.msra.mxu0 0
      %452 = vmatprep.subr.bf16.mxu0 0
      %453 = vmatpush1.bf16.msra.mxu0 0
      %454 = vmatprep.subr.bf16.mxu0 0
      %455 = vmatpush1.bf16.msra.mxu0 0
      %456 = vmatprep.subr.bf16.mxu0 0
      %457 = vmatpush1.bf16.msra.mxu0 0
      %458 = vmatprep.subr.bf16.mxu0 0
      %459 = vmatpush1.bf16.msra.mxu0 0
      %460 = vmatprep.subr.bf16.mxu0 0
      %461 = vmatpush1.bf16.msra.mxu0 0
      %462 = vmatprep.subr.bf16.mxu0 0
      %463 = vmatpush1.bf16.msra.mxu0 0
      %464 = vmatprep.subr.bf16.mxu0 0
      %465 = vmatpush1.bf16.msra.mxu0 0
      %466 = vmatprep.subr.bf16.mxu0 0
      %467 = vmatpush1.bf16.msra.mxu0 0
      %468 = vmatprep.subr.bf16.mxu0 0
      %469 = vmatpush1.bf16.msra.mxu0 0
      %470 = vmatprep.subr.bf16.mxu0 0
      %471 = vmatpush1.bf16.msra.mxu0 0
      %472 = vmatprep.subr.bf16.mxu0 0
      %473 = vmatpush1.bf16.msra.mxu0 0
      %474 = vmatprep.mubr.bf16.mxu0 0
      %475 = vmatmul.mubr.bf16.gmra.mrb[0].mxu0 %v437
      %v476 = vpop.f32.mrb[0].mxu0
      %v477 = vadd.f32 0.0, %v476
      %v478 = vpop.f32.mrb[0].mxu0
      %v479 = vpop.f32.mrb[0].mxu0
      %v480 = vpop.f32.mrb[0].mxu0
      %481 = vdwg.mxu0
      %482 = vrot.lane.b32.xlu0 %v363, 112
      %v483 = vpop.permute.xlu0 %482
      %484 = vrot.lane.b32.xlu0 %v368, 112
      %v485 = vpop.permute.xlu0 %484
      %v487 = vsel %vm246, %v483, 0
      %v490 = vsel %vm246, %v485, 0
      %492 = vmatprep.subr.bf16.mxu0 0
      %493 = vmatpush1.bf16.xpose.msra.mxu0 %v490
      %494 = vmatprep.subr.bf16.mxu0 0
      %495 = vmatpush1.bf16.xpose.msra.mxu0 0
      %496 = vmatprep.subr.bf16.mxu0 0
      %497 = vmatpush1.bf16.xpose.msra.mxu0 0
      %498 = vmatprep.subr.bf16.mxu0 0
      %499 = vmatpush1.bf16.xpose.msra.mxu0 0
      %500 = vmatprep.subr.bf16.mxu0 0
      %501 = vmatpush1.bf16.xpose.msra.mxu0 0
      %502 = vmatprep.subr.bf16.mxu0 0
      %503 = vmatpush1.bf16.xpose.msra.mxu0 0
      %504 = vmatprep.subr.bf16.mxu0 0
      %505 = vmatpush1.bf16.xpose.msra.mxu0 0
      %506 = vmatprep.subr.bf16.mxu0 0
      %507 = vmatpush1.bf16.xpose.msra.mxu0 0
      %508 = vmatprep.subr.bf16.mxu0 0
      %509 = vmatpush1.bf16.xpose.msra.mxu0 0
      %510 = vmatprep.subr.bf16.mxu0 0
      %511 = vmatpush1.bf16.xpose.msra.mxu0 0
      %512 = vmatprep.subr.bf16.mxu0 0
      %513 = vmatpush1.bf16.xpose.msra.mxu0 0
      %514 = vmatprep.subr.bf16.mxu0 0
      %515 = vmatpush1.bf16.xpose.msra.mxu0 0
      %516 = vmatprep.subr.bf16.mxu0 0
      %517 = vmatpush1.bf16.xpose.msra.mxu0 0
      %518 = vmatprep.subr.bf16.mxu0 0
      %519 = vmatpush1.bf16.xpose.msra.mxu0 0
      %520 = vmatprep.subr.bf16.mxu0 0
      %521 = vmatpush1.bf16.xpose.msra.mxu0 0
      %522 = vmatprep.subr.bf16.mxu0 0
      %523 = vmatpush1.bf16.xpose.msra.mxu0 0
      %524 = vmatprep.mubr.bf16.mxu0 0
      %525 = vmatmul.mubr.bf16.gmra.mrb[0].mxu0 %v487
      %v526 = vpop.f32.mrb[0].mxu0
      %v527 = vadd.f32 0.0, %v526
      %v528 = vpop.f32.mrb[0].mxu0
      %v529 = vpop.f32.mrb[0].mxu0
      %v530 = vpop.f32.mrb[0].mxu0
      %531 = vdwg.mxu0
      %v532 = vsel %vm299, -1e+20, %v527
      %v533 = vmul.f32 %v532, 0.17677669
      %v534 = vsel %vm246, %v533, -inf
      %535 = vmax.xlane.f32.xlu0 %v534
      %v536 = vpop.xlane.xlu0 %535
      %v537 = vsub.f32 %v533, %v536
      %v538 = vmul.f32 %v537, 1.442695
      %v539 = vpow.pop %v538
      %v540 = vsel %vm246, %v539, 0.0
      %541 = vadd.xlane.f32.xlu0 %v540
      %v542 = vpop.xlane.xlu0 %541
      %v543 = vrcp.pop %v542
      %v544 = vmul.f32 %v539, %v543
      %v545 = vpack.c.bf16 %v544, %v544
      %546 = vrot.lane.b32.xlu0 %v433, 112
      %v547 = vpop.permute.xlu0 %546
      %v549 = vsel %vm246, %v545, 0
      %v552 = vsel %vm317, %v547, 0
      %554 = vmatprep.subr.bf16.mxu0 0
      %555 = vmatpush1.bf16.msra.mxu0 %v552
      %556 = vmatprep.subr.bf16.mxu0 0
      %557 = vmatpush1.bf16.msra.mxu0 0
      %558 = vmatprep.subr.bf16.mxu0 0
      %559 = vmatpush1.bf16.msra.mxu0 0
      %560 = vmatprep.subr.bf16.mxu0 0
      %561 = vmatpush1.bf16.msra.mxu0 0
      %562 = vmatprep.subr.bf16.mxu0 0
      %563 = vmatpush1.bf16.msra.mxu0 0
      %564 = vmatprep.subr.bf16.mxu0 0
      %565 = vmatpush1.bf16.msra.mxu0 0
      %566 = vmatprep.subr.bf16.mxu0 0
      %567 = vmatpush1.bf16.msra.mxu0 0
      %568 = vmatprep.subr.bf16.mxu0 0
      %569 = vmatpush1.bf16.msra.mxu0 0
      %570 = vmatprep.subr.bf16.mxu0 0
      %571 = vmatpush1.bf16.msra.mxu0 0
      %572 = vmatprep.subr.bf16.mxu0 0
      %573 = vmatpush1.bf16.msra.mxu0 0
      %574 = vmatprep.subr.bf16.mxu0 0
      %575 = vmatpush1.bf16.msra.mxu0 0
      %576 = vmatprep.subr.bf16.mxu0 0
      %577 = vmatpush1.bf16.msra.mxu0 0
      %578 = vmatprep.subr.bf16.mxu0 0
      %579 = vmatpush1.bf16.msra.mxu0 0
      %580 = vmatprep.subr.bf16.mxu0 0
      %581 = vmatpush1.bf16.msra.mxu0 0
      %582 = vmatprep.subr.bf16.mxu0 0
      %583 = vmatpush1.bf16.msra.mxu0 0
      %584 = vmatprep.subr.bf16.mxu0 0
      %585 = vmatpush1.bf16.msra.mxu0 0
      %586 = vmatprep.mubr.bf16.mxu0 0
      %587 = vmatmul.mubr.bf16.gmra.mrb[0].mxu0 %v549
      %v588 = vpop.f32.mrb[0].mxu0
      %v589 = vadd.f32 0.0, %v588
      %v590 = vpop.f32.mrb[0].mxu0
      %v591 = vpop.f32.mrb[0].mxu0
      %v592 = vpop.f32.mrb[0].mxu0
      %593 = vdwg.mxu0
      %594 = vrot.lane.b32.xlu0 %v363, 104
      %v595 = vpop.permute.xlu0 %594
      %596 = vrot.lane.b32.xlu0 %v368, 104
      %v597 = vpop.permute.xlu0 %596
      %v599 = vsel %vm246, %v595, 0
      %v602 = vsel %vm246, %v597, 0
      %604 = vmatprep.subr.bf16.mxu0 0
      %605 = vmatpush1.bf16.xpose.msra.mxu0 %v602
      %606 = vmatprep.subr.bf16.mxu0 0
      %607 = vmatpush1.bf16.xpose.msra.mxu0 0
      %608 = vmatprep.subr.bf16.mxu0 0
      %609 = vmatpush1.bf16.xpose.msra.mxu0 0
      %610 = vmatprep.subr.bf16.mxu0 0
      %611 = vmatpush1.bf16.xpose.msra.mxu0 0
      %612 = vmatprep.subr.bf16.mxu0 0
      %613 = vmatpush1.bf16.xpose.msra.mxu0 0
      %614 = vmatprep.subr.bf16.mxu0 0
      %615 = vmatpush1.bf16.xpose.msra.mxu0 0
      %616 = vmatprep.subr.bf16.mxu0 0
      %617 = vmatpush1.bf16.xpose.msra.mxu0 0
      %618 = vmatprep.subr.bf16.mxu0 0
      %619 = vmatpush1.bf16.xpose.msra.mxu0 0
      %620 = vmatprep.subr.bf16.mxu0 0
      %621 = vmatpush1.bf16.xpose.msra.mxu0 0
      %622 = vmatprep.subr.bf16.mxu0 0
      %623 = vmatpush1.bf16.xpose.msra.mxu0 0
      %624 = vmatprep.subr.bf16.mxu0 0
      %625 = vmatpush1.bf16.xpose.msra.mxu0 0
      %626 = vmatprep.subr.bf16.mxu0 0
      %627 = vmatpush1.bf16.xpose.msra.mxu0 0
      %628 = vmatprep.subr.bf16.mxu0 0
      %629 = vmatpush1.bf16.xpose.msra.mxu0 0
      %630 = vmatprep.subr.bf16.mxu0 0
      %631 = vmatpush1.bf16.xpose.msra.mxu0 0
      %632 = vmatprep.subr.bf16.mxu0 0
      %633 = vmatpush1.bf16.xpose.msra.mxu0 0
      %634 = vmatprep.subr.bf16.mxu0 0
      %635 = vmatpush1.bf16.xpose.msra.mxu0 0
      %636 = vmatprep.mubr.bf16.mxu0 0
      %637 = vmatmul.mubr.bf16.gmra.mrb[0].mxu0 %v599
      %v638 = vpop.f32.mrb[0].mxu0
      %v639 = vadd.f32 0.0, %v638
      %v640 = vpop.f32.mrb[0].mxu0
      %v641 = vpop.f32.mrb[0].mxu0
      %v642 = vpop.f32.mrb[0].mxu0
      %643 = vdwg.mxu0
      %v644 = vsel %vm299, -1e+20, %v639
      %v645 = vmul.f32 %v644, 0.17677669
      %v646 = vsel %vm246, %v645, -inf
      %647 = vmax.xlane.f32.xlu0 %v646
      %v648 = vpop.xlane.xlu0 %647
      %v649 = vsub.f32 %v645, %v648
      %v650 = vmul.f32 %v649, 1.442695
      %v651 = vpow.pop %v650
      %v652 = vsel %vm246, %v651, 0.0
      %653 = vadd.xlane.f32.xlu0 %v652
      %v654 = vpop.xlane.xlu0 %653
      %v655 = vrcp.pop %v654
      %v656 = vmul.f32 %v651, %v655
      %v657 = vpack.c.bf16 %v656, %v656
      %658 = vrot.lane.b32.xlu0 %v433, 104
      %v659 = vpop.permute.xlu0 %658
      %v661 = vsel %vm246, %v657, 0
      %v664 = vsel %vm317, %v659, 0
      %666 = vmatprep.subr.bf16.mxu0 0
      %667 = vmatpush1.bf16.msra.mxu0 %v664
      %668 = vmatprep.subr.bf16.mxu0 0
      %669 = vmatpush1.bf16.msra.mxu0 0
      %670 = vmatprep.subr.bf16.mxu0 0
      %671 = vmatpush1.bf16.msra.mxu0 0
      %672 = vmatprep.subr.bf16.mxu0 0
      %673 = vmatpush1.bf16.msra.mxu0 0
      %674 = vmatprep.subr.bf16.mxu0 0
      %675 = vmatpush1.bf16.msra.mxu0 0
      %676 = vmatprep.subr.bf16.mxu0 0
      %677 = vmatpush1.bf16.msra.mxu0 0
      %678 = vmatprep.subr.bf16.mxu0 0
      %679 = vmatpush1.bf16.msra.mxu0 0
      %680 = vmatprep.subr.bf16.mxu0 0
      %681 = vmatpush1.bf16.msra.mxu0 0
      %682 = vmatprep.subr.bf16.mxu0 0
      %683 = vmatpush1.bf16.msra.mxu0 0
      %684 = vmatprep.subr.bf16.mxu0 0
      %685 = vmatpush1.bf16.msra.mxu0 0
      %686 = vmatprep.subr.bf16.mxu0 0
      %687 = vmatpush1.bf16.msra.mxu0 0
      %688 = vmatprep.subr.bf16.mxu0 0
      %689 = vmatpush1.bf16.msra.mxu0 0
      %690 = vmatprep.subr.bf16.mxu0 0
      %691 = vmatpush1.bf16.msra.mxu0 0
      %692 = vmatprep.subr.bf16.mxu0 0
      %693 = vmatpush1.bf16.msra.mxu0 0
      %694 = vmatprep.subr.bf16.mxu0 0
      %695 = vmatpush1.bf16.msra.mxu0 0
      %696 = vmatprep.subr.bf16.mxu0 0
      %697 = vmatpush1.bf16.msra.mxu0 0
      %698 = vmatprep.mubr.bf16.mxu0 0
      %699 = vmatmul.mubr.bf16.gmra.mrb[0].mxu0 %v661
      %v700 = vpop.f32.mrb[0].mxu0
      %v701 = vadd.f32 0.0, %v700
      %v702 = vpop.f32.mrb[0].mxu0
      %v703 = vpop.f32.mrb[0].mxu0
      %v704 = vpop.f32.mrb[0].mxu0
      %705 = vdwg.mxu0
      %707 = vrot.lane.b32.xlu0 %v477, 8
      %v708 = vpop.permute.xlu0 %707
      %711 = vrot.lane.b32.xlu0 %v589, 16
      %v712 = vpop.permute.xlu0 %711
      %715 = vrot.lane.b32.xlu0 %v701, 24
      %v716 = vpop.permute.xlu0 %715
      %v718 = vsel %vm246, %v356, %v708
      %vm719 = vcmask 130048
      %v720 = vsel %vm719, %v718, %v712
      %vm721 = vcmask 195584
      %v722 = vsel %vm721, %v720, %v716
      %v723 = vpack.c.bf16 %v722, %v722
      %vm724 = vcmask 257024
      %725 = vst.msk [vmem:[%s240] sm:$0xf] %vm724, %v723
      %p726 = scmp.lt.s32.totalorder %s15, 1
      %s727 = scalar_select %p726, %s15, 1
      %s728 = smul.addr %s727, 4
      %s729 = scalar_lea.vmem %s4, %s728
      // Predicated region
      $region37: #{decoder_forward.22} parent=35 // pred_check
        %p730 = pneg %p137
      $region38: #{decoder_forward.22} parent=35 // pred_check_branch
        %732 = sbr.rel (%p730) target = $region40
      $region39: #{decoder_forward.22} parent=35 // pred_region
        _
      $region40: #{decoder_forward.22} parent=35 // pred_fallthru
        _
    $region36: #{decoder_forward.22} parent=5 // pred_fallthru
      _
    %p733 = scmp.le.s32.totalorder 2, %s10
    // Predicated region
    $region41: #{decoder_forward.22} parent=5 // pred_check
      %p734 = pneg %p733
    $region42: #{decoder_forward.22} parent=5 // pred_check_branch
      %736 = sbr.rel (%p734) target = $region44
    $region43: #{decoder_forward.22} parent=5 // pred_region
      %s737 = ssub.s32 %s10, 2
      // Predicated region
      $region45: #{decoder_forward.22} parent=43 // pred_check
        %p738 = pneg %p143
      $region46: #{decoder_forward.22} parent=43 // pred_check_branch
        %740 = sbr.rel (%p738) target = $region48
      $region47: #{decoder_forward.22} parent=43 // pred_region
        %p741 = scmp.lt.s32.totalorder %s16, 1
        %s742 = scalar_select %p741, %s16, 1
        %s743 = smul.addr %s742, 4
        %s744 = scalar_lea.vmem %s4, %s743
      $region48: #{decoder_forward.22} parent=43 // pred_fallthru
        _
    $region44: #{decoder_forward.22} parent=5 // pred_fallthru
      _
  $region6: #{decoder_forward.22} parent=0 // loop_footer
    %s14 = sadd.s32 1, %s10
  $region7: #{decoder_forward.22} parent=0 // loop_footer_branch
    %9 = sbr.rel target = $region3
  $region8: #{decoder_forward.22} parent=0 // loop_exit
    _

</llo_original>
